<compile_context>
chip_gen: v5e
topology: v5e:2x2
jax: 0.10.0
libtpu: 0.0.40
codegen_flags: <defaults>
</compile_context>

<pallas_src>
import functools

import jax
import jax.numpy as jnp
import numpy as np
from jax import lax
from jax.experimental import pallas as pl
from jax.experimental.pallas import tpu as pltpu


_VMEM_LIMIT_BYTES = 32 * 1024 * 1024  # raise v5e's 16 MiB default; safe on v6e/v7x


# --------------------------------------------------------------------------------------
# In-kernel helpers
# --------------------------------------------------------------------------------------
def _gn_silu(x, gamma, beta, M, MT, cnt, eps):
    """Two-pass GroupNorm + SiLU on an (H, W, C) f32 tile.

    Group statistics are computed with tiny (1,C)@(C,G) matmuls against a 0/1
    membership matrix (avoids lane-dim reshapes).  Affine is folded so the
    per-element path is a single multiply-add followed by SiLU (sigmoid -> EUP).
    """
    C = x.shape[-1]
    s = jnp.sum(x, axis=(0, 1), keepdims=True).reshape(1, C)                  # (1, C)
    gmean = jnp.dot(s, M, preferred_element_type=jnp.float32) / cnt           # (1, G)
    mean_c = jnp.dot(gmean, MT, preferred_element_type=jnp.float32).reshape(1, 1, C)
    d = x - mean_c
    ss = jnp.sum(d * d, axis=(0, 1), keepdims=True).reshape(1, C)             # (1, C)
    gvar = jnp.dot(ss, M, preferred_element_type=jnp.float32) / cnt           # (1, G)
    ginv = lax.rsqrt(gvar + eps)
    inv_c = jnp.dot(ginv, MT, preferred_element_type=jnp.float32).reshape(1, 1, C)
    a = inv_c * gamma.reshape(1, 1, C)                                        # folded scale
    y = d * a + beta.reshape(1, 1, C)
    return y * jax.nn.sigmoid(y)                                              # SiLU


def _conv3x3_im2col(pad_ref, y, w_ref, bias, H, W):
    """3x3 'same' conv as one im2col MXU matmul (bf16 inputs, f32 accumulation).

    pad_ref : (H+2, W+2, Cin) f32 VMEM scratch — zero halo is built here in-kernel.
    y       : (H, W, Cin) f32 activation.
    w_ref   : (9*Cin, Cout) bf16 weights, row order (ky*3+kx)*Cin + cin.
    bias    : (1, Cout) f32 — added once to the matmul result.
    """
    Cin = y.shape[-1]
    pad_ref[...] = jnp.zeros_like(pad_ref)
    pad_ref[1:H + 1, 1:W + 1, :] = y
    cols = jnp.concatenate(
        [pad_ref[ky:ky + H, kx:kx + W, :] for ky in range(3) for kx in range(3)],
        axis=-1)                                                   # (H, W, 9*Cin)
    cols = cols.reshape(H * W, 9 * Cin).astype(jnp.bfloat16)
    acc = jnp.dot(cols, w_ref[...], preferred_element_type=jnp.float32)   # (H*W, Cout) f32
    return acc + bias


# --------------------------------------------------------------------------------------
# Kernel bodies (one batch element per grid step)
# --------------------------------------------------------------------------------------
def _stage1_kernel(x_ref, g_ref, b_ref, m_ref, mt_ref, w_ref, cb_ref,
                   o_ref, pad_ref, *, H, W, Cg, eps):
    # x_ref: (1, H, W, Cin) f32   o_ref: (1, H, W, Cout) bf16   pad_ref: (H+2, W+2, Cin) f32
    x = x_ref[0].astype(jnp.float32)
    cnt = float(H * W * Cg)
    y = _gn_silu(x, g_ref[...], b_ref[...], m_ref[...], mt_ref[...], cnt, eps)
    acc = _conv3x3_im2col(pad_ref, y, w_ref, cb_ref[...], H, W)
    Cout = o_ref.shape[-1]
    o_ref[0] = acc.reshape(H, W, Cout).astype(o_ref.dtype)


def _stage2_kernel(h_ref, t_ref, tw_ref, tb_ref, g_ref, b_ref, m_ref, mt_ref,
                   w_ref, cb_ref, x_ref, *rest, H, W, Cg, eps, has_nin):
    # h_ref: (1, H, W, Cout) bf16   x_ref: (1, H, W, Cin) f32   o_ref: (1, H, W, Cout) f32
    if has_nin:
        wsc_ref, bsc_ref, o_ref, pad_ref = rest
    else:
        o_ref, pad_ref = rest
    Cout = o_ref.shape[-1]

    h = h_ref[0].astype(jnp.float32)                              # (H, W, Cout)

    # temb projection (fused; tiny matmul): SiLU(temb) @ W + b, added BEFORE norm2.
    t = t_ref[...].astype(jnp.float32)                            # (1, T)
    t = t * jax.nn.sigmoid(t)
    proj = jnp.dot(t, tw_ref[...], preferred_element_type=jnp.float32) + tb_ref[...]
    h = h + proj.reshape(1, 1, Cout)

    cnt = float(H * W * Cg)
    y = _gn_silu(h, g_ref[...], b_ref[...], m_ref[...], mt_ref[...], cnt, eps)
    # dropout == identity in eval mode.
    acc = _conv3x3_im2col(pad_ref, y, w_ref, cb_ref[...], H, W)   # (H*W, Cout) f32

    if has_nin:
        Cin = x_ref.shape[-1]
        xin = x_ref[0].astype(jnp.bfloat16).reshape(H * W, Cin)
        sc = jnp.dot(xin, wsc_ref[...], preferred_element_type=jnp.float32) + bsc_ref[...]
    else:
        sc = x_ref[0].astype(jnp.float32).reshape(H * W, Cout)    # identity shortcut
    o_ref[0] = (acc + sc).reshape(H, W, Cout)


# --------------------------------------------------------------------------------------
# Wrapper
# --------------------------------------------------------------------------------------
def _group_matrices(C, G):
    assert C % G == 0, f"GroupNorm requires num_channels ({C}) divisible by num_groups ({G})"
    Cg = C // G
    M = np.zeros((C, G), np.float32)
    M[np.arange(C), np.arange(C) // Cg] = 1.0
    return jnp.asarray(M), jnp.asarray(M.T), Cg


def resnet_block_forward(x_nchw, temb, params, group_norm=16, eps=1e-5):
    # x_nchw: (N, Cin, H, W) as in PyTorch; temb: (N, temb_channels)
    x = jnp.transpose(x_nchw, (0, 2, 3, 1)).astype(jnp.float32)   # NCHW -> NHWC
    N, H, W, Cin = x.shape
    T = temb.shape[-1]
    Cout = params["conv1_w"].shape[0]
    G1 = min(group_norm, Cin)
    G2 = min(group_norm, Cout)
    M1, MT1, Cg1 = _group_matrices(Cin, G1)
    M2, MT2, Cg2 = _group_matrices(Cout, G2)

    # Conv weights: OIHW -> (ky, kx, Cin, Cout) -> (9*Cin, Cout), bf16 for the MXU.
    w1 = jnp.transpose(params["conv1_w"], (2, 3, 1, 0)).reshape(9 * Cin, Cout).astype(jnp.bfloat16)
    w2 = jnp.transpose(params["conv2_w"], (2, 3, 1, 0)).reshape(9 * Cout, Cout).astype(jnp.bfloat16)

    cparams = pltpu.CompilerParams(dimension_semantics=("parallel",),
                                   vmem_limit_bytes=_VMEM_LIMIT_BYTES)

    # ---------------- stage 1: norm1 + SiLU + conv1 ----------------
    k1 = functools.partial(_stage1_kernel, H=H, W=W, Cg=Cg1, eps=eps)
    h = pl.pallas_call(
        k1,
        out_shape=jax.ShapeDtypeStruct((N, H, W, Cout), jnp.bfloat16),
        grid=(N,),
        in_specs=[
            pl.BlockSpec((1, H, W, Cin), lambda n: (n, 0, 0, 0)),   # x
            pl.BlockSpec((1, Cin), lambda n: (0, 0)),               # norm1 gamma
            pl.BlockSpec((1, Cin), lambda n: (0, 0)),               # norm1 beta
            pl.BlockSpec((Cin, G1), lambda n: (0, 0)),              # group membership
            pl.BlockSpec((G1, Cin), lambda n: (0, 0)),              # membership^T
            pl.BlockSpec((9 * Cin, Cout), lambda n: (0, 0)),        # conv1 W (bf16)
            pl.BlockSpec((1, Cout), lambda n: (0, 0)),              # conv1 b
        ],
        out_specs=pl.BlockSpec((1, H, W, Cout), lambda n: (n, 0, 0, 0)),
        scratch_shapes=[pltpu.VMEM((H + 2, W + 2, Cin), jnp.float32)],
        compiler_params=cparams,
    )(x,
      params["norm1_g"].reshape(1, Cin).astype(jnp.float32),
      params["norm1_b"].reshape(1, Cin).astype(jnp.float32),
      M1, MT1, w1,
      params["conv1_b"].reshape(1, Cout).astype(jnp.float32))

    # ------- stage 2: (+temb) + norm2 + SiLU + conv2 + shortcut + residual -------
    has_nin = Cin != Cout
    k2 = functools.partial(_stage2_kernel, H=H, W=W, Cg=Cg2, eps=eps, has_nin=has_nin)
    in_specs = [
        pl.BlockSpec((1, H, W, Cout), lambda n: (n, 0, 0, 0)),      # h (bf16)
        pl.BlockSpec((1, T), lambda n: (n, 0)),                     # temb
        pl.BlockSpec((T, Cout), lambda n: (0, 0)),                  # temb_proj W^T
        pl.BlockSpec((1, Cout), lambda n: (0, 0)),                  # temb_proj b
        pl.BlockSpec((1, Cout), lambda n: (0, 0)),                  # norm2 gamma
        pl.BlockSpec((1, Cout), lambda n: (0, 0)),                  # norm2 beta
        pl.BlockSpec((Cout, G2), lambda n: (0, 0)),                 # group membership
        pl.BlockSpec((G2, Cout), lambda n: (0, 0)),                 # membership^T
        pl.BlockSpec((9 * Cout, Cout), lambda n: (0, 0)),           # conv2 W (bf16)
        pl.BlockSpec((1, Cout), lambda n: (0, 0)),                  # conv2 b
        pl.BlockSpec((1, H, W, Cin), lambda n: (n, 0, 0, 0)),       # residual x
    ]
    args = [
        h,
        temb.astype(jnp.float32),
        params["temb_w"].T.astype(jnp.float32),
        params["temb_b"].reshape(1, Cout).astype(jnp.float32),
        params["norm2_g"].reshape(1, Cout).astype(jnp.float32),
        params["norm2_b"].reshape(1, Cout).astype(jnp.float32),
        M2, MT2, w2,
        params["conv2_b"].reshape(1, Cout).astype(jnp.float32),
        x,
    ]
    if has_nin:
        in_specs += [pl.BlockSpec((Cin, Cout), lambda n: (0, 0)),   # nin W (bf16)
                     pl.BlockSpec((1, Cout), lambda n: (0, 0))]     # nin b
        args += [params["nin_w"][:, :, 0, 0].T.astype(jnp.bfloat16),
                 params["nin_b"].reshape(1, Cout).astype(jnp.float32)]

    out = pl.pallas_call(
        k2,
        out_shape=jax.ShapeDtypeStruct((N, H, W, Cout), jnp.float32),
        grid=(N,),
        in_specs=in_specs,
        out_specs=pl.BlockSpec((1, H, W, Cout), lambda n: (n, 0, 0, 0)),
        scratch_shapes=[pltpu.VMEM((H + 2, W + 2, Cout), jnp.float32)],
        compiler_params=cparams,
    )(*args)

    return jnp.transpose(out, (0, 3, 1, 2))                         # NHWC -> NCHW


# --------------------------------------------------------------------------------------
# Pure-JAX reference (for correctness check)
# --------------------------------------------------------------------------------------
def ref_forward(x, temb, params, group_norm=16):
    Cin = x.shape[1]
    Cout = params["conv1_w"].shape[0]

    def gn(h, g, b, G):
        N, C, H, W = h.shape
        hg = h.reshape(N, G, -1)
        mean = hg.mean(axis=2, keepdims=True)
        var = hg.var(axis=2, keepdims=True)
        hn = ((hg - mean) / jnp.sqrt(var + 1e-5)).reshape(N, C, H, W)
        return hn * g[None, :, None, None] + b[None, :, None, None]

    def conv(h, w, b, pad):
        o = jax.lax.conv_general_dilated(h, w, (1, 1), pad,
                                         dimension_numbers=("NCHW", "OIHW", "NCHW"))
        return o + b[None, :, None, None]

    silu = jax.nn.silu
    h = silu(gn(x, params["norm1_g"], params["norm1_b"], min(group_norm, Cin)))
    h = conv(h, params["conv1_w"], params["conv1_b"], "SAME")
    h = h + (silu(temb) @ params["temb_w"].T + params["temb_b"])[:, :, None, None]
    h = silu(gn(h, params["norm2_g"], params["norm2_b"], min(group_norm, Cout)))
    h = conv(h, params["conv2_w"], params["conv2_b"], "SAME")
    xs = conv(x, params["nin_w"], params["nin_b"], "VALID") if Cin != Cout else x
    return xs + h


# --------------------------------------------------------------------------------------
if __name__ == "__main__":
    def make_params(key, Cin, Cout, T):
        ks = jax.random.split(key, 12)
        p = {
            "norm1_g": 1.0 + 0.1 * jax.random.normal(ks[0], (Cin,), jnp.float32),
            "norm1_b": 0.1 * jax.random.normal(ks[1], (Cin,), jnp.float32),
            "conv1_w": 0.1 * jax.random.normal(ks[2], (Cout, Cin, 3, 3), jnp.float32),
            "conv1_b": 0.1 * jax.random.normal(ks[3], (Cout,), jnp.float32),
            "temb_w": 0.1 * jax.random.normal(ks[4], (Cout, T), jnp.float32),
            "temb_b": 0.1 * jax.random.normal(ks[5], (Cout,), jnp.float32),
            "norm2_g": 1.0 + 0.1 * jax.random.normal(ks[6], (Cout,), jnp.float32),
            "norm2_b": 0.1 * jax.random.normal(ks[7], (Cout,), jnp.float32),
            "conv2_w": 0.1 * jax.random.normal(ks[8], (Cout, Cout, 3, 3), jnp.float32),
            "conv2_b": 0.1 * jax.random.normal(ks[9], (Cout,), jnp.float32),
        }
        if Cin != Cout:
            p["nin_w"] = 0.1 * jax.random.normal(ks[10], (Cout, Cin, 1, 1), jnp.float32)
            p["nin_b"] = 0.1 * jax.random.normal(ks[11], (Cout,), jnp.float32)
        return p

    key = jax.random.PRNGKey(0)
    k_p1, k_p2, k_x1, k_x2, k_t = jax.random.split(key, 5)

    N, H, W, T = 2, 16, 16, 32
    temb = jax.random.normal(k_t, (N, T), jnp.float32)

    # Config 1: Cin != Cout  -> 1x1 nin_shortcut path
    Cin, Cout = 4, 8
    params1 = make_params(k_p1, Cin, Cout, T)
    x1 = jax.random.normal(k_x1, (N, Cin, H, W), jnp.float32)
    out1 = jax.block_until_ready(resnet_block_forward(x1, temb, params1))
    ref1 = jax.block_until_ready(ref_forward(x1, temb, params1))
    assert out1.shape == (N, Cout, H, W)
    # bf16 MXU inputs / bf16 intermediate h -> loosened tolerance vs the f32 reference.
    np.testing.assert_allclose(np.asarray(out1), np.asarray(ref1), rtol=2e-2, atol=2e-2)

    # Config 2: Cin == Cout -> identity shortcut path (no 1x1 matmul)
    C = 8
    params2 = make_params(k_p2, C, C, T)
    x2 = jax.random.normal(k_x2, (N, C, H, W), jnp.float32)
    out2 = jax.block_until_ready(resnet_block_forward(x2, temb, params2))
    ref2 = jax.block_until_ready(ref_forward(x2, temb, params2))
    assert out2.shape == (N, C, H, W)
    np.testing.assert_allclose(np.asarray(out2), np.asarray(ref2), rtol=2e-2, atol=2e-2)

    print("KERNEL_OK")
</pallas_src>

<mosaic_0001>
module attributes {stable_mosaic.version = 11 : i64} {
  func.func @_stage1_kernel(%arg0: i32, %arg1: memref<1x16x16x4xf32, #tpu.memory_space<vmem>>, %arg2: memref<1x4xf32, #tpu.memory_space<vmem>>, %arg3: memref<1x4xf32, #tpu.memory_space<vmem>>, %arg4: memref<4x4xf32, #tpu.memory_space<vmem>>, %arg5: memref<4x4xf32, #tpu.memory_space<vmem>>, %arg6: memref<36x8xbf16, #tpu.memory_space<vmem>>, %arg7: memref<1x8xf32, #tpu.memory_space<vmem>>, %arg8: memref<1x16x16x8xbf16, #tpu.memory_space<vmem>>, %arg9: memref<18x18x4xf32, #tpu.memory_space<vmem>>) attributes {dimension_semantics = [#tpu.dimension_semantics<parallel>], iteration_bounds = array<i64: 2>, scalar_prefetch = 0 : i64, scratch_operands = 1 : i64, tpu.core_type = #tpu.core_type<tc>, window_params = [{transform_indices = @transform_0, window_bounds = array<i64: 1, 16, 16, 4>}, {pipeline_mode = #tpu.pipeline_mode<synchronous>, transform_indices = @transform_1, window_bounds = array<i64: 1, 4>}, {pipeline_mode = #tpu.pipeline_mode<synchronous>, transform_indices = @transform_2, window_bounds = array<i64: 1, 4>}, {pipeline_mode = #tpu.pipeline_mode<synchronous>, transform_indices = @transform_3, window_bounds = array<i64: 4, 4>}, {pipeline_mode = #tpu.pipeline_mode<synchronous>, transform_indices = @transform_4, window_bounds = array<i64: 4, 4>}, {pipeline_mode = #tpu.pipeline_mode<synchronous>, transform_indices = @transform_5, window_bounds = array<i64: 36, 8>}, {pipeline_mode = #tpu.pipeline_mode<synchronous>, transform_indices = @transform_6, window_bounds = array<i64: 1, 8>}, {transform_indices = @transform_7, window_bounds = array<i64: 1, 16, 16, 8>}]} {
    %c0 = arith.constant 0 : index
    %c0_0 = arith.constant 0 : index
    %c0_1 = arith.constant 0 : index
    %c0_2 = arith.constant 0 : index
    %0 = vector.load %arg1[%c0, %c0_0, %c0_1, %c0_2] : memref<1x16x16x4xf32, #tpu.memory_space<vmem>>, vector<1x16x16x4xf32>
    %1 = vector.shape_cast %0 : vector<1x16x16x4xf32> to vector<16x16x4xf32>
    %c0_3 = arith.constant 0 : index
    %c0_4 = arith.constant 0 : index
    %2 = vector.load %arg2[%c0_3, %c0_4] : memref<1x4xf32, #tpu.memory_space<vmem>>, vector<1x4xf32>
    %c0_5 = arith.constant 0 : index
    %c0_6 = arith.constant 0 : index
    %3 = vector.load %arg3[%c0_5, %c0_6] : memref<1x4xf32, #tpu.memory_space<vmem>>, vector<1x4xf32>
    %c0_7 = arith.constant 0 : index
    %c0_8 = arith.constant 0 : index
    %4 = vector.load %arg4[%c0_7, %c0_8] : memref<4x4xf32, #tpu.memory_space<vmem>>, vector<4x4xf32>
    %c0_9 = arith.constant 0 : index
    %c0_10 = arith.constant 0 : index
    %5 = vector.load %arg5[%c0_9, %c0_10] : memref<4x4xf32, #tpu.memory_space<vmem>>, vector<4x4xf32>
    %cst = arith.constant dense<0.000000e+00> : vector<4xf32>
    %6 = vector.multi_reduction <add>, %1, %cst [0, 1] : vector<16x16x4xf32> to vector<4xf32>
    %7 = vector.shape_cast %6 : vector<4xf32> to vector<1x1x4xf32>
    %8 = vector.shape_cast %7 : vector<1x1x4xf32> to vector<1x4xf32>
    %cst_11 = arith.constant dense<0.000000e+00> : vector<1x4xf32>
    %9 = tpu.matmul %8, %4, %cst_11 {dimension_numbers = #tpu.dot_dimension_numbers<[1], [0], [0], [1], [0, 0, 1, 1], [], []>} : vector<1x4xf32>, vector<4x4xf32>, vector<1x4xf32> -> vector<1x4xf32>
    %cst_12 = arith.constant 2.560000e+02 : f32
    %10 = vector.broadcast %cst_12 : f32 to vector<1x4xf32>
    %11 = arith.divf %9, %10 : vector<1x4xf32>
    %cst_13 = arith.constant dense<0.000000e+00> : vector<1x4xf32>
    %12 = tpu.matmul %11, %5, %cst_13 {dimension_numbers = #tpu.dot_dimension_numbers<[1], [0], [0], [1], [0, 0, 1, 1], [], []>} : vector<1x4xf32>, vector<4x4xf32>, vector<1x4xf32> -> vector<1x4xf32>
    %13 = vector.shape_cast %12 : vector<1x4xf32> to vector<1x1x4xf32>
    %14 = vector.broadcast %13 : vector<1x1x4xf32> to vector<16x16x4xf32>
    %15 = arith.subf %1, %14 : vector<16x16x4xf32>
    %16 = arith.mulf %15, %15 : vector<16x16x4xf32>
    %cst_14 = arith.constant dense<0.000000e+00> : vector<4xf32>
    %17 = vector.multi_reduction <add>, %16, %cst_14 [0, 1] : vector<16x16x4xf32> to vector<4xf32>
    %18 = vector.shape_cast %17 : vector<4xf32> to vector<1x1x4xf32>
    %19 = vector.shape_cast %18 : vector<1x1x4xf32> to vector<1x4xf32>
    %cst_15 = arith.constant dense<0.000000e+00> : vector<1x4xf32>
    %20 = tpu.matmul %19, %4, %cst_15 {dimension_numbers = #tpu.dot_dimension_numbers<[1], [0], [0], [1], [0, 0, 1, 1], [], []>} : vector<1x4xf32>, vector<4x4xf32>, vector<1x4xf32> -> vector<1x4xf32>
    %cst_16 = arith.constant 2.560000e+02 : f32
    %21 = vector.broadcast %cst_16 : f32 to vector<1x4xf32>
    %22 = arith.divf %20, %21 : vector<1x4xf32>
    %cst_17 = arith.constant 9.99999974E-6 : f32
    %23 = vector.broadcast %cst_17 : f32 to vector<1x4xf32>
    %24 = arith.addf %22, %23 : vector<1x4xf32>
    %25 = math.rsqrt %24 : vector<1x4xf32>
    %cst_18 = arith.constant dense<0.000000e+00> : vector<1x4xf32>
    %26 = tpu.matmul %25, %5, %cst_18 {dimension_numbers = #tpu.dot_dimension_numbers<[1], [0], [0], [1], [0, 0, 1, 1], [], []>} : vector<1x4xf32>, vector<4x4xf32>, vector<1x4xf32> -> vector<1x4xf32>
    %27 = vector.shape_cast %26 : vector<1x4xf32> to vector<1x1x4xf32>
    %28 = vector.shape_cast %2 : vector<1x4xf32> to vector<1x1x4xf32>
    %29 = arith.mulf %27, %28 : vector<1x1x4xf32>
    %30 = vector.broadcast %29 : vector<1x1x4xf32> to vector<16x16x4xf32>
    %31 = arith.mulf %15, %30 : vector<16x16x4xf32>
    %32 = vector.shape_cast %3 : vector<1x4xf32> to vector<1x1x4xf32>
    %33 = vector.broadcast %32 : vector<1x1x4xf32> to vector<16x16x4xf32>
    %34 = arith.addf %31, %33 : vector<16x16x4xf32>
    %35 = arith.negf %34 : vector<16x16x4xf32>
    %36 = math.exp %35 : vector<16x16x4xf32>
    %cst_19 = arith.constant 1.000000e+00 : f32
    %37 = vector.broadcast %cst_19 : f32 to vector<16x16x4xf32>
    %38 = arith.addf %37, %36 : vector<16x16x4xf32>
    %39 = arith.divf %37, %38 : vector<16x16x4xf32>
    %40 = arith.mulf %34, %39 : vector<16x16x4xf32>
    %c0_20 = arith.constant 0 : index
    %c0_21 = arith.constant 0 : index
    %41 = vector.load %arg7[%c0_20, %c0_21] : memref<1x8xf32, #tpu.memory_space<vmem>>, vector<1x8xf32>
    %cst_22 = arith.constant 0.000000e+00 : f32
    %42 = vector.broadcast %cst_22 : f32 to vector<18x18x4xf32>
    %c0_23 = arith.constant 0 : index
    %c0_24 = arith.constant 0 : index
    %c0_25 = arith.constant 0 : index
    %43 = vector.load %arg9[%c0_23, %c0_24, %c0_25] : memref<18x18x4xf32, #tpu.memory_space<vmem>>, vector<18x18x4xf32>
    tpu.vector_store %arg9[%c0_23, %c0_24, %c0_25], %42 {strides = array<i32>} : memref<18x18x4xf32, #tpu.memory_space<vmem>>, vector<18x18x4xf32>,
    %c1 = arith.constant 1 : index
    %c1_26 = arith.constant 1 : index
    %c0_27 = arith.constant 0 : index
    %44 = vector.load %arg9[%c1, %c1_26, %c0_27] : memref<18x18x4xf32, #tpu.memory_space<vmem>>, vector<16x16x4xf32>
    tpu.vector_store %arg9[%c1, %c1_26, %c0_27], %40 {strides = array<i32>} : memref<18x18x4xf32, #tpu.memory_space<vmem>>, vector<16x16x4xf32>,
    %c0_28 = arith.constant 0 : index
    %c0_29 = arith.constant 0 : index
    %c0_30 = arith.constant 0 : index
    %45 = vector.load %arg9[%c0_28, %c0_29, %c0_30] : memref<18x18x4xf32, #tpu.memory_space<vmem>>, vector<16x16x4xf32>
    %c0_31 = arith.constant 0 : index
    %c1_32 = arith.constant 1 : index
    %c0_33 = arith.constant 0 : index
    %46 = vector.load %arg9[%c0_31, %c1_32, %c0_33] : memref<18x18x4xf32, #tpu.memory_space<vmem>>, vector<16x16x4xf32>
    %c0_34 = arith.constant 0 : index
    %c2 = arith.constant 2 : index
    %c0_35 = arith.constant 0 : index
    %47 = vector.load %arg9[%c0_34, %c2, %c0_35] : memref<18x18x4xf32, #tpu.memory_space<vmem>>, vector<16x16x4xf32>
    %c1_36 = arith.constant 1 : index
    %c0_37 = arith.constant 0 : index
    %c0_38 = arith.constant 0 : index
    %48 = vector.load %arg9[%c1_36, %c0_37, %c0_38] : memref<18x18x4xf32, #tpu.memory_space<vmem>>, vector<16x16x4xf32>
    %c1_39 = arith.constant 1 : index
    %c1_40 = arith.constant 1 : index
    %c0_41 = arith.constant 0 : index
    %49 = vector.load %arg9[%c1_39, %c1_40, %c0_41] : memref<18x18x4xf32, #tpu.memory_space<vmem>>, vector<16x16x4xf32>
    %c1_42 = arith.constant 1 : index
    %c2_43 = arith.constant 2 : index
    %c0_44 = arith.constant 0 : index
    %50 = vector.load %arg9[%c1_42, %c2_43, %c0_44] : memref<18x18x4xf32, #tpu.memory_space<vmem>>, vector<16x16x4xf32>
    %c2_45 = arith.constant 2 : index
    %c0_46 = arith.constant 0 : index
    %c0_47 = arith.constant 0 : index
    %51 = vector.load %arg9[%c2_45, %c0_46, %c0_47] : memref<18x18x4xf32, #tpu.memory_space<vmem>>, vector<16x16x4xf32>
    %c2_48 = arith.constant 2 : index
    %c1_49 = arith.constant 1 : index
    %c0_50 = arith.constant 0 : index
    %52 = vector.load %arg9[%c2_48, %c1_49, %c0_50] : memref<18x18x4xf32, #tpu.memory_space<vmem>>, vector<16x16x4xf32>
    %c2_51 = arith.constant 2 : index
    %c2_52 = arith.constant 2 : index
    %c0_53 = arith.constant 0 : index
    %53 = vector.load %arg9[%c2_51, %c2_52, %c0_53] : memref<18x18x4xf32, #tpu.memory_space<vmem>>, vector<16x16x4xf32>
    %54 = tpu.concatenate %45, %46, %47, %48, %49, %50, %51, %52, %53 in 2 : vector<16x16x4xf32>, vector<16x16x4xf32>, vector<16x16x4xf32>, vector<16x16x4xf32>, vector<16x16x4xf32>, vector<16x16x4xf32>, vector<16x16x4xf32>, vector<16x16x4xf32>, vector<16x16x4xf32> -> vector<16x16x36xf32>
    %55 = vector.shape_cast %54 : vector<16x16x36xf32> to vector<256x36xf32>
    %56 = arith.truncf %55 : vector<256x36xf32> to vector<256x36xbf16>
    %c0_54 = arith.constant 0 : index
    %c0_55 = arith.constant 0 : index
    %57 = vector.load %arg6[%c0_54, %c0_55] : memref<36x8xbf16, #tpu.memory_space<vmem>>, vector<36x8xbf16>
    %cst_56 = arith.constant dense<0.000000e+00> : vector<256x8xf32>
    %58 = tpu.matmul %56, %57, %cst_56 {dimension_numbers = #tpu.dot_dimension_numbers<[1], [0], [0], [1], [0, 0, 1, 1], [], []>} : vector<256x36xbf16>, vector<36x8xbf16>, vector<256x8xf32> -> vector<256x8xf32>
    %59 = vector.broadcast %41 : vector<1x8xf32> to vector<256x8xf32>
    %60 = arith.addf %58, %59 : vector<256x8xf32>
    %61 = vector.shape_cast %60 : vector<256x8xf32> to vector<16x16x8xf32>
    %62 = arith.truncf %61 : vector<16x16x8xf32> to vector<16x16x8xbf16>
    %c0_57 = arith.constant 0 : index
    %c0_58 = arith.constant 0 : index
    %c0_59 = arith.constant 0 : index
    %c0_60 = arith.constant 0 : index
    %63 = vector.load %arg8[%c0_57, %c0_58, %c0_59, %c0_60] : memref<1x16x16x8xbf16, #tpu.memory_space<vmem>>, vector<1x16x16x8xbf16>
    %64 = vector.shape_cast %63 : vector<1x16x16x8xbf16> to vector<16x16x8xbf16>
    %65 = vector.shape_cast %62 : vector<16x16x8xbf16> to vector<1x16x16x8xbf16>
    tpu.vector_store %arg8[%c0_57, %c0_58, %c0_59, %c0_60], %65 {strides = array<i32>} : memref<1x16x16x8xbf16, #tpu.memory_space<vmem>>, vector<1x16x16x8xbf16>,
    return
  }
  func.func @transform_0(%arg0: i32) -> (i32, i32, i32, i32) {
    %c0_i32 = arith.constant 0 : i32
    %c0_i32_0 = arith.constant 0 : i32
    %c0_i32_1 = arith.constant 0 : i32
    %c0_i32_2 = arith.constant 0 : i32
    return %arg0, %c0_i32, %c0_i32_0, %c0_i32_1 : i32, i32, i32, i32
  }
  func.func @transform_1(%arg0: i32) -> (i32, i32) {
    %c0_i32 = arith.constant 0 : i32
    %c0_i32_0 = arith.constant 0 : i32
    %c0_i32_1 = arith.constant 0 : i32
    return %c0_i32, %c0_i32_0 : i32, i32
  }
  func.func @transform_2(%arg0: i32) -> (i32, i32) {
    %c0_i32 = arith.constant 0 : i32
    %c0_i32_0 = arith.constant 0 : i32
    %c0_i32_1 = arith.constant 0 : i32
    return %c0_i32, %c0_i32_0 : i32, i32
  }
  func.func @transform_3(%arg0: i32) -> (i32, i32) {
    %c0_i32 = arith.constant 0 : i32
    %c0_i32_0 = arith.constant 0 : i32
    %c0_i32_1 = arith.constant 0 : i32
    return %c0_i32, %c0_i32_0 : i32, i32
  }
  func.func @transform_4(%arg0: i32) -> (i32, i32) {
    %c0_i32 = arith.constant 0 : i32
    %c0_i32_0 = arith.constant 0 : i32
    %c0_i32_1 = arith.constant 0 : i32
    return %c0_i32, %c0_i32_0 : i32, i32
  }
  func.func @transform_5(%arg0: i32) -> (i32, i32) {
    %c0_i32 = arith.constant 0 : i32
    %c0_i32_0 = arith.constant 0 : i32
    %c0_i32_1 = arith.constant 0 : i32
    return %c0_i32, %c0_i32_0 : i32, i32
  }
  func.func @transform_6(%arg0: i32) -> (i32, i32) {
    %c0_i32 = arith.constant 0 : i32
    %c0_i32_0 = arith.constant 0 : i32
    %c0_i32_1 = arith.constant 0 : i32
    return %c0_i32, %c0_i32_0 : i32, i32
  }
  func.func @transform_7(%arg0: i32) -> (i32, i32, i32, i32) {
    %c0_i32 = arith.constant 0 : i32
    %c0_i32_0 = arith.constant 0 : i32
    %c0_i32_1 = arith.constant 0 : i32
    %c0_i32_2 = arith.constant 0 : i32
    return %arg0, %c0_i32, %c0_i32_0, %c0_i32_1 : i32, i32, i32, i32
  }
}

</mosaic_0001>

<llo_original>
// kernel: tpu_custom_call.1
$region0: #{tpu_custom_call.1}
  #allocation0 [shape = 'u32[]', space=smem, size = 0x4, offset = 0x4, fixed_abs, tag = 'smem constant byte address 0x4 - core index']
  #allocation1 [shape = 'u32[72,128]{1,0:T(1,128)}', space=vmem, size = 0x9000, scoped, tag = 'internal scratch']
  #allocation2 [shape = 'f32[18,18,4]{2,1,0:T(8,128)}', space=vmem, size = 0x36000, scoped, tag = 'scratch operand']
  %s0 = inlined_call_operand.vmem [shape: f32[2,16,16,4], index: 0, kind: input, shape index: {}]
  %s1 = inlined_call_operand.vmem [shape: f32[1,4], index: 1, kind: input, shape index: {}]
  %s2 = inlined_call_operand.vmem [shape: f32[1,4], index: 2, kind: input, shape index: {}]
  %s3 = inlined_call_operand.vmem [shape: f32[4,4], index: 3, kind: input, shape index: {}]
  %s4 = inlined_call_operand.vmem [shape: f32[4,4], index: 4, kind: input, shape index: {}]
  %s5 = inlined_call_operand.vmem [shape: bf16[36,8], index: 5, kind: input, shape index: {}]
  %s6 = inlined_call_operand.vmem [shape: f32[1,8], index: 6, kind: input, shape index: {}]
  %s7 = inlined_call_operand.vmem [shape: bf16[2,16,16,8], index: 7, kind: output, shape index: {}]
  %s8 = sld [smem:[#allocation0]]
  $region61: #{tpu_custom_call.1} parent=0
    _
  %s10 = ssub.s32 1, %s8
  %s11 = scalar_select 0, %s10, %s8
  loop: start=0, step=1, limit=4
  $region2: #{tpu_custom_call.1} parent=0 // loop_pre_header
    _
  $region3: #{tpu_custom_call.1} parent=0 // loop_header
    %s13 = sphi 0, %s17
    %p14 = scmp.ge.s32.totalorder %s13, 4
    %s23 = sphi 0, %s25
    %s26 = sphi 0, %s23
    %s27 = sphi 0, %s26
    %s43 = sphi 0, %s27
    %s47 = sphi 0, %s47
    %s49 = sphi 0, %s47
    %s50 = sphi 0, %s49
    %s64 = sphi 0, %s50
    %s68 = sphi 0, %s68
    %s70 = sphi 0, %s68
    %s71 = sphi 0, %s70
    %s85 = sphi 0, %s71
    %s89 = sphi 0, %s89
    %s91 = sphi 0, %s89
    %s92 = sphi 0, %s91
    %s106 = sphi 0, %s92
    %s110 = sphi 0, %s110
    %s112 = sphi 0, %s110
    %s113 = sphi 0, %s112
    %s127 = sphi 0, %s113
    %s131 = sphi 0, %s131
    %s133 = sphi 0, %s131
    %s134 = sphi 0, %s133
    %s148 = sphi 0, %s134
    %s152 = sphi 0, %s152
    %s154 = sphi 0, %s152
    %s155 = sphi 0, %s154
    %s169 = sphi 0, %s155
    %s175 = sphi 0, %s177
    %s178 = sphi 0, %s175
    %s179 = sphi 0, %s178
    %s195 = sphi 0, %s179
  $region4: #{tpu_custom_call.1} parent=0 // loop_header_branch
    %16 = sbr.rel (%p14) target = $region8
  $region5: #{tpu_custom_call.1} parent=0 // loop_body
    %s18 = ssub.s32 %s13, 1
    %s19 = ssub.s32 %s13, 2
    %s20 = sadd.s32 %s13, 1
    %s21 = ssub.s32 %s13, %s20
    %p22 = scmp.eq.s32.totalorder %s21, 0
    %s24 = sadd.s32 %s23, 1
    %s25 = scalar_select %p22, %s23, %s24
    %p28 = pneg %p22
    %p29 = scmp.eq.s32.totalorder %s13, 1
    %p30 = por %p28, %p29
    %p31 = scmp.ne.s32.totalorder %s23, %s26
    %p32 = scmp.eq.s32.totalorder %s13, 0
    %p33 = por %p31, %p32
    %p34 = scmp.ne.s32.totalorder %s23, %s26
    %p35 = scmp.eq.s32.totalorder %s18, 1
    %p36 = por %p34, %p35
    %p37 = scmp.ne.s32.totalorder %s26, %s27
    %p38 = scmp.eq.s32.totalorder %s18, 0
    %p39 = por %p37, %p38
    %p40 = scmp.ne.s32.totalorder %s26, %s27
    %p41 = scmp.eq.s32.totalorder %s19, 1
    %p42 = por %p40, %p41
    %p44 = scmp.ne.s32.totalorder %s27, %s43
    %p45 = scmp.eq.s32.totalorder %s19, 0
    %p46 = por %p44, %p45
    %s48 = sadd.s32 %s47, 1
    %p51 = scmp.eq.s32.totalorder %s13, 1
    %p52 = scmp.ne.s32.totalorder %s47, %s49
    %p53 = scmp.eq.s32.totalorder %s13, 0
    %p54 = por %p52, %p53
    %p55 = scmp.ne.s32.totalorder %s47, %s49
    %p56 = scmp.eq.s32.totalorder %s18, 1
    %p57 = por %p55, %p56
    %p58 = scmp.ne.s32.totalorder %s49, %s50
    %p59 = scmp.eq.s32.totalorder %s18, 0
    %p60 = por %p58, %p59
    %p61 = scmp.ne.s32.totalorder %s49, %s50
    %p62 = scmp.eq.s32.totalorder %s19, 1
    %p63 = por %p61, %p62
    %p65 = scmp.ne.s32.totalorder %s50, %s64
    %p66 = scmp.eq.s32.totalorder %s19, 0
    %p67 = por %p65, %p66
    %s69 = sadd.s32 %s68, 1
    %p72 = scmp.eq.s32.totalorder %s13, 1
    %p73 = scmp.ne.s32.totalorder %s68, %s70
    %p74 = scmp.eq.s32.totalorder %s13, 0
    %p75 = por %p73, %p74
    %p76 = scmp.ne.s32.totalorder %s68, %s70
    %p77 = scmp.eq.s32.totalorder %s18, 1
    %p78 = por %p76, %p77
    %p79 = scmp.ne.s32.totalorder %s70, %s71
    %p80 = scmp.eq.s32.totalorder %s18, 0
    %p81 = por %p79, %p80
    %p82 = scmp.ne.s32.totalorder %s70, %s71
    %p83 = scmp.eq.s32.totalorder %s19, 1
    %p84 = por %p82, %p83
    %p86 = scmp.ne.s32.totalorder %s71, %s85
    %p87 = scmp.eq.s32.totalorder %s19, 0
    %p88 = por %p86, %p87
    %s90 = sadd.s32 %s89, 1
    %p93 = scmp.eq.s32.totalorder %s13, 1
    %p94 = scmp.ne.s32.totalorder %s89, %s91
    %p95 = scmp.eq.s32.totalorder %s13, 0
    %p96 = por %p94, %p95
    %p97 = scmp.ne.s32.totalorder %s89, %s91
    %p98 = scmp.eq.s32.totalorder %s18, 1
    %p99 = por %p97, %p98
    %p100 = scmp.ne.s32.totalorder %s91, %s92
    %p101 = scmp.eq.s32.totalorder %s18, 0
    %p102 = por %p100, %p101
    %p103 = scmp.ne.s32.totalorder %s91, %s92
    %p104 = scmp.eq.s32.totalorder %s19, 1
    %p105 = por %p103, %p104
    %p107 = scmp.ne.s32.totalorder %s92, %s106
    %p108 = scmp.eq.s32.totalorder %s19, 0
    %p109 = por %p107, %p108
    %s111 = sadd.s32 %s110, 1
    %p114 = scmp.eq.s32.totalorder %s13, 1
    %p115 = scmp.ne.s32.totalorder %s110, %s112
    %p116 = scmp.eq.s32.totalorder %s13, 0
    %p117 = por %p115, %p116
    %p118 = scmp.ne.s32.totalorder %s110, %s112
    %p119 = scmp.eq.s32.totalorder %s18, 1
    %p120 = por %p118, %p119
    %p121 = scmp.ne.s32.totalorder %s112, %s113
    %p122 = scmp.eq.s32.totalorder %s18, 0
    %p123 = por %p121, %p122
    %p124 = scmp.ne.s32.totalorder %s112, %s113
    %p125 = scmp.eq.s32.totalorder %s19, 1
    %p126 = por %p124, %p125
    %p128 = scmp.ne.s32.totalorder %s113, %s127
    %p129 = scmp.eq.s32.totalorder %s19, 0
    %p130 = por %p128, %p129
    %s132 = sadd.s32 %s131, 1
    %p135 = scmp.eq.s32.totalorder %s13, 1
    %p136 = scmp.ne.s32.totalorder %s131, %s133
    %p137 = scmp.eq.s32.totalorder %s13, 0
    %p138 = por %p136, %p137
    %p139 = scmp.ne.s32.totalorder %s131, %s133
    %p140 = scmp.eq.s32.totalorder %s18, 1
    %p141 = por %p139, %p140
    %p142 = scmp.ne.s32.totalorder %s133, %s134
    %p143 = scmp.eq.s32.totalorder %s18, 0
    %p144 = por %p142, %p143
    %p145 = scmp.ne.s32.totalorder %s133, %s134
    %p146 = scmp.eq.s32.totalorder %s19, 1
    %p147 = por %p145, %p146
    %p149 = scmp.ne.s32.totalorder %s134, %s148
    %p150 = scmp.eq.s32.totalorder %s19, 0
    %p151 = por %p149, %p150
    %s153 = sadd.s32 %s152, 1
    %p156 = scmp.eq.s32.totalorder %s13, 1
    %p157 = scmp.ne.s32.totalorder %s152, %s154
    %p158 = scmp.eq.s32.totalorder %s13, 0
    %p159 = por %p157, %p158
    %p160 = scmp.ne.s32.totalorder %s152, %s154
    %p161 = scmp.eq.s32.totalorder %s18, 1
    %p162 = por %p160, %p161
    %p163 = scmp.ne.s32.totalorder %s154, %s155
    %p164 = scmp.eq.s32.totalorder %s18, 0
    %p165 = por %p163, %p164
    %p166 = scmp.ne.s32.totalorder %s154, %s155
    %p167 = scmp.eq.s32.totalorder %s19, 1
    %p168 = por %p166, %p167
    %p170 = scmp.ne.s32.totalorder %s155, %s169
    %p171 = scmp.eq.s32.totalorder %s19, 0
    %p172 = por %p170, %p171
    %s173 = ssub.s32 %s13, %s20
    %p174 = scmp.eq.s32.totalorder %s173, 0
    %s176 = sadd.s32 %s175, 1
    %s177 = scalar_select %p174, %s175, %s176
    %p180 = pneg %p174
    %p181 = scmp.eq.s32.totalorder %s13, 1
    %p182 = por %p180, %p181
    %p183 = scmp.ne.s32.totalorder %s175, %s178
    %p184 = scmp.eq.s32.totalorder %s13, 0
    %p185 = por %p183, %p184
    %p186 = scmp.ne.s32.totalorder %s175, %s178
    %p187 = scmp.eq.s32.totalorder %s18, 1
    %p188 = por %p186, %p187
    %p189 = scmp.ne.s32.totalorder %s178, %s179
    %p190 = scmp.eq.s32.totalorder %s18, 0
    %p191 = por %p189, %p190
    %p192 = scmp.ne.s32.totalorder %s178, %s179
    %p193 = scmp.eq.s32.totalorder %s19, 1
    %p194 = por %p192, %p193
    %p196 = scmp.ne.s32.totalorder %s179, %s195
    %p197 = scmp.eq.s32.totalorder %s19, 0
    %p198 = por %p196, %p197
    %p199 = scmp.le.s32.totalorder 1, %s13
    %p200 = scmp.lt.s32.totalorder %s13, 3
    %p201 = pnand %p199, %p200
    %p202 = pneg %p201
    // Predicated region
    $region9: #{tpu_custom_call.1} parent=5 // pred_check
      _
    $region10: #{tpu_custom_call.1} parent=5 // pred_check_branch
      %204 = sbr.rel (%p201) target = $region12
    $region11: #{tpu_custom_call.1} parent=5 // pred_region
      %s205 = ssub.s32 %s13, 1
      // Predicated region
      $region13: #{tpu_custom_call.1} parent=11 // pred_check
        %p206 = pneg %p60
      $region14: #{tpu_custom_call.1} parent=11 // pred_check_branch
        %208 = sbr.rel (%p206) target = $region16
      $region15: #{tpu_custom_call.1} parent=11 // pred_region
        _
      $region16: #{tpu_custom_call.1} parent=11 // pred_fallthru
        _
      // Predicated region
      $region17: #{tpu_custom_call.1} parent=11 // pred_check
        %p209 = pneg %p81
      $region18: #{tpu_custom_call.1} parent=11 // pred_check_branch
        %211 = sbr.rel (%p209) target = $region20
      $region19: #{tpu_custom_call.1} parent=11 // pred_region
        _
      $region20: #{tpu_custom_call.1} parent=11 // pred_fallthru
        _
      // Predicated region
      $region21: #{tpu_custom_call.1} parent=11 // pred_check
        %p212 = pneg %p102
      $region22: #{tpu_custom_call.1} parent=11 // pred_check_branch
        %214 = sbr.rel (%p212) target = $region24
      $region23: #{tpu_custom_call.1} parent=11 // pred_region
        _
      $region24: #{tpu_custom_call.1} parent=11 // pred_fallthru
        _
      // Predicated region
      $region25: #{tpu_custom_call.1} parent=11 // pred_check
        %p215 = pneg %p123
      $region26: #{tpu_custom_call.1} parent=11 // pred_check_branch
        %217 = sbr.rel (%p215) target = $region28
      $region27: #{tpu_custom_call.1} parent=11 // pred_region
        _
      $region28: #{tpu_custom_call.1} parent=11 // pred_fallthru
        _
      // Predicated region
      $region29: #{tpu_custom_call.1} parent=11 // pred_check
        %p218 = pneg %p144
      $region30: #{tpu_custom_call.1} parent=11 // pred_check_branch
        %220 = sbr.rel (%p218) target = $region32
      $region31: #{tpu_custom_call.1} parent=11 // pred_region
        _
      $region32: #{tpu_custom_call.1} parent=11 // pred_fallthru
        _
      // Predicated region
      $region33: #{tpu_custom_call.1} parent=11 // pred_check
        %p221 = pneg %p165
      $region34: #{tpu_custom_call.1} parent=11 // pred_check_branch
        %223 = sbr.rel (%p221) target = $region36
      $region35: #{tpu_custom_call.1} parent=11 // pred_region
        _
      $region36: #{tpu_custom_call.1} parent=11 // pred_fallthru
        _
    $region12: #{tpu_custom_call.1} parent=5 // pred_fallthru
      _
    %p224 = scmp.lt.s32.totalorder %s13, 2
    // Predicated region
    $region37: #{tpu_custom_call.1} parent=5 // pred_check
      %p225 = pneg %p224
    $region38: #{tpu_custom_call.1} parent=5 // pred_check_branch
      %227 = sbr.rel (%p225) target = $region40
    $region39: #{tpu_custom_call.1} parent=5 // pred_region
      // Predicated region
      $region41: #{tpu_custom_call.1} parent=39 // pred_check
        %p228 = pneg %p33
      $region42: #{tpu_custom_call.1} parent=39 // pred_check_branch
        %230 = sbr.rel (%p228) target = $region44
      $region43: #{tpu_custom_call.1} parent=39 // pred_region
        %p231 = scmp.lt.s32.totalorder %s13, 1
        %s232 = scalar_select %p231, %s13, 1
        %s233 = smul.addr %s232, 32
        %s234 = smul.addr %s233, 8
        %s235 = scalar_lea.vmem %s0, %s234
      $region44: #{tpu_custom_call.1} parent=39 // pred_fallthru
        _
    $region40: #{tpu_custom_call.1} parent=5 // pred_fallthru
      _
    %p236 = scmp.le.s32.totalorder 1, %s13
    %p237 = scmp.lt.s32.totalorder %s13, 3
    %p238 = pnand %p236, %p237
    %p239 = pneg %p238
    // Predicated region
    $region45: #{tpu_custom_call.1} parent=5 // pred_check
      _
    $region46: #{tpu_custom_call.1} parent=5 // pred_check_branch
      %241 = sbr.rel (%p238) target = $region48
    $region47: #{tpu_custom_call.1} parent=5 // pred_region
      %s242 = ssub.s32 %s13, 1
      %p243 = scmp.lt.s32.totalorder %s18, 1
      %s244 = scalar_select %p243, %s18, 1
      %s245 = smul.addr %s244, 32
      %s246 = smul.addr %s245, 8
      %s247 = scalar_lea.vmem %s0, %s246
      %p248 = pneg %p39
      %p249 = pneg %p36
      %p250 = pneg %p60
      %p251 = pneg %p57
      %p252 = pneg %p81
      %p253 = pneg %p78
      %p254 = pneg %p102
      %p255 = pneg %p99
      %p256 = pneg %p123
      %p257 = pneg %p120
      %p258 = pneg %p144
      %p259 = pneg %p141
      %p260 = pneg %p165
      %p261 = pneg %p162
      %p262 = pneg %p191
      %p263 = pneg %p188
      %p264 = scmp.lt.s32.totalorder %s18, 1
      %s265 = scalar_select %p264, %s18, 1
      %s266 = smul.addr %s265, 32
      %s267 = smul.addr %s266, 4
      %s268 = scalar_lea.vmem %s7, %s267
      %p269 = scmp.lt.s32.totalorder %s18, 1
      %s270 = scalar_select %p269, %s18, 1
      %s271 = smul.addr %s270, 32
      %s272 = smul.addr %s271, 8
      %s273 = scalar_lea.vmem %s0, %s272
      %p274 = scmp.lt.s32.totalorder %s18, 1
      %s275 = scalar_select %p274, %s18, 1
      %s276 = smul.addr %s275, 32
      %s277 = smul.addr %s276, 4
      %s278 = scalar_lea.vmem %s7, %s277
      %v280 = vld [vmem:[%s273] sm:$0xff]
      %v281 = vld [vmem:[%s273 + $0x8] sm:$0xff]
      %v282 = vld [vmem:[%s273 + $0x10] sm:$0xff]
      %v283 = vld [vmem:[%s273 + $0x18] sm:$0xff]
      %v284 = vld [vmem:[%s273 + $0x20] sm:$0xff]
      %v285 = vld [vmem:[%s273 + $0x28] sm:$0xff]
      %v286 = vld [vmem:[%s273 + $0x30] sm:$0xff]
      %v287 = vld [vmem:[%s273 + $0x38] sm:$0xff]
      %v288 = vld [vmem:[%s273 + $0x40] sm:$0xff]
      %v289 = vld [vmem:[%s273 + $0x48] sm:$0xff]
      %v290 = vld [vmem:[%s273 + $0x50] sm:$0xff]
      %v291 = vld [vmem:[%s273 + $0x58] sm:$0xff]
      %v292 = vld [vmem:[%s273 + $0x60] sm:$0xff]
      %v293 = vld [vmem:[%s273 + $0x68] sm:$0xff]
      %v294 = vld [vmem:[%s273 + $0x70] sm:$0xff]
      %v295 = vld [vmem:[%s273 + $0x78] sm:$0xff]
      %v296 = vld [vmem:[%s273 + $0x80] sm:$0xff]
      %v297 = vld [vmem:[%s273 + $0x88] sm:$0xff]
      %v298 = vld [vmem:[%s273 + $0x90] sm:$0xff]
      %v299 = vld [vmem:[%s273 + $0x98] sm:$0xff]
      %v300 = vld [vmem:[%s273 + $0xa0] sm:$0xff]
      %v301 = vld [vmem:[%s273 + $0xa8] sm:$0xff]
      %v302 = vld [vmem:[%s273 + $0xb0] sm:$0xff]
      %v303 = vld [vmem:[%s273 + $0xb8] sm:$0xff]
      %v304 = vld [vmem:[%s273 + $0xc0] sm:$0xff]
      %v305 = vld [vmem:[%s273 + $0xc8] sm:$0xff]
      %v306 = vld [vmem:[%s273 + $0xd0] sm:$0xff]
      %v307 = vld [vmem:[%s273 + $0xd8] sm:$0xff]
      %v308 = vld [vmem:[%s273 + $0xe0] sm:$0xff]
      %v309 = vld [vmem:[%s273 + $0xe8] sm:$0xff]
      %v310 = vld [vmem:[%s273 + $0xf0] sm:$0xff]
      %v311 = vld [vmem:[%s273 + $0xf8] sm:$0xff]
      %v312 = vld [vmem:[%s1] sm:$0x1]
      %v313 = vld [vmem:[%s2] sm:$0x1]
      %v314 = vld [vmem:[%s3] sm:$0xf]
      %v315 = vld [vmem:[%s4] sm:$0xf]
      %vm316 = vcmask 31744
      %v317 = vsel %vm316, %v280, 0.0
      %v318 = vsel %vm316, %v281, 0.0
      %v319 = vadd.f32 %v317, %v318
      %v320 = vsel %vm316, %v282, 0.0
      %v321 = vadd.f32 %v319, %v320
      %v322 = vsel %vm316, %v283, 0.0
      %v323 = vadd.f32 %v321, %v322
      %v324 = vsel %vm316, %v284, 0.0
      %v325 = vadd.f32 %v323, %v324
      %v326 = vsel %vm316, %v285, 0.0
      %v327 = vadd.f32 %v325, %v326
      %v328 = vsel %vm316, %v286, 0.0
      %v329 = vadd.f32 %v327, %v328
      %v330 = vsel %vm316, %v287, 0.0
      %v331 = vadd.f32 %v329, %v330
      %v332 = vsel %vm316, %v288, 0.0
      %v333 = vadd.f32 %v331, %v332
      %v334 = vsel %vm316, %v289, 0.0
      %v335 = vadd.f32 %v333, %v334
      %v336 = vsel %vm316, %v290, 0.0
      %v337 = vadd.f32 %v335, %v336
      %v338 = vsel %vm316, %v291, 0.0
      %v339 = vadd.f32 %v337, %v338
      %v340 = vsel %vm316, %v292, 0.0
      %v341 = vadd.f32 %v339, %v340
      %v342 = vsel %vm316, %v293, 0.0
      %v343 = vadd.f32 %v341, %v342
      %v344 = vsel %vm316, %v294, 0.0
      %v345 = vadd.f32 %v343, %v344
      %v346 = vsel %vm316, %v295, 0.0
      %v347 = vadd.f32 %v345, %v346
      %v348 = vsel %vm316, %v296, 0.0
      %v349 = vadd.f32 %v347, %v348
      %v350 = vsel %vm316, %v297, 0.0
      %v351 = vadd.f32 %v349, %v350
      %v352 = vsel %vm316, %v298, 0.0
      %v353 = vadd.f32 %v351, %v352
      %v354 = vsel %vm316, %v299, 0.0
      %v355 = vadd.f32 %v353, %v354
      %v356 = vsel %vm316, %v300, 0.0
      %v357 = vadd.f32 %v355, %v356
      %v358 = vsel %vm316, %v301, 0.0
      %v359 = vadd.f32 %v357, %v358
      %v360 = vsel %vm316, %v302, 0.0
      %v361 = vadd.f32 %v359, %v360
      %v362 = vsel %vm316, %v303, 0.0
      %v363 = vadd.f32 %v361, %v362
      %v364 = vsel %vm316, %v304, 0.0
      %v365 = vadd.f32 %v363, %v364
      %v366 = vsel %vm316, %v305, 0.0
      %v367 = vadd.f32 %v365, %v366
      %v368 = vsel %vm316, %v306, 0.0
      %v369 = vadd.f32 %v367, %v368
      %v370 = vsel %vm316, %v307, 0.0
      %v371 = vadd.f32 %v369, %v370
      %v372 = vsel %vm316, %v308, 0.0
      %v373 = vadd.f32 %v371, %v372
      %v374 = vsel %vm316, %v309, 0.0
      %v375 = vadd.f32 %v373, %v374
      %v376 = vsel %vm316, %v310, 0.0
      %v377 = vadd.f32 %v375, %v376
      %v378 = vsel %vm316, %v311, 0.0
      %v379 = vadd.f32 %v377, %v378
      %v380 = vrot.slane %v379, 4
      %v381 = vadd.f32 %v379, %v380
      %v382 = vrot.slane %v381, 2
      %v383 = vadd.f32 %v381, %v382
      %v384 = vrot.slane %v383, 1
      %v385 = vadd.f32 %v383, %v384
      %v387 = vsel %vm316, %v385, 0
      %vm389 = vcmask 1043456
      %v391 = vsel %vm389, %v314, 0
      %393 = vmatpush.msra.mxu0 0.0
      %394 = vmatpush.msra.mxu0 0.0
      %395 = vmatpush.msra.mxu0 0.0
      %396 = vmatpush.msra.mxu0 0.0
      %397 = vmatpush.msra.mxu0 0.0
      %398 = vmatpush.msra.mxu0 0.0
      %399 = vmatpush.msra.mxu0 0.0
      %400 = vmatpush.msra.mxu0 0.0
      %401 = vmatpush.msra.mxu0 0.0
      %402 = vmatpush.msra.mxu0 0.0
      %403 = vmatpush.msra.mxu0 0.0
      %404 = vmatpush.msra.mxu0 0.0
      %405 = vmatpush.msra.mxu0 0.0
      %406 = vmatpush.msra.mxu0 0.0
      %407 = vmatpush.msra.mxu0 0.0
      %408 = vmatpush.msra.mxu0 %v391
      %409 = vmatmul.f32.gmra.mxu0 %v387
      %v410 = vpop.f32.mrf.mxu0
      %v411 = vadd.f32 0.0, %v410
      %412 = vdwg.mxu0
      %v413 = vrcp.pop 256.0
      %v414 = vmul.f32 256.0, %v413
      %v415 = vsub.f32 1.0, %v414
      %v416 = vmul.f32 %v413, %v415
      %v417 = vadd.f32 %v413, %v416
      %vm418 = vweird.f32 %v413
      %v419 = vsel %vm418, %v413, %v417
      %v420 = vmul.f32 %v411, %v419
      %v422 = vsel %vm316, %v420, 0
      %v425 = vsel %vm389, %v315, 0
      %427 = vmatpush.msra.mxu0 0.0
      %428 = vmatpush.msra.mxu0 0.0
      %429 = vmatpush.msra.mxu0 0.0
      %430 = vmatpush.msra.mxu0 0.0
      %431 = vmatpush.msra.mxu0 0.0
      %432 = vmatpush.msra.mxu0 0.0
      %433 = vmatpush.msra.mxu0 0.0
      %434 = vmatpush.msra.mxu0 0.0
      %435 = vmatpush.msra.mxu0 0.0
      %436 = vmatpush.msra.mxu0 0.0
      %437 = vmatpush.msra.mxu0 0.0
      %438 = vmatpush.msra.mxu0 0.0
      %439 = vmatpush.msra.mxu0 0.0
      %440 = vmatpush.msra.mxu0 0.0
      %441 = vmatpush.msra.mxu0 0.0
      %442 = vmatpush.msra.mxu0 %v425
      %443 = vmatmul.f32.gmra.mxu0 %v422
      %v444 = vpop.f32.mrf.mxu0
      %v445 = vadd.f32 0.0, %v444
      %446 = vdwg.mxu0
      %v447 = vperm.slane %v445, 0
      %v448 = vsub.f32 %v280, %v447
      %v449 = vsub.f32 %v281, %v447
      %v450 = vsub.f32 %v282, %v447
      %v451 = vsub.f32 %v283, %v447
      %v452 = vsub.f32 %v284, %v447
      %v453 = vsub.f32 %v285, %v447
      %v454 = vsub.f32 %v286, %v447
      %v455 = vsub.f32 %v287, %v447
      %v456 = vsub.f32 %v288, %v447
      %v457 = vsub.f32 %v289, %v447
      %v458 = vsub.f32 %v290, %v447
      %v459 = vsub.f32 %v291, %v447
      %v460 = vsub.f32 %v292, %v447
      %v461 = vsub.f32 %v293, %v447
      %v462 = vsub.f32 %v294, %v447
      %v463 = vsub.f32 %v295, %v447
      %v464 = vsub.f32 %v296, %v447
      %v465 = vsub.f32 %v297, %v447
      %v466 = vsub.f32 %v298, %v447
      %v467 = vsub.f32 %v299, %v447
      %v468 = vsub.f32 %v300, %v447
      %v469 = vsub.f32 %v301, %v447
      %v470 = vsub.f32 %v302, %v447
      %v471 = vsub.f32 %v303, %v447
      %v472 = vsub.f32 %v304, %v447
      %v473 = vsub.f32 %v305, %v447
      %v474 = vsub.f32 %v306, %v447
      %v475 = vsub.f32 %v307, %v447
      %v476 = vsub.f32 %v308, %v447
      %v477 = vsub.f32 %v309, %v447
      %v478 = vsub.f32 %v310, %v447
      %v479 = vsub.f32 %v311, %v447
      %v480 = vmul.f32 %v448, %v448
      %v481 = vmul.f32 %v449, %v449
      %v482 = vmul.f32 %v450, %v450
      %v483 = vmul.f32 %v451, %v451
      %v484 = vmul.f32 %v452, %v452
      %v485 = vmul.f32 %v453, %v453
      %v486 = vmul.f32 %v454, %v454
      %v487 = vmul.f32 %v455, %v455
      %v488 = vmul.f32 %v456, %v456
      %v489 = vmul.f32 %v457, %v457
      %v490 = vmul.f32 %v458, %v458
      %v491 = vmul.f32 %v459, %v459
      %v492 = vmul.f32 %v460, %v460
      %v493 = vmul.f32 %v461, %v461
      %v494 = vmul.f32 %v462, %v462
      %v495 = vmul.f32 %v463, %v463
      %v496 = vmul.f32 %v464, %v464
      %v497 = vmul.f32 %v465, %v465
      %v498 = vmul.f32 %v466, %v466
      %v499 = vmul.f32 %v467, %v467
      %v500 = vmul.f32 %v468, %v468
      %v501 = vmul.f32 %v469, %v469
      %v502 = vmul.f32 %v470, %v470
      %v503 = vmul.f32 %v471, %v471
      %v504 = vmul.f32 %v472, %v472
      %v505 = vmul.f32 %v473, %v473
      %v506 = vmul.f32 %v474, %v474
      %v507 = vmul.f32 %v475, %v475
      %v508 = vmul.f32 %v476, %v476
      %v509 = vmul.f32 %v477, %v477
      %v510 = vmul.f32 %v478, %v478
      %v511 = vmul.f32 %v479, %v479
      %v512 = vsel %vm316, %v480, 0.0
      %v513 = vsel %vm316, %v481, 0.0
      %v514 = vadd.f32 %v512, %v513
      %v515 = vsel %vm316, %v482, 0.0
      %v516 = vadd.f32 %v514, %v515
      %v517 = vsel %vm316, %v483, 0.0
      %v518 = vadd.f32 %v516, %v517
      %v519 = vsel %vm316, %v484, 0.0
      %v520 = vadd.f32 %v518, %v519
      %v521 = vsel %vm316, %v485, 0.0
      %v522 = vadd.f32 %v520, %v521
      %v523 = vsel %vm316, %v486, 0.0
      %v524 = vadd.f32 %v522, %v523
      %v525 = vsel %vm316, %v487, 0.0
      %v526 = vadd.f32 %v524, %v525
      %v527 = vsel %vm316, %v488, 0.0
      %v528 = vadd.f32 %v526, %v527
      %v529 = vsel %vm316, %v489, 0.0
      %v530 = vadd.f32 %v528, %v529
      %v531 = vsel %vm316, %v490, 0.0
      %v532 = vadd.f32 %v530, %v531
      %v533 = vsel %vm316, %v491, 0.0
      %v534 = vadd.f32 %v532, %v533
      %v535 = vsel %vm316, %v492, 0.0
      %v536 = vadd.f32 %v534, %v535
      %v537 = vsel %vm316, %v493, 0.0
      %v538 = vadd.f32 %v536, %v537
      %v539 = vsel %vm316, %v494, 0.0
      %v540 = vadd.f32 %v538, %v539
      %v541 = vsel %vm316, %v495, 0.0
      %v542 = vadd.f32 %v540, %v541
      %v543 = vsel %vm316, %v496, 0.0
      %v544 = vadd.f32 %v542, %v543
      %v545 = vsel %vm316, %v497, 0.0
      %v546 = vadd.f32 %v544, %v545
      %v547 = vsel %vm316, %v498, 0.0
      %v548 = vadd.f32 %v546, %v547
      %v549 = vsel %vm316, %v499, 0.0
      %v550 = vadd.f32 %v548, %v549
      %v551 = vsel %vm316, %v500, 0.0
      %v552 = vadd.f32 %v550, %v551
      %v553 = vsel %vm316, %v501, 0.0
      %v554 = vadd.f32 %v552, %v553
      %v555 = vsel %vm316, %v502, 0.0
      %v556 = vadd.f32 %v554, %v555
      %v557 = vsel %vm316, %v503, 0.0
      %v558 = vadd.f32 %v556, %v557
      %v559 = vsel %vm316, %v504, 0.0
      %v560 = vadd.f32 %v558, %v559
      %v561 = vsel %vm316, %v505, 0.0
      %v562 = vadd.f32 %v560, %v561
      %v563 = vsel %vm316, %v506, 0.0
      %v564 = vadd.f32 %v562, %v563
      %v565 = vsel %vm316, %v507, 0.0
      %v566 = vadd.f32 %v564, %v565
      %v567 = vsel %vm316, %v508, 0.0
      %v568 = vadd.f32 %v566, %v567
      %v569 = vsel %vm316, %v509, 0.0
      %v570 = vadd.f32 %v568, %v569
      %v571 = vsel %vm316, %v510, 0.0
      %v572 = vadd.f32 %v570, %v571
      %v573 = vsel %vm316, %v511, 0.0
      %v574 = vadd.f32 %v572, %v573
      %v575 = vrot.slane %v574, 4
      %v576 = vadd.f32 %v574, %v575
      %v577 = vrot.slane %v576, 2
      %v578 = vadd.f32 %v576, %v577
      %v579 = vrot.slane %v578, 1
      %v580 = vadd.f32 %v578, %v579
      %v582 = vsel %vm316, %v580, 0
      %584 = vmatpush.msra.mxu0 0.0
      %585 = vmatpush.msra.mxu0 0.0
      %586 = vmatpush.msra.mxu0 0.0
      %587 = vmatpush.msra.mxu0 0.0
      %588 = vmatpush.msra.mxu0 0.0
      %589 = vmatpush.msra.mxu0 0.0
      %590 = vmatpush.msra.mxu0 0.0
      %591 = vmatpush.msra.mxu0 0.0
      %592 = vmatpush.msra.mxu0 0.0
      %593 = vmatpush.msra.mxu0 0.0
      %594 = vmatpush.msra.mxu0 0.0
      %595 = vmatpush.msra.mxu0 0.0
      %596 = vmatpush.msra.mxu0 0.0
      %597 = vmatpush.msra.mxu0 0.0
      %598 = vmatpush.msra.mxu0 0.0
      %599 = vmatpush.msra.mxu0 %v391
      %600 = vmatmul.f32.gmra.mxu0 %v582
      %v601 = vpop.f32.mrf.mxu0
      %v602 = vadd.f32 0.0, %v601
      %603 = vdwg.mxu0
      %v604 = vmul.f32 %v602, %v419
      %v605 = vadd.f32 %v604, 1e-05
      %v606 = vrsqrt.pop %v605
      %v607 = vmul.f32 %v606, %v605
      %v608 = vmul.f32 %v607, %v606
      %v609 = vmul.f32 0.5, %v608
      %v610 = vsub.f32 1.5, %v609
      %v611 = vmul.f32 %v606, %v610
      %vm612 = vweird.f32 %v605
      %vm613 = vweird.f32 %v606
      %vm614 = vmor %vm612, %vm613
      %v615 = vsel %vm614, %v606, %v611
      %v617 = vsel %vm316, %v615, 0
      %619 = vmatpush.msra.mxu0 0.0
      %620 = vmatpush.msra.mxu0 0.0
      %621 = vmatpush.msra.mxu0 0.0
      %622 = vmatpush.msra.mxu0 0.0
      %623 = vmatpush.msra.mxu0 0.0
      %624 = vmatpush.msra.mxu0 0.0
      %625 = vmatpush.msra.mxu0 0.0
      %626 = vmatpush.msra.mxu0 0.0
      %627 = vmatpush.msra.mxu0 0.0
      %628 = vmatpush.msra.mxu0 0.0
      %629 = vmatpush.msra.mxu0 0.0
      %630 = vmatpush.msra.mxu0 0.0
      %631 = vmatpush.msra.mxu0 0.0
      %632 = vmatpush.msra.mxu0 0.0
      %633 = vmatpush.msra.mxu0 0.0
      %634 = vmatpush.msra.mxu0 %v425
      %635 = vmatmul.f32.gmra.mxu0 %v617
      %v636 = vpop.f32.mrf.mxu0
      %v637 = vadd.f32 0.0, %v636
      %638 = vdwg.mxu0
      %v639 = vmul.f32 %v637, %v312
      %v640 = vperm.slane %v639, 0
      %v641 = vmul.f32 %v448, %v640
      %v642 = vmul.f32 %v449, %v640
      %v643 = vmul.f32 %v450, %v640
      %v644 = vmul.f32 %v451, %v640
      %v645 = vmul.f32 %v452, %v640
      %v646 = vmul.f32 %v453, %v640
      %v647 = vmul.f32 %v454, %v640
      %v648 = vmul.f32 %v455, %v640
      %v649 = vmul.f32 %v456, %v640
      %v650 = vmul.f32 %v457, %v640
      %v651 = vmul.f32 %v458, %v640
      %v652 = vmul.f32 %v459, %v640
      %v653 = vmul.f32 %v460, %v640
      %v654 = vmul.f32 %v461, %v640
      %v655 = vmul.f32 %v462, %v640
      %v656 = vmul.f32 %v463, %v640
      %v657 = vmul.f32 %v464, %v640
      %v658 = vmul.f32 %v465, %v640
      %v659 = vmul.f32 %v466, %v640
      %v660 = vmul.f32 %v467, %v640
      %v661 = vmul.f32 %v468, %v640
      %v662 = vmul.f32 %v469, %v640
      %v663 = vmul.f32 %v470, %v640
      %v664 = vmul.f32 %v471, %v640
      %v665 = vmul.f32 %v472, %v640
      %v666 = vmul.f32 %v473, %v640
      %v667 = vmul.f32 %v474, %v640
      %v668 = vmul.f32 %v475, %v640
      %v669 = vmul.f32 %v476, %v640
      %v670 = vmul.f32 %v477, %v640
      %v671 = vmul.f32 %v478, %v640
      %v672 = vmul.f32 %v479, %v640
      %v674 = vperm.slane %v313, 0
      %v676 = vadd.f32 %v641, %v674
      %v677 = vadd.f32 %v642, %v674
      %v678 = vadd.f32 %v643, %v674
      %v679 = vadd.f32 %v644, %v674
      %v680 = vadd.f32 %v645, %v674
      %v681 = vadd.f32 %v646, %v674
      %v682 = vadd.f32 %v647, %v674
      %v683 = vadd.f32 %v648, %v674
      %v684 = vadd.f32 %v649, %v674
      %v685 = vadd.f32 %v650, %v674
      %v686 = vadd.f32 %v651, %v674
      %v687 = vadd.f32 %v652, %v674
      %v688 = vadd.f32 %v653, %v674
      %v689 = vadd.f32 %v654, %v674
      %v690 = vadd.f32 %v655, %v674
      %v691 = vadd.f32 %v656, %v674
      %v692 = vadd.f32 %v657, %v674
      %v693 = vadd.f32 %v658, %v674
      %v694 = vadd.f32 %v659, %v674
      %v695 = vadd.f32 %v660, %v674
      %v696 = vadd.f32 %v661, %v674
      %v697 = vadd.f32 %v662, %v674
      %v698 = vadd.f32 %v663, %v674
      %v699 = vadd.f32 %v664, %v674
      %v700 = vadd.f32 %v665, %v674
      %v701 = vadd.f32 %v666, %v674
      %v702 = vadd.f32 %v667, %v674
      %v703 = vadd.f32 %v668, %v674
      %v704 = vadd.f32 %v669, %v674
      %v705 = vadd.f32 %v670, %v674
      %v706 = vadd.f32 %v671, %v674
      %v707 = vadd.f32 %v672, %v674
      %v708 = vxor.u32 %v676, 2147483648
      %v709 = vxor.u32 %v677, 2147483648
      %v710 = vxor.u32 %v678, 2147483648
      %v711 = vxor.u32 %v679, 2147483648
      %v712 = vxor.u32 %v680, 2147483648
      %v713 = vxor.u32 %v681, 2147483648
      %v714 = vxor.u32 %v682, 2147483648
      %v715 = vxor.u32 %v683, 2147483648
      %v716 = vxor.u32 %v684, 2147483648
      %v717 = vxor.u32 %v685, 2147483648
      %v718 = vxor.u32 %v686, 2147483648
      %v719 = vxor.u32 %v687, 2147483648
      %v720 = vxor.u32 %v688, 2147483648
      %v721 = vxor.u32 %v689, 2147483648
      %v722 = vxor.u32 %v690, 2147483648
      %v723 = vxor.u32 %v691, 2147483648
      %v724 = vxor.u32 %v692, 2147483648
      %v725 = vxor.u32 %v693, 2147483648
      %v726 = vxor.u32 %v694, 2147483648
      %v727 = vxor.u32 %v695, 2147483648
      %v728 = vxor.u32 %v696, 2147483648
      %v729 = vxor.u32 %v697, 2147483648
      %v730 = vxor.u32 %v698, 2147483648
      %v731 = vxor.u32 %v699, 2147483648
      %v732 = vxor.u32 %v700, 2147483648
      %v733 = vxor.u32 %v701, 2147483648
      %v734 = vxor.u32 %v702, 2147483648
      %v735 = vxor.u32 %v703, 2147483648
      %v736 = vxor.u32 %v704, 2147483648
      %v737 = vxor.u32 %v705, 2147483648
      %v738 = vxor.u32 %v706, 2147483648
      %v739 = vxor.u32 %v707, 2147483648
      %v740 = vmul.f32 %v708, 1.442695
      %v741 = vpow.pop %v740
      %v742 = vmul.f32 %v709, 1.442695
      %v743 = vpow.pop %v742
      %v744 = vmul.f32 %v710, 1.442695
      %v745 = vpow.pop %v744
      %v746 = vmul.f32 %v711, 1.442695
      %v747 = vpow.pop %v746
      %v748 = vmul.f32 %v712, 1.442695
      %v749 = vpow.pop %v748
      %v750 = vmul.f32 %v713, 1.442695
      %v751 = vpow.pop %v750
      %v752 = vmul.f32 %v714, 1.442695
      %v753 = vpow.pop %v752
      %v754 = vmul.f32 %v715, 1.442695
      %v755 = vpow.pop %v754
      %v756 = vmul.f32 %v716, 1.442695
      %v757 = vpow.pop %v756
      %v758 = vmul.f32 %v717, 1.442695
      %v759 = vpow.pop %v758
      %v760 = vmul.f32 %v718, 1.442695
      %v761 = vpow.pop %v760
      %v762 = vmul.f32 %v719, 1.442695
      %v763 = vpow.pop %v762
      %v764 = vmul.f32 %v720, 1.442695
      %v765 = vpow.pop %v764
      %v766 = vmul.f32 %v721, 1.442695
      %v767 = vpow.pop %v766
      %v768 = vmul.f32 %v722, 1.442695
      %v769 = vpow.pop %v768
      %v770 = vmul.f32 %v723, 1.442695
      %v771 = vpow.pop %v770
      %v772 = vmul.f32 %v724, 1.442695
      %v773 = vpow.pop %v772
      %v774 = vmul.f32 %v725, 1.442695
      %v775 = vpow.pop %v774
      %v776 = vmul.f32 %v726, 1.442695
      %v777 = vpow.pop %v776
      %v778 = vmul.f32 %v727, 1.442695
      %v779 = vpow.pop %v778
      %v780 = vmul.f32 %v728, 1.442695
      %v781 = vpow.pop %v780
      %v782 = vmul.f32 %v729, 1.442695
      %v783 = vpow.pop %v782
      %v784 = vmul.f32 %v730, 1.442695
      %v785 = vpow.pop %v784
      %v786 = vmul.f32 %v731, 1.442695
      %v787 = vpow.pop %v786
      %v788 = vmul.f32 %v732, 1.442695
      %v789 = vpow.pop %v788
      %v790 = vmul.f32 %v733, 1.442695
      %v791 = vpow.pop %v790
      %v792 = vmul.f32 %v734, 1.442695
      %v793 = vpow.pop %v792
      %v794 = vmul.f32 %v735, 1.442695
      %v795 = vpow.pop %v794
      %v796 = vmul.f32 %v736, 1.442695
      %v797 = vpow.pop %v796
      %v798 = vmul.f32 %v737, 1.442695
      %v799 = vpow.pop %v798
      %v800 = vmul.f32 %v738, 1.442695
      %v801 = vpow.pop %v800
      %v802 = vmul.f32 %v739, 1.442695
      %v803 = vpow.pop %v802
      %v804 = vadd.f32 %v741, 1.0
      %v805 = vadd.f32 %v743, 1.0
      %v806 = vadd.f32 %v745, 1.0
      %v807 = vadd.f32 %v747, 1.0
      %v808 = vadd.f32 %v749, 1.0
      %v809 = vadd.f32 %v751, 1.0
      %v810 = vadd.f32 %v753, 1.0
      %v811 = vadd.f32 %v755, 1.0
      %v812 = vadd.f32 %v757, 1.0
      %v813 = vadd.f32 %v759, 1.0
      %v814 = vadd.f32 %v761, 1.0
      %v815 = vadd.f32 %v763, 1.0
      %v816 = vadd.f32 %v765, 1.0
      %v817 = vadd.f32 %v767, 1.0
      %v818 = vadd.f32 %v769, 1.0
      %v819 = vadd.f32 %v771, 1.0
      %v820 = vadd.f32 %v773, 1.0
      %v821 = vadd.f32 %v775, 1.0
      %v822 = vadd.f32 %v777, 1.0
      %v823 = vadd.f32 %v779, 1.0
      %v824 = vadd.f32 %v781, 1.0
      %v825 = vadd.f32 %v783, 1.0
      %v826 = vadd.f32 %v785, 1.0
      %v827 = vadd.f32 %v787, 1.0
      %v828 = vadd.f32 %v789, 1.0
      %v829 = vadd.f32 %v791, 1.0
      %v830 = vadd.f32 %v793, 1.0
      %v831 = vadd.f32 %v795, 1.0
      %v832 = vadd.f32 %v797, 1.0
      %v833 = vadd.f32 %v799, 1.0
      %v834 = vadd.f32 %v801, 1.0
      %v835 = vadd.f32 %v803, 1.0
      %v836 = vrcp.pop %v804
      %v837 = vmul.f32 %v804, %v836
      %v838 = vsub.f32 1.0, %v837
      %v839 = vmul.f32 %v836, %v838
      %v840 = vadd.f32 %v836, %v839
      %vm841 = vweird.f32 %v804
      %vm842 = vweird.f32 %v836
      %vm843 = vmor %vm841, %vm842
      %v844 = vsel %vm843, %v836, %v840
      %v845 = vand.u32 2147483647, %v804
      %vm846 = vcmp.eq.f32.partialorder %v845, 8.507059e+37
      %v847 = vand.u32 %v804, 2147483648
      %v848 = vor.u32 1.1754944e-38, %v847
      %v849 = vsel %vm846, %v848, %v844
      %v850 = vmul.f32 1.0, %v849
      %v851 = vrcp.pop %v805
      %v852 = vmul.f32 %v805, %v851
      %v853 = vsub.f32 1.0, %v852
      %v854 = vmul.f32 %v851, %v853
      %v855 = vadd.f32 %v851, %v854
      %vm856 = vweird.f32 %v805
      %vm857 = vweird.f32 %v851
      %vm858 = vmor %vm856, %vm857
      %v859 = vsel %vm858, %v851, %v855
      %v860 = vand.u32 2147483647, %v805
      %vm861 = vcmp.eq.f32.partialorder %v860, 8.507059e+37
      %v862 = vand.u32 %v805, 2147483648
      %v863 = vor.u32 1.1754944e-38, %v862
      %v864 = vsel %vm861, %v863, %v859
      %v865 = vmul.f32 1.0, %v864
      %v866 = vrcp.pop %v806
      %v867 = vmul.f32 %v806, %v866
      %v868 = vsub.f32 1.0, %v867
      %v869 = vmul.f32 %v866, %v868
      %v870 = vadd.f32 %v866, %v869
      %vm871 = vweird.f32 %v806
      %vm872 = vweird.f32 %v866
      %vm873 = vmor %vm871, %vm872
      %v874 = vsel %vm873, %v866, %v870
      %v875 = vand.u32 2147483647, %v806
      %vm876 = vcmp.eq.f32.partialorder %v875, 8.507059e+37
      %v877 = vand.u32 %v806, 2147483648
      %v878 = vor.u32 1.1754944e-38, %v877
      %v879 = vsel %vm876, %v878, %v874
      %v880 = vmul.f32 1.0, %v879
      %v881 = vrcp.pop %v807
      %v882 = vmul.f32 %v807, %v881
      %v883 = vsub.f32 1.0, %v882
      %v884 = vmul.f32 %v881, %v883
      %v885 = vadd.f32 %v881, %v884
      %vm886 = vweird.f32 %v807
      %vm887 = vweird.f32 %v881
      %vm888 = vmor %vm886, %vm887
      %v889 = vsel %vm888, %v881, %v885
      %v890 = vand.u32 2147483647, %v807
      %vm891 = vcmp.eq.f32.partialorder %v890, 8.507059e+37
      %v892 = vand.u32 %v807, 2147483648
      %v893 = vor.u32 1.1754944e-38, %v892
      %v894 = vsel %vm891, %v893, %v889
      %v895 = vmul.f32 1.0, %v894
      %v896 = vrcp.pop %v808
      %v897 = vmul.f32 %v808, %v896
      %v898 = vsub.f32 1.0, %v897
      %v899 = vmul.f32 %v896, %v898
      %v900 = vadd.f32 %v896, %v899
      %vm901 = vweird.f32 %v808
      %vm902 = vweird.f32 %v896
      %vm903 = vmor %vm901, %vm902
      %v904 = vsel %vm903, %v896, %v900
      %v905 = vand.u32 2147483647, %v808
      %vm906 = vcmp.eq.f32.partialorder %v905, 8.507059e+37
      %v907 = vand.u32 %v808, 2147483648
      %v908 = vor.u32 1.1754944e-38, %v907
      %v909 = vsel %vm906, %v908, %v904
      %v910 = vmul.f32 1.0, %v909
      %v911 = vrcp.pop %v809
      %v912 = vmul.f32 %v809, %v911
      %v913 = vsub.f32 1.0, %v912
      %v914 = vmul.f32 %v911, %v913
      %v915 = vadd.f32 %v911, %v914
      %vm916 = vweird.f32 %v809
      %vm917 = vweird.f32 %v911
      %vm918 = vmor %vm916, %vm917
      %v919 = vsel %vm918, %v911, %v915
      %v920 = vand.u32 2147483647, %v809
      %vm921 = vcmp.eq.f32.partialorder %v920, 8.507059e+37
      %v922 = vand.u32 %v809, 2147483648
      %v923 = vor.u32 1.1754944e-38, %v922
      %v924 = vsel %vm921, %v923, %v919
      %v925 = vmul.f32 1.0, %v924
      %v926 = vrcp.pop %v810
      %v927 = vmul.f32 %v810, %v926
      %v928 = vsub.f32 1.0, %v927
      %v929 = vmul.f32 %v926, %v928
      %v930 = vadd.f32 %v926, %v929
      %vm931 = vweird.f32 %v810
      %vm932 = vweird.f32 %v926
      %vm933 = vmor %vm931, %vm932
      %v934 = vsel %vm933, %v926, %v930
      %v935 = vand.u32 2147483647, %v810
      %vm936 = vcmp.eq.f32.partialorder %v935, 8.507059e+37
      %v937 = vand.u32 %v810, 2147483648
      %v938 = vor.u32 1.1754944e-38, %v937
      %v939 = vsel %vm936, %v938, %v934
      %v940 = vmul.f32 1.0, %v939
      %v941 = vrcp.pop %v811
      %v942 = vmul.f32 %v811, %v941
      %v943 = vsub.f32 1.0, %v942
      %v944 = vmul.f32 %v941, %v943
      %v945 = vadd.f32 %v941, %v944
      %vm946 = vweird.f32 %v811
      %vm947 = vweird.f32 %v941
      %vm948 = vmor %vm946, %vm947
      %v949 = vsel %vm948, %v941, %v945
      %v950 = vand.u32 2147483647, %v811
      %vm951 = vcmp.eq.f32.partialorder %v950, 8.507059e+37
      %v952 = vand.u32 %v811, 2147483648
      %v953 = vor.u32 1.1754944e-38, %v952
      %v954 = vsel %vm951, %v953, %v949
      %v955 = vmul.f32 1.0, %v954
      %v956 = vrcp.pop %v812
      %v957 = vmul.f32 %v812, %v956
      %v958 = vsub.f32 1.0, %v957
      %v959 = vmul.f32 %v956, %v958
      %v960 = vadd.f32 %v956, %v959
      %vm961 = vweird.f32 %v812
      %vm962 = vweird.f32 %v956
      %vm963 = vmor %vm961, %vm962
      %v964 = vsel %vm963, %v956, %v960
      %v965 = vand.u32 2147483647, %v812
      %vm966 = vcmp.eq.f32.partialorder %v965, 8.507059e+37
      %v967 = vand.u32 %v812, 2147483648
      %v968 = vor.u32 1.1754944e-38, %v967
      %v969 = vsel %vm966, %v968, %v964
      %v970 = vmul.f32 1.0, %v969
      %v971 = vrcp.pop %v813
      %v972 = vmul.f32 %v813, %v971
      %v973 = vsub.f32 1.0, %v972
      %v974 = vmul.f32 %v971, %v973
      %v975 = vadd.f32 %v971, %v974
      %vm976 = vweird.f32 %v813
      %vm977 = vweird.f32 %v971
      %vm978 = vmor %vm976, %vm977
      %v979 = vsel %vm978, %v971, %v975
      %v980 = vand.u32 2147483647, %v813
      %vm981 = vcmp.eq.f32.partialorder %v980, 8.507059e+37
      %v982 = vand.u32 %v813, 2147483648
      %v983 = vor.u32 1.1754944e-38, %v982
      %v984 = vsel %vm981, %v983, %v979
      %v985 = vmul.f32 1.0, %v984
      %v986 = vrcp.pop %v814
      %v987 = vmul.f32 %v814, %v986
      %v988 = vsub.f32 1.0, %v987
      %v989 = vmul.f32 %v986, %v988
      %v990 = vadd.f32 %v986, %v989
      %vm991 = vweird.f32 %v814
      %vm992 = vweird.f32 %v986
      %vm993 = vmor %vm991, %vm992
      %v994 = vsel %vm993, %v986, %v990
      %v995 = vand.u32 2147483647, %v814
      %vm996 = vcmp.eq.f32.partialorder %v995, 8.507059e+37
      %v997 = vand.u32 %v814, 2147483648
      %v998 = vor.u32 1.1754944e-38, %v997
      %v999 = vsel %vm996, %v998, %v994
      %v1000 = vmul.f32 1.0, %v999
      %v1001 = vrcp.pop %v815
      %v1002 = vmul.f32 %v815, %v1001
      %v1003 = vsub.f32 1.0, %v1002
      %v1004 = vmul.f32 %v1001, %v1003
      %v1005 = vadd.f32 %v1001, %v1004
      %vm1006 = vweird.f32 %v815
      %vm1007 = vweird.f32 %v1001
      %vm1008 = vmor %vm1006, %vm1007
      %v1009 = vsel %vm1008, %v1001, %v1005
      %v1010 = vand.u32 2147483647, %v815
      %vm1011 = vcmp.eq.f32.partialorder %v1010, 8.507059e+37
      %v1012 = vand.u32 %v815, 2147483648
      %v1013 = vor.u32 1.1754944e-38, %v1012
      %v1014 = vsel %vm1011, %v1013, %v1009
      %v1015 = vmul.f32 1.0, %v1014
      %v1016 = vrcp.pop %v816
      %v1017 = vmul.f32 %v816, %v1016
      %v1018 = vsub.f32 1.0, %v1017
      %v1019 = vmul.f32 %v1016, %v1018
      %v1020 = vadd.f32 %v1016, %v1019
      %vm1021 = vweird.f32 %v816
      %vm1022 = vweird.f32 %v1016
      %vm1023 = vmor %vm1021, %vm1022
      %v1024 = vsel %vm1023, %v1016, %v1020
      %v1025 = vand.u32 2147483647, %v816
      %vm1026 = vcmp.eq.f32.partialorder %v1025, 8.507059e+37
      %v1027 = vand.u32 %v816, 2147483648
      %v1028 = vor.u32 1.1754944e-38, %v1027
      %v1029 = vsel %vm1026, %v1028, %v1024
      %v1030 = vmul.f32 1.0, %v1029
      %v1031 = vrcp.pop %v817
      %v1032 = vmul.f32 %v817, %v1031
      %v1033 = vsub.f32 1.0, %v1032
      %v1034 = vmul.f32 %v1031, %v1033
      %v1035 = vadd.f32 %v1031, %v1034
      %vm1036 = vweird.f32 %v817
      %vm1037 = vweird.f32 %v1031
      %vm1038 = vmor %vm1036, %vm1037
      %v1039 = vsel %vm1038, %v1031, %v1035
      %v1040 = vand.u32 2147483647, %v817
      %vm1041 = vcmp.eq.f32.partialorder %v1040, 8.507059e+37
      %v1042 = vand.u32 %v817, 2147483648
      %v1043 = vor.u32 1.1754944e-38, %v1042
      %v1044 = vsel %vm1041, %v1043, %v1039
      %v1045 = vmul.f32 1.0, %v1044
      %v1046 = vrcp.pop %v818
      %v1047 = vmul.f32 %v818, %v1046
      %v1048 = vsub.f32 1.0, %v1047
      %v1049 = vmul.f32 %v1046, %v1048
      %v1050 = vadd.f32 %v1046, %v1049
      %vm1051 = vweird.f32 %v818
      %vm1052 = vweird.f32 %v1046
      %vm1053 = vmor %vm1051, %vm1052
      %v1054 = vsel %vm1053, %v1046, %v1050
      %v1055 = vand.u32 2147483647, %v818
      %vm1056 = vcmp.eq.f32.partialorder %v1055, 8.507059e+37
      %v1057 = vand.u32 %v818, 2147483648
      %v1058 = vor.u32 1.1754944e-38, %v1057
      %v1059 = vsel %vm1056, %v1058, %v1054
      %v1060 = vmul.f32 1.0, %v1059
      %v1061 = vrcp.pop %v819
      %v1062 = vmul.f32 %v819, %v1061
      %v1063 = vsub.f32 1.0, %v1062
      %v1064 = vmul.f32 %v1061, %v1063
      %v1065 = vadd.f32 %v1061, %v1064
      %vm1066 = vweird.f32 %v819
      %vm1067 = vweird.f32 %v1061
      %vm1068 = vmor %vm1066, %vm1067
      %v1069 = vsel %vm1068, %v1061, %v1065
      %v1070 = vand.u32 2147483647, %v819
      %vm1071 = vcmp.eq.f32.partialorder %v1070, 8.507059e+37
      %v1072 = vand.u32 %v819, 2147483648
      %v1073 = vor.u32 1.1754944e-38, %v1072
      %v1074 = vsel %vm1071, %v1073, %v1069
      %v1075 = vmul.f32 1.0, %v1074
      %v1076 = vrcp.pop %v820
      %v1077 = vmul.f32 %v820, %v1076
      %v1078 = vsub.f32 1.0, %v1077
      %v1079 = vmul.f32 %v1076, %v1078
      %v1080 = vadd.f32 %v1076, %v1079
      %vm1081 = vweird.f32 %v820
      %vm1082 = vweird.f32 %v1076
      %vm1083 = vmor %vm1081, %vm1082
      %v1084 = vsel %vm1083, %v1076, %v1080
      %v1085 = vand.u32 2147483647, %v820
      %vm1086 = vcmp.eq.f32.partialorder %v1085, 8.507059e+37
      %v1087 = vand.u32 %v820, 2147483648
      %v1088 = vor.u32 1.1754944e-38, %v1087
      %v1089 = vsel %vm1086, %v1088, %v1084
      %v1090 = vmul.f32 1.0, %v1089
      %v1091 = vrcp.pop %v821
      %v1092 = vmul.f32 %v821, %v1091
      %v1093 = vsub.f32 1.0, %v1092
      %v1094 = vmul.f32 %v1091, %v1093
      %v1095 = vadd.f32 %v1091, %v1094
      %vm1096 = vweird.f32 %v821
      %vm1097 = vweird.f32 %v1091
      %vm1098 = vmor %vm1096, %vm1097
      %v1099 = vsel %vm1098, %v1091, %v1095
      %v1100 = vand.u32 2147483647, %v821
      %vm1101 = vcmp.eq.f32.partialorder %v1100, 8.507059e+37
      %v1102 = vand.u32 %v821, 2147483648
      %v1103 = vor.u32 1.1754944e-38, %v1102
      %v1104 = vsel %vm1101, %v1103, %v1099
      %v1105 = vmul.f32 1.0, %v1104
      %v1106 = vrcp.pop %v822
      %v1107 = vmul.f32 %v822, %v1106
      %v1108 = vsub.f32 1.0, %v1107
      %v1109 = vmul.f32 %v1106, %v1108
      %v1110 = vadd.f32 %v1106, %v1109
      %vm1111 = vweird.f32 %v822
      %vm1112 = vweird.f32 %v1106
      %vm1113 = vmor %vm1111, %vm1112
      %v1114 = vsel %vm1113, %v1106, %v1110
      %v1115 = vand.u32 2147483647, %v822
      %vm1116 = vcmp.eq.f32.partialorder %v1115, 8.507059e+37
      %v1117 = vand.u32 %v822, 2147483648
      %v1118 = vor.u32 1.1754944e-38, %v1117
      %v1119 = vsel %vm1116, %v1118, %v1114
      %v1120 = vmul.f32 1.0, %v1119
      %v1121 = vrcp.pop %v823
      %v1122 = vmul.f32 %v823, %v1121
      %v1123 = vsub.f32 1.0, %v1122
      %v1124 = vmul.f32 %v1121, %v1123
      %v1125 = vadd.f32 %v1121, %v1124
      %vm1126 = vweird.f32 %v823
      %vm1127 = vweird.f32 %v1121
      %vm1128 = vmor %vm1126, %vm1127
      %v1129 = vsel %vm1128, %v1121, %v1125
      %v1130 = vand.u32 2147483647, %v823
      %vm1131 = vcmp.eq.f32.partialorder %v1130, 8.507059e+37
      %v1132 = vand.u32 %v823, 2147483648
      %v1133 = vor.u32 1.1754944e-38, %v1132
      %v1134 = vsel %vm1131, %v1133, %v1129
      %v1135 = vmul.f32 1.0, %v1134
      %v1136 = vrcp.pop %v824
      %v1137 = vmul.f32 %v824, %v1136
      %v1138 = vsub.f32 1.0, %v1137
      %v1139 = vmul.f32 %v1136, %v1138
      %v1140 = vadd.f32 %v1136, %v1139
      %vm1141 = vweird.f32 %v824
      %vm1142 = vweird.f32 %v1136
      %vm1143 = vmor %vm1141, %vm1142
      %v1144 = vsel %vm1143, %v1136, %v1140
      %v1145 = vand.u32 2147483647, %v824
      %vm1146 = vcmp.eq.f32.partialorder %v1145, 8.507059e+37
      %v1147 = vand.u32 %v824, 2147483648
      %v1148 = vor.u32 1.1754944e-38, %v1147
      %v1149 = vsel %vm1146, %v1148, %v1144
      %v1150 = vmul.f32 1.0, %v1149
      %v1151 = vrcp.pop %v825
      %v1152 = vmul.f32 %v825, %v1151
      %v1153 = vsub.f32 1.0, %v1152
      %v1154 = vmul.f32 %v1151, %v1153
      %v1155 = vadd.f32 %v1151, %v1154
      %vm1156 = vweird.f32 %v825
      %vm1157 = vweird.f32 %v1151
      %vm1158 = vmor %vm1156, %vm1157
      %v1159 = vsel %vm1158, %v1151, %v1155
      %v1160 = vand.u32 2147483647, %v825
      %vm1161 = vcmp.eq.f32.partialorder %v1160, 8.507059e+37
      %v1162 = vand.u32 %v825, 2147483648
      %v1163 = vor.u32 1.1754944e-38, %v1162
      %v1164 = vsel %vm1161, %v1163, %v1159
      %v1165 = vmul.f32 1.0, %v1164
      %v1166 = vrcp.pop %v826
      %v1167 = vmul.f32 %v826, %v1166
      %v1168 = vsub.f32 1.0, %v1167
      %v1169 = vmul.f32 %v1166, %v1168
      %v1170 = vadd.f32 %v1166, %v1169
      %vm1171 = vweird.f32 %v826
      %vm1172 = vweird.f32 %v1166
      %vm1173 = vmor %vm1171, %vm1172
      %v1174 = vsel %vm1173, %v1166, %v1170
      %v1175 = vand.u32 2147483647, %v826
      %vm1176 = vcmp.eq.f32.partialorder %v1175, 8.507059e+37
      %v1177 = vand.u32 %v826, 2147483648
      %v1178 = vor.u32 1.1754944e-38, %v1177
      %v1179 = vsel %vm1176, %v1178, %v1174
      %v1180 = vmul.f32 1.0, %v1179
      %v1181 = vrcp.pop %v827
      %v1182 = vmul.f32 %v827, %v1181
      %v1183 = vsub.f32 1.0, %v1182
      %v1184 = vmul.f32 %v1181, %v1183
      %v1185 = vadd.f32 %v1181, %v1184
      %vm1186 = vweird.f32 %v827
      %vm1187 = vweird.f32 %v1181
      %vm1188 = vmor %vm1186, %vm1187
      %v1189 = vsel %vm1188, %v1181, %v1185
      %v1190 = vand.u32 2147483647, %v827
      %vm1191 = vcmp.eq.f32.partialorder %v1190, 8.507059e+37
      %v1192 = vand.u32 %v827, 2147483648
      %v1193 = vor.u32 1.1754944e-38, %v1192
      %v1194 = vsel %vm1191, %v1193, %v1189
      %v1195 = vmul.f32 1.0, %v1194
      %v1196 = vrcp.pop %v828
      %v1197 = vmul.f32 %v828, %v1196
      %v1198 = vsub.f32 1.0, %v1197
      %v1199 = vmul.f32 %v1196, %v1198
      %v1200 = vadd.f32 %v1196, %v1199
      %vm1201 = vweird.f32 %v828
      %vm1202 = vweird.f32 %v1196
      %vm1203 = vmor %vm1201, %vm1202
      %v1204 = vsel %vm1203, %v1196, %v1200
      %v1205 = vand.u32 2147483647, %v828
      %vm1206 = vcmp.eq.f32.partialorder %v1205, 8.507059e+37
      %v1207 = vand.u32 %v828, 2147483648
      %v1208 = vor.u32 1.1754944e-38, %v1207
      %v1209 = vsel %vm1206, %v1208, %v1204
      %v1210 = vmul.f32 1.0, %v1209
      %v1211 = vrcp.pop %v829
      %v1212 = vmul.f32 %v829, %v1211
      %v1213 = vsub.f32 1.0, %v1212
      %v1214 = vmul.f32 %v1211, %v1213
      %v1215 = vadd.f32 %v1211, %v1214
      %vm1216 = vweird.f32 %v829
      %vm1217 = vweird.f32 %v1211
      %vm1218 = vmor %vm1216, %vm1217
      %v1219 = vsel %vm1218, %v1211, %v1215
      %v1220 = vand.u32 2147483647, %v829
      %vm1221 = vcmp.eq.f32.partialorder %v1220, 8.507059e+37
      %v1222 = vand.u32 %v829, 2147483648
      %v1223 = vor.u32 1.1754944e-38, %v1222
      %v1224 = vsel %vm1221, %v1223, %v1219
      %v1225 = vmul.f32 1.0, %v1224
      %v1226 = vrcp.pop %v830
      %v1227 = vmul.f32 %v830, %v1226
      %v1228 = vsub.f32 1.0, %v1227
      %v1229 = vmul.f32 %v1226, %v1228
      %v1230 = vadd.f32 %v1226, %v1229
      %vm1231 = vweird.f32 %v830
      %vm1232 = vweird.f32 %v1226
      %vm1233 = vmor %vm1231, %vm1232
      %v1234 = vsel %vm1233, %v1226, %v1230
      %v1235 = vand.u32 2147483647, %v830
      %vm1236 = vcmp.eq.f32.partialorder %v1235, 8.507059e+37
      %v1237 = vand.u32 %v830, 2147483648
      %v1238 = vor.u32 1.1754944e-38, %v1237
      %v1239 = vsel %vm1236, %v1238, %v1234
      %v1240 = vmul.f32 1.0, %v1239
      %v1241 = vrcp.pop %v831
      %v1242 = vmul.f32 %v831, %v1241
      %v1243 = vsub.f32 1.0, %v1242
      %v1244 = vmul.f32 %v1241, %v1243
      %v1245 = vadd.f32 %v1241, %v1244
      %vm1246 = vweird.f32 %v831
      %vm1247 = vweird.f32 %v1241
      %vm1248 = vmor %vm1246, %vm1247
      %v1249 = vsel %vm1248, %v1241, %v1245
      %v1250 = vand.u32 2147483647, %v831
      %vm1251 = vcmp.eq.f32.partialorder %v1250, 8.507059e+37
      %v1252 = vand.u32 %v831, 2147483648
      %v1253 = vor.u32 1.1754944e-38, %v1252
      %v1254 = vsel %vm1251, %v1253, %v1249
      %v1255 = vmul.f32 1.0, %v1254
      %v1256 = vrcp.pop %v832
      %v1257 = vmul.f32 %v832, %v1256
      %v1258 = vsub.f32 1.0, %v1257
      %v1259 = vmul.f32 %v1256, %v1258
      %v1260 = vadd.f32 %v1256, %v1259
      %vm1261 = vweird.f32 %v832
      %vm1262 = vweird.f32 %v1256
      %vm1263 = vmor %vm1261, %vm1262
      %v1264 = vsel %vm1263, %v1256, %v1260
      %v1265 = vand.u32 2147483647, %v832
      %vm1266 = vcmp.eq.f32.partialorder %v1265, 8.507059e+37
      %v1267 = vand.u32 %v832, 2147483648
      %v1268 = vor.u32 1.1754944e-38, %v1267
      %v1269 = vsel %vm1266, %v1268, %v1264
      %v1270 = vmul.f32 1.0, %v1269
      %v1271 = vrcp.pop %v833
      %v1272 = vmul.f32 %v833, %v1271
      %v1273 = vsub.f32 1.0, %v1272
      %v1274 = vmul.f32 %v1271, %v1273
      %v1275 = vadd.f32 %v1271, %v1274
      %vm1276 = vweird.f32 %v833
      %vm1277 = vweird.f32 %v1271
      %vm1278 = vmor %vm1276, %vm1277
      %v1279 = vsel %vm1278, %v1271, %v1275
      %v1280 = vand.u32 2147483647, %v833
      %vm1281 = vcmp.eq.f32.partialorder %v1280, 8.507059e+37
      %v1282 = vand.u32 %v833, 2147483648
      %v1283 = vor.u32 1.1754944e-38, %v1282
      %v1284 = vsel %vm1281, %v1283, %v1279
      %v1285 = vmul.f32 1.0, %v1284
      %v1286 = vrcp.pop %v834
      %v1287 = vmul.f32 %v834, %v1286
      %v1288 = vsub.f32 1.0, %v1287
      %v1289 = vmul.f32 %v1286, %v1288
      %v1290 = vadd.f32 %v1286, %v1289
      %vm1291 = vweird.f32 %v834
      %vm1292 = vweird.f32 %v1286
      %vm1293 = vmor %vm1291, %vm1292
      %v1294 = vsel %vm1293, %v1286, %v1290
      %v1295 = vand.u32 2147483647, %v834
      %vm1296 = vcmp.eq.f32.partialorder %v1295, 8.507059e+37
      %v1297 = vand.u32 %v834, 2147483648
      %v1298 = vor.u32 1.1754944e-38, %v1297
      %v1299 = vsel %vm1296, %v1298, %v1294
      %v1300 = vmul.f32 1.0, %v1299
      %v1301 = vrcp.pop %v835
      %v1302 = vmul.f32 %v835, %v1301
      %v1303 = vsub.f32 1.0, %v1302
      %v1304 = vmul.f32 %v1301, %v1303
      %v1305 = vadd.f32 %v1301, %v1304
      %vm1306 = vweird.f32 %v835
      %vm1307 = vweird.f32 %v1301
      %vm1308 = vmor %vm1306, %vm1307
      %v1309 = vsel %vm1308, %v1301, %v1305
      %v1310 = vand.u32 2147483647, %v835
      %vm1311 = vcmp.eq.f32.partialorder %v1310, 8.507059e+37
      %v1312 = vand.u32 %v835, 2147483648
      %v1313 = vor.u32 1.1754944e-38, %v1312
      %v1314 = vsel %vm1311, %v1313, %v1309
      %v1315 = vmul.f32 1.0, %v1314
      %v1316 = vmul.f32 %v676, %v850
      %v1317 = vmul.f32 %v677, %v865
      %v1318 = vmul.f32 %v678, %v880
      %v1319 = vmul.f32 %v679, %v895
      %v1320 = vmul.f32 %v680, %v910
      %v1321 = vmul.f32 %v681, %v925
      %v1322 = vmul.f32 %v682, %v940
      %v1323 = vmul.f32 %v683, %v955
      %v1324 = vmul.f32 %v684, %v970
      %v1325 = vmul.f32 %v685, %v985
      %v1326 = vmul.f32 %v686, %v1000
      %v1327 = vmul.f32 %v687, %v1015
      %v1328 = vmul.f32 %v688, %v1030
      %v1329 = vmul.f32 %v689, %v1045
      %v1330 = vmul.f32 %v690, %v1060
      %v1331 = vmul.f32 %v691, %v1075
      %v1332 = vmul.f32 %v692, %v1090
      %v1333 = vmul.f32 %v693, %v1105
      %v1334 = vmul.f32 %v694, %v1120
      %v1335 = vmul.f32 %v695, %v1135
      %v1336 = vmul.f32 %v696, %v1150
      %v1337 = vmul.f32 %v697, %v1165
      %v1338 = vmul.f32 %v698, %v1180
      %v1339 = vmul.f32 %v699, %v1195
      %v1340 = vmul.f32 %v700, %v1210
      %v1341 = vmul.f32 %v701, %v1225
      %v1342 = vmul.f32 %v702, %v1240
      %v1343 = vmul.f32 %v703, %v1255
      %v1344 = vmul.f32 %v704, %v1270
      %v1345 = vmul.f32 %v705, %v1285
      %v1346 = vmul.f32 %v706, %v1300
      %v1347 = vmul.f32 %v707, %v1315
      %v1348 = vld [vmem:[%s6] sm:$0x1]
      %1349 = vst.msk [vmem:[#allocation2] sm:$0xff] %vm316, 0.0
      %1350 = vst.msk [vmem:[#allocation2 + $0x8] sm:$0xff] %vm316, 0.0
      %vm1351 = vcmask 25600
      %1352 = vst.msk [vmem:[#allocation2 + $0x10] sm:$0x3] %vm1351, 0.0
      %1353 = vst.msk [vmem:[#allocation2 + $0x18] sm:$0xff] %vm316, 0.0
      %1354 = vst.msk [vmem:[#allocation2 + $0x20] sm:$0xff] %vm316, 0.0
      %1355 = vst.msk [vmem:[#allocation2 + $0x28] sm:$0x3] %vm1351, 0.0
      %1356 = vst.msk [vmem:[#allocation2 + $0x30] sm:$0xff] %vm316, 0.0
      %1357 = vst.msk [vmem:[#allocation2 + $0x38] sm:$0xff] %vm316, 0.0
      %1358 = vst.msk [vmem:[#allocation2 + $0x40] sm:$0x3] %vm1351, 0.0
      %1359 = vst.msk [vmem:[#allocation2 + $0x48] sm:$0xff] %vm316, 0.0
      %1360 = vst.msk [vmem:[#allocation2 + $0x50] sm:$0xff] %vm316, 0.0
      %1361 = vst.msk [vmem:[#allocation2 + $0x58] sm:$0x3] %vm1351, 0.0
      %1362 = vst.msk [vmem:[#allocation2 + $0x60] sm:$0xff] %vm316, 0.0
      %1363 = vst.msk [vmem:[#allocation2 + $0x68] sm:$0xff] %vm316, 0.0
      %1364 = vst.msk [vmem:[#allocation2 + $0x70] sm:$0x3] %vm1351, 0.0
      %1365 = vst.msk [vmem:[#allocation2 + $0x78] sm:$0xff] %vm316, 0.0
      %1366 = vst.msk [vmem:[#allocation2 + $0x80] sm:$0xff] %vm316, 0.0
      %1367 = vst.msk [vmem:[#allocation2 + $0x88] sm:$0x3] %vm1351, 0.0
      %1368 = vst.msk [vmem:[#allocation2 + $0x90] sm:$0xff] %vm316, 0.0
      %1369 = vst.msk [vmem:[#allocation2 + $0x98] sm:$0xff] %vm316, 0.0
      %1370 = vst.msk [vmem:[#allocation2 + $0xa0] sm:$0x3] %vm1351, 0.0
      %1371 = vst.msk [vmem:[#allocation2 + $0xa8] sm:$0xff] %vm316, 0.0
      %1372 = vst.msk [vmem:[#allocation2 + $0xb0] sm:$0xff] %vm316, 0.0
      %1373 = vst.msk [vmem:[#allocation2 + $0xb8] sm:$0x3] %vm1351, 0.0
      %1374 = vst.msk [vmem:[#allocation2 + $0xc0] sm:$0xff] %vm316, 0.0
      %1375 = vst.msk [vmem:[#allocation2 + $0xc8] sm:$0xff] %vm316, 0.0
      %1376 = vst.msk [vmem:[#allocation2 + $0xd0] sm:$0x3] %vm1351, 0.0
      %1377 = vst.msk [vmem:[#allocation2 + $0xd8] sm:$0xff] %vm316, 0.0
      %1378 = vst.msk [vmem:[#allocation2 + $0xe0] sm:$0xff] %vm316, 0.0
      %1379 = vst.msk [vmem:[#allocation2 + $0xe8] sm:$0x3] %vm1351, 0.0
      %1380 = vst.msk [vmem:[#allocation2 + $0xf0] sm:$0xff] %vm316, 0.0
      %1381 = vst.msk [vmem:[#allocation2 + $0xf8] sm:$0xff] %vm316, 0.0
      %1382 = vst.msk [vmem:[#allocation2 + $0x100] sm:$0x3] %vm1351, 0.0
      %1383 = vst.msk [vmem:[#allocation2 + $0x108] sm:$0xff] %vm316, 0.0
      %1384 = vst.msk [vmem:[#allocation2 + $0x110] sm:$0xff] %vm316, 0.0
      %1385 = vst.msk [vmem:[#allocation2 + $0x118] sm:$0x3] %vm1351, 0.0
      %1386 = vst.msk [vmem:[#allocation2 + $0x120] sm:$0xff] %vm316, 0.0
      %1387 = vst.msk [vmem:[#allocation2 + $0x128] sm:$0xff] %vm316, 0.0
      %1388 = vst.msk [vmem:[#allocation2 + $0x130] sm:$0x3] %vm1351, 0.0
      %1389 = vst.msk [vmem:[#allocation2 + $0x138] sm:$0xff] %vm316, 0.0
      %1390 = vst.msk [vmem:[#allocation2 + $0x140] sm:$0xff] %vm316, 0.0
      %1391 = vst.msk [vmem:[#allocation2 + $0x148] sm:$0x3] %vm1351, 0.0
      %1392 = vst.msk [vmem:[#allocation2 + $0x150] sm:$0xff] %vm316, 0.0
      %1393 = vst.msk [vmem:[#allocation2 + $0x158] sm:$0xff] %vm316, 0.0
      %1394 = vst.msk [vmem:[#allocation2 + $0x160] sm:$0x3] %vm1351, 0.0
      %1395 = vst.msk [vmem:[#allocation2 + $0x168] sm:$0xff] %vm316, 0.0
      %1396 = vst.msk [vmem:[#allocation2 + $0x170] sm:$0xff] %vm316, 0.0
      %1397 = vst.msk [vmem:[#allocation2 + $0x178] sm:$0x3] %vm1351, 0.0
      %1398 = vst.msk [vmem:[#allocation2 + $0x180] sm:$0xff] %vm316, 0.0
      %1399 = vst.msk [vmem:[#allocation2 + $0x188] sm:$0xff] %vm316, 0.0
      %1400 = vst.msk [vmem:[#allocation2 + $0x190] sm:$0x3] %vm1351, 0.0
      %1401 = vst.msk [vmem:[#allocation2 + $0x198] sm:$0xff] %vm316, 0.0
      %1402 = vst.msk [vmem:[#allocation2 + $0x1a0] sm:$0xff] %vm316, 0.0
      %1403 = vst.msk [vmem:[#allocation2 + $0x1a8] sm:$0x3] %vm1351, 0.0
      %s1404 = scalar_lea.vmem [#allocation2], 24
      %1405 = vst.msk [vmem:[%s1404 + $0x1] sm:$0xff] %vm316, %v1316
      %1406 = vst.msk [vmem:[%s1404 + $0x9] sm:$0xff] %vm316, %v1317
      %1407 = vst.msk [vmem:[%s1404 + $0x19] sm:$0xff] %vm316, %v1318
      %1408 = vst.msk [vmem:[%s1404 + $0x21] sm:$0xff] %vm316, %v1319
      %1409 = vst.msk [vmem:[%s1404 + $0x31] sm:$0xff] %vm316, %v1320
      %1410 = vst.msk [vmem:[%s1404 + $0x39] sm:$0xff] %vm316, %v1321
      %1411 = vst.msk [vmem:[%s1404 + $0x49] sm:$0xff] %vm316, %v1322
      %1412 = vst.msk [vmem:[%s1404 + $0x51] sm:$0xff] %vm316, %v1323
      %1413 = vst.msk [vmem:[%s1404 + $0x61] sm:$0xff] %vm316, %v1324
      %1414 = vst.msk [vmem:[%s1404 + $0x69] sm:$0xff] %vm316, %v1325
      %1415 = vst.msk [vmem:[%s1404 + $0x79] sm:$0xff] %vm316, %v1326
      %1416 = vst.msk [vmem:[%s1404 + $0x81] sm:$0xff] %vm316, %v1327
      %1417 = vst.msk [vmem:[%s1404 + $0x91] sm:$0xff] %vm316, %v1328
      %1418 = vst.msk [vmem:[%s1404 + $0x99] sm:$0xff] %vm316, %v1329
      %1419 = vst.msk [vmem:[%s1404 + $0xa9] sm:$0xff] %vm316, %v1330
      %1420 = vst.msk [vmem:[%s1404 + $0xb1] sm:$0xff] %vm316, %v1331
      %1421 = vst.msk [vmem:[%s1404 + $0xc1] sm:$0xff] %vm316, %v1332
      %1422 = vst.msk [vmem:[%s1404 + $0xc9] sm:$0xff] %vm316, %v1333
      %1423 = vst.msk [vmem:[%s1404 + $0xd9] sm:$0xff] %vm316, %v1334
      %1424 = vst.msk [vmem:[%s1404 + $0xe1] sm:$0xff] %vm316, %v1335
      %1425 = vst.msk [vmem:[%s1404 + $0xf1] sm:$0xff] %vm316, %v1336
      %1426 = vst.msk [vmem:[%s1404 + $0xf9] sm:$0xff] %vm316, %v1337
      %1427 = vst.msk [vmem:[%s1404 + $0x109] sm:$0xff] %vm316, %v1338
      %1428 = vst.msk [vmem:[%s1404 + $0x111] sm:$0xff] %vm316, %v1339
      %1429 = vst.msk [vmem:[%s1404 + $0x121] sm:$0xff] %vm316, %v1340
      %1430 = vst.msk [vmem:[%s1404 + $0x129] sm:$0xff] %vm316, %v1341
      %1431 = vst.msk [vmem:[%s1404 + $0x139] sm:$0xff] %vm316, %v1342
      %1432 = vst.msk [vmem:[%s1404 + $0x141] sm:$0xff] %vm316, %v1343
      %1433 = vst.msk [vmem:[%s1404 + $0x151] sm:$0xff] %vm316, %v1344
      %1434 = vst.msk [vmem:[%s1404 + $0x159] sm:$0xff] %vm316, %v1345
      %1435 = vst.msk [vmem:[%s1404 + $0x169] sm:$0xff] %vm316, %v1346
      %1436 = vst.msk [vmem:[%s1404 + $0x171] sm:$0xff] %vm316, %v1347
      %v1437 = vld [vmem:[#allocation2] sm:$0xff]
      %v1438 = vld [vmem:[#allocation2 + $0x8] sm:$0xff]
      %v1439 = vld [vmem:[#allocation2 + $0x18] sm:$0xff]
      %v1440 = vld [vmem:[#allocation2 + $0x20] sm:$0xff]
      %v1441 = vld [vmem:[#allocation2 + $0x30] sm:$0xff]
      %v1442 = vld [vmem:[#allocation2 + $0x38] sm:$0xff]
      %v1443 = vld [vmem:[#allocation2 + $0x48] sm:$0xff]
      %v1444 = vld [vmem:[#allocation2 + $0x50] sm:$0xff]
      %v1445 = vld [vmem:[#allocation2 + $0x60] sm:$0xff]
      %v1446 = vld [vmem:[#allocation2 + $0x68] sm:$0xff]
      %v1447 = vld [vmem:[#allocation2 + $0x78] sm:$0xff]
      %v1448 = vld [vmem:[#allocation2 + $0x80] sm:$0xff]
      %v1449 = vld [vmem:[#allocation2 + $0x90] sm:$0xff]
      %v1450 = vld [vmem:[#allocation2 + $0x98] sm:$0xff]
      %v1451 = vld [vmem:[#allocation2 + $0xa8] sm:$0xff]
      %v1452 = vld [vmem:[#allocation2 + $0xb0] sm:$0xff]
      %v1453 = vld [vmem:[#allocation2 + $0xc0] sm:$0xff]
      %v1454 = vld [vmem:[#allocation2 + $0xc8] sm:$0xff]
      %v1455 = vld [vmem:[#allocation2 + $0xd8] sm:$0xff]
      %v1456 = vld [vmem:[#allocation2 + $0xe0] sm:$0xff]
      %v1457 = vld [vmem:[#allocation2 + $0xf0] sm:$0xff]
      %v1458 = vld [vmem:[#allocation2 + $0xf8] sm:$0xff]
      %v1459 = vld [vmem:[#allocation2 + $0x108] sm:$0xff]
      %v1460 = vld [vmem:[#allocation2 + $0x110] sm:$0xff]
      %v1461 = vld [vmem:[#allocation2 + $0x120] sm:$0xff]
      %v1462 = vld [vmem:[#allocation2 + $0x128] sm:$0xff]
      %v1463 = vld [vmem:[#allocation2 + $0x138] sm:$0xff]
      %v1464 = vld [vmem:[#allocation2 + $0x140] sm:$0xff]
      %v1465 = vld [vmem:[#allocation2 + $0x150] sm:$0xff]
      %v1466 = vld [vmem:[#allocation2 + $0x158] sm:$0xff]
      %v1467 = vld [vmem:[#allocation2 + $0x168] sm:$0xff]
      %v1468 = vld [vmem:[#allocation2 + $0x170] sm:$0xff]
      %v1469 = vld [vmem:[#allocation2 + $0x1] sm:$0xff]
      %v1470 = vld [vmem:[#allocation2 + $0x9] sm:$0xff]
      %v1471 = vld [vmem:[#allocation2 + $0x19] sm:$0xff]
      %v1472 = vld [vmem:[#allocation2 + $0x21] sm:$0xff]
      %v1473 = vld [vmem:[#allocation2 + $0x31] sm:$0xff]
      %v1474 = vld [vmem:[#allocation2 + $0x39] sm:$0xff]
      %v1475 = vld [vmem:[#allocation2 + $0x49] sm:$0xff]
      %v1476 = vld [vmem:[#allocation2 + $0x51] sm:$0xff]
      %v1477 = vld [vmem:[#allocation2 + $0x61] sm:$0xff]
      %v1478 = vld [vmem:[#allocation2 + $0x69] sm:$0xff]
      %v1479 = vld [vmem:[#allocation2 + $0x79] sm:$0xff]
      %v1480 = vld [vmem:[#allocation2 + $0x81] sm:$0xff]
      %v1481 = vld [vmem:[#allocation2 + $0x91] sm:$0xff]
      %v1482 = vld [vmem:[#allocation2 + $0x99] sm:$0xff]
      %v1483 = vld [vmem:[#allocation2 + $0xa9] sm:$0xff]
      %v1484 = vld [vmem:[#allocation2 + $0xb1] sm:$0xff]
      %v1485 = vld [vmem:[#allocation2 + $0xc1] sm:$0xff]
      %v1486 = vld [vmem:[#allocation2 + $0xc9] sm:$0xff]
      %v1487 = vld [vmem:[#allocation2 + $0xd9] sm:$0xff]
      %v1488 = vld [vmem:[#allocation2 + $0xe1] sm:$0xff]
      %v1489 = vld [vmem:[#allocation2 + $0xf1] sm:$0xff]
      %v1490 = vld [vmem:[#allocation2 + $0xf9] sm:$0xff]
      %v1491 = vld [vmem:[#allocation2 + $0x109] sm:$0xff]
      %v1492 = vld [vmem:[#allocation2 + $0x111] sm:$0xff]
      %v1493 = vld [vmem:[#allocation2 + $0x121] sm:$0xff]
      %v1494 = vld [vmem:[#allocation2 + $0x129] sm:$0xff]
      %v1495 = vld [vmem:[#allocation2 + $0x139] sm:$0xff]
      %v1496 = vld [vmem:[#allocation2 + $0x141] sm:$0xff]
      %v1497 = vld [vmem:[#allocation2 + $0x151] sm:$0xff]
      %v1498 = vld [vmem:[#allocation2 + $0x159] sm:$0xff]
      %v1499 = vld [vmem:[#allocation2 + $0x169] sm:$0xff]
      %v1500 = vld [vmem:[#allocation2 + $0x171] sm:$0xff]
      %v1501 = vld [vmem:[#allocation2 + $0x2] sm:$0xff]
      %v1502 = vld [vmem:[#allocation2 + $0xa] sm:$0xff]
      %v1503 = vld [vmem:[#allocation2 + $0x1a] sm:$0xff]
      %v1504 = vld [vmem:[#allocation2 + $0x22] sm:$0xff]
      %v1505 = vld [vmem:[#allocation2 + $0x32] sm:$0xff]
      %v1506 = vld [vmem:[#allocation2 + $0x3a] sm:$0xff]
      %v1507 = vld [vmem:[#allocation2 + $0x4a] sm:$0xff]
      %v1508 = vld [vmem:[#allocation2 + $0x52] sm:$0xff]
      %v1509 = vld [vmem:[#allocation2 + $0x62] sm:$0xff]
      %v1510 = vld [vmem:[#allocation2 + $0x6a] sm:$0xff]
      %v1511 = vld [vmem:[#allocation2 + $0x7a] sm:$0xff]
      %v1512 = vld [vmem:[#allocation2 + $0x82] sm:$0xff]
      %v1513 = vld [vmem:[#allocation2 + $0x92] sm:$0xff]
      %v1514 = vld [vmem:[#allocation2 + $0x9a] sm:$0xff]
      %v1515 = vld [vmem:[#allocation2 + $0xaa] sm:$0xff]
      %v1516 = vld [vmem:[#allocation2 + $0xb2] sm:$0xff]
      %v1517 = vld [vmem:[#allocation2 + $0xc2] sm:$0xff]
      %v1518 = vld [vmem:[#allocation2 + $0xca] sm:$0xff]
      %v1519 = vld [vmem:[#allocation2 + $0xda] sm:$0xff]
      %v1520 = vld [vmem:[#allocation2 + $0xe2] sm:$0xff]
      %v1521 = vld [vmem:[#allocation2 + $0xf2] sm:$0xff]
      %v1522 = vld [vmem:[#allocation2 + $0xfa] sm:$0xff]
      %v1523 = vld [vmem:[#allocation2 + $0x10a] sm:$0xff]
      %v1524 = vld [vmem:[#allocation2 + $0x112] sm:$0xff]
      %v1525 = vld [vmem:[#allocation2 + $0x122] sm:$0xff]
      %v1526 = vld [vmem:[#allocation2 + $0x12a] sm:$0xff]
      %v1527 = vld [vmem:[#allocation2 + $0x13a] sm:$0xff]
      %v1528 = vld [vmem:[#allocation2 + $0x142] sm:$0xff]
      %v1529 = vld [vmem:[#allocation2 + $0x152] sm:$0xff]
      %v1530 = vld [vmem:[#allocation2 + $0x15a] sm:$0xff]
      %v1531 = vld [vmem:[#allocation2 + $0x16a] sm:$0xff]
      %v1532 = vld [vmem:[#allocation2 + $0x172] sm:$0xff]
      %v1533 = vld [vmem:[%s1404] sm:$0xff]
      %v1534 = vld [vmem:[%s1404 + $0x8] sm:$0xff]
      %v1535 = vld [vmem:[%s1404 + $0x18] sm:$0xff]
      %v1536 = vld [vmem:[%s1404 + $0x20] sm:$0xff]
      %v1537 = vld [vmem:[%s1404 + $0x30] sm:$0xff]
      %v1538 = vld [vmem:[%s1404 + $0x38] sm:$0xff]
      %v1539 = vld [vmem:[%s1404 + $0x48] sm:$0xff]
      %v1540 = vld [vmem:[%s1404 + $0x50] sm:$0xff]
      %v1541 = vld [vmem:[%s1404 + $0x60] sm:$0xff]
      %v1542 = vld [vmem:[%s1404 + $0x68] sm:$0xff]
      %v1543 = vld [vmem:[%s1404 + $0x78] sm:$0xff]
      %v1544 = vld [vmem:[%s1404 + $0x80] sm:$0xff]
      %v1545 = vld [vmem:[%s1404 + $0x90] sm:$0xff]
      %v1546 = vld [vmem:[%s1404 + $0x98] sm:$0xff]
      %v1547 = vld [vmem:[%s1404 + $0xa8] sm:$0xff]
      %v1548 = vld [vmem:[%s1404 + $0xb0] sm:$0xff]
      %v1549 = vld [vmem:[%s1404 + $0xc0] sm:$0xff]
      %v1550 = vld [vmem:[%s1404 + $0xc8] sm:$0xff]
      %v1551 = vld [vmem:[%s1404 + $0xd8] sm:$0xff]
      %v1552 = vld [vmem:[%s1404 + $0xe0] sm:$0xff]
      %v1553 = vld [vmem:[%s1404 + $0xf0] sm:$0xff]
      %v1554 = vld [vmem:[%s1404 + $0xf8] sm:$0xff]
      %v1555 = vld [vmem:[%s1404 + $0x108] sm:$0xff]
      %v1556 = vld [vmem:[%s1404 + $0x110] sm:$0xff]
      %v1557 = vld [vmem:[%s1404 + $0x120] sm:$0xff]
      %v1558 = vld [vmem:[%s1404 + $0x128] sm:$0xff]
      %v1559 = vld [vmem:[%s1404 + $0x138] sm:$0xff]
      %v1560 = vld [vmem:[%s1404 + $0x140] sm:$0xff]
      %v1561 = vld [vmem:[%s1404 + $0x150] sm:$0xff]
      %v1562 = vld [vmem:[%s1404 + $0x158] sm:$0xff]
      %v1563 = vld [vmem:[%s1404 + $0x168] sm:$0xff]
      %v1564 = vld [vmem:[%s1404 + $0x170] sm:$0xff]
      %v1565 = vld [vmem:[%s1404 + $0x1] sm:$0xff]
      %v1566 = vld [vmem:[%s1404 + $0x9] sm:$0xff]
      %v1567 = vld [vmem:[%s1404 + $0x19] sm:$0xff]
      %v1568 = vld [vmem:[%s1404 + $0x21] sm:$0xff]
      %v1569 = vld [vmem:[%s1404 + $0x31] sm:$0xff]
      %v1570 = vld [vmem:[%s1404 + $0x39] sm:$0xff]
      %v1571 = vld [vmem:[%s1404 + $0x49] sm:$0xff]
      %v1572 = vld [vmem:[%s1404 + $0x51] sm:$0xff]
      %v1573 = vld [vmem:[%s1404 + $0x61] sm:$0xff]
      %v1574 = vld [vmem:[%s1404 + $0x69] sm:$0xff]
      %v1575 = vld [vmem:[%s1404 + $0x79] sm:$0xff]
      %v1576 = vld [vmem:[%s1404 + $0x81] sm:$0xff]
      %v1577 = vld [vmem:[%s1404 + $0x91] sm:$0xff]
      %v1578 = vld [vmem:[%s1404 + $0x99] sm:$0xff]
      %v1579 = vld [vmem:[%s1404 + $0xa9] sm:$0xff]
      %v1580 = vld [vmem:[%s1404 + $0xb1] sm:$0xff]
      %v1581 = vld [vmem:[%s1404 + $0xc1] sm:$0xff]
      %v1582 = vld [vmem:[%s1404 + $0xc9] sm:$0xff]
      %v1583 = vld [vmem:[%s1404 + $0xd9] sm:$0xff]
      %v1584 = vld [vmem:[%s1404 + $0xe1] sm:$0xff]
      %v1585 = vld [vmem:[%s1404 + $0xf1] sm:$0xff]
      %v1586 = vld [vmem:[%s1404 + $0xf9] sm:$0xff]
      %v1587 = vld [vmem:[%s1404 + $0x109] sm:$0xff]
      %v1588 = vld [vmem:[%s1404 + $0x111] sm:$0xff]
      %v1589 = vld [vmem:[%s1404 + $0x121] sm:$0xff]
      %v1590 = vld [vmem:[%s1404 + $0x129] sm:$0xff]
      %v1591 = vld [vmem:[%s1404 + $0x139] sm:$0xff]
      %v1592 = vld [vmem:[%s1404 + $0x141] sm:$0xff]
      %v1593 = vld [vmem:[%s1404 + $0x151] sm:$0xff]
      %v1594 = vld [vmem:[%s1404 + $0x159] sm:$0xff]
      %v1595 = vld [vmem:[%s1404 + $0x169] sm:$0xff]
      %v1596 = vld [vmem:[%s1404 + $0x171] sm:$0xff]
      %v1597 = vld [vmem:[%s1404 + $0x2] sm:$0xff]
      %v1598 = vld [vmem:[%s1404 + $0xa] sm:$0xff]
      %v1599 = vld [vmem:[%s1404 + $0x1a] sm:$0xff]
      %v1600 = vld [vmem:[%s1404 + $0x22] sm:$0xff]
      %v1601 = vld [vmem:[%s1404 + $0x32] sm:$0xff]
      %v1602 = vld [vmem:[%s1404 + $0x3a] sm:$0xff]
      %v1603 = vld [vmem:[%s1404 + $0x4a] sm:$0xff]
      %v1604 = vld [vmem:[%s1404 + $0x52] sm:$0xff]
      %v1605 = vld [vmem:[%s1404 + $0x62] sm:$0xff]
      %v1606 = vld [vmem:[%s1404 + $0x6a] sm:$0xff]
      %v1607 = vld [vmem:[%s1404 + $0x7a] sm:$0xff]
      %v1608 = vld [vmem:[%s1404 + $0x82] sm:$0xff]
      %v1609 = vld [vmem:[%s1404 + $0x92] sm:$0xff]
      %v1610 = vld [vmem:[%s1404 + $0x9a] sm:$0xff]
      %v1611 = vld [vmem:[%s1404 + $0xaa] sm:$0xff]
      %v1612 = vld [vmem:[%s1404 + $0xb2] sm:$0xff]
      %v1613 = vld [vmem:[%s1404 + $0xc2] sm:$0xff]
      %v1614 = vld [vmem:[%s1404 + $0xca] sm:$0xff]
      %v1615 = vld [vmem:[%s1404 + $0xda] sm:$0xff]
      %v1616 = vld [vmem:[%s1404 + $0xe2] sm:$0xff]
      %v1617 = vld [vmem:[%s1404 + $0xf2] sm:$0xff]
      %v1618 = vld [vmem:[%s1404 + $0xfa] sm:$0xff]
      %v1619 = vld [vmem:[%s1404 + $0x10a] sm:$0xff]
      %v1620 = vld [vmem:[%s1404 + $0x112] sm:$0xff]
      %v1621 = vld [vmem:[%s1404 + $0x122] sm:$0xff]
      %v1622 = vld [vmem:[%s1404 + $0x12a] sm:$0xff]
      %v1623 = vld [vmem:[%s1404 + $0x13a] sm:$0xff]
      %v1624 = vld [vmem:[%s1404 + $0x142] sm:$0xff]
      %v1625 = vld [vmem:[%s1404 + $0x152] sm:$0xff]
      %v1626 = vld [vmem:[%s1404 + $0x15a] sm:$0xff]
      %v1627 = vld [vmem:[%s1404 + $0x16a] sm:$0xff]
      %v1628 = vld [vmem:[%s1404 + $0x172] sm:$0xff]
      %s1629 = scalar_lea.vmem [#allocation2], 48
      %v1630 = vld [vmem:[%s1629] sm:$0xff]
      %v1631 = vld [vmem:[%s1629 + $0x8] sm:$0xff]
      %v1632 = vld [vmem:[%s1629 + $0x18] sm:$0xff]
      %v1633 = vld [vmem:[%s1629 + $0x20] sm:$0xff]
      %v1634 = vld [vmem:[%s1629 + $0x30] sm:$0xff]
      %v1635 = vld [vmem:[%s1629 + $0x38] sm:$0xff]
      %v1636 = vld [vmem:[%s1629 + $0x48] sm:$0xff]
      %v1637 = vld [vmem:[%s1629 + $0x50] sm:$0xff]
      %v1638 = vld [vmem:[%s1629 + $0x60] sm:$0xff]
      %v1639 = vld [vmem:[%s1629 + $0x68] sm:$0xff]
      %v1640 = vld [vmem:[%s1629 + $0x78] sm:$0xff]
      %v1641 = vld [vmem:[%s1629 + $0x80] sm:$0xff]
      %v1642 = vld [vmem:[%s1629 + $0x90] sm:$0xff]
      %v1643 = vld [vmem:[%s1629 + $0x98] sm:$0xff]
      %v1644 = vld [vmem:[%s1629 + $0xa8] sm:$0xff]
      %v1645 = vld [vmem:[%s1629 + $0xb0] sm:$0xff]
      %v1646 = vld [vmem:[%s1629 + $0xc0] sm:$0xff]
      %v1647 = vld [vmem:[%s1629 + $0xc8] sm:$0xff]
      %v1648 = vld [vmem:[%s1629 + $0xd8] sm:$0xff]
      %v1649 = vld [vmem:[%s1629 + $0xe0] sm:$0xff]
      %v1650 = vld [vmem:[%s1629 + $0xf0] sm:$0xff]
      %v1651 = vld [vmem:[%s1629 + $0xf8] sm:$0xff]
      %v1652 = vld [vmem:[%s1629 + $0x108] sm:$0xff]
      %v1653 = vld [vmem:[%s1629 + $0x110] sm:$0xff]
      %v1654 = vld [vmem:[%s1629 + $0x120] sm:$0xff]
      %v1655 = vld [vmem:[%s1629 + $0x128] sm:$0xff]
      %v1656 = vld [vmem:[%s1629 + $0x138] sm:$0xff]
      %v1657 = vld [vmem:[%s1629 + $0x140] sm:$0xff]
      %v1658 = vld [vmem:[%s1629 + $0x150] sm:$0xff]
      %v1659 = vld [vmem:[%s1629 + $0x158] sm:$0xff]
      %v1660 = vld [vmem:[%s1629 + $0x168] sm:$0xff]
      %v1661 = vld [vmem:[%s1629 + $0x170] sm:$0xff]
      %v1662 = vld [vmem:[%s1629 + $0x1] sm:$0xff]
      %v1663 = vld [vmem:[%s1629 + $0x9] sm:$0xff]
      %v1664 = vld [vmem:[%s1629 + $0x19] sm:$0xff]
      %v1665 = vld [vmem:[%s1629 + $0x21] sm:$0xff]
      %v1666 = vld [vmem:[%s1629 + $0x31] sm:$0xff]
      %v1667 = vld [vmem:[%s1629 + $0x39] sm:$0xff]
      %v1668 = vld [vmem:[%s1629 + $0x49] sm:$0xff]
      %v1669 = vld [vmem:[%s1629 + $0x51] sm:$0xff]
      %v1670 = vld [vmem:[%s1629 + $0x61] sm:$0xff]
      %v1671 = vld [vmem:[%s1629 + $0x69] sm:$0xff]
      %v1672 = vld [vmem:[%s1629 + $0x79] sm:$0xff]
      %v1673 = vld [vmem:[%s1629 + $0x81] sm:$0xff]
      %v1674 = vld [vmem:[%s1629 + $0x91] sm:$0xff]
      %v1675 = vld [vmem:[%s1629 + $0x99] sm:$0xff]
      %v1676 = vld [vmem:[%s1629 + $0xa9] sm:$0xff]
      %v1677 = vld [vmem:[%s1629 + $0xb1] sm:$0xff]
      %v1678 = vld [vmem:[%s1629 + $0xc1] sm:$0xff]
      %v1679 = vld [vmem:[%s1629 + $0xc9] sm:$0xff]
      %v1680 = vld [vmem:[%s1629 + $0xd9] sm:$0xff]
      %v1681 = vld [vmem:[%s1629 + $0xe1] sm:$0xff]
      %v1682 = vld [vmem:[%s1629 + $0xf1] sm:$0xff]
      %v1683 = vld [vmem:[%s1629 + $0xf9] sm:$0xff]
      %v1684 = vld [vmem:[%s1629 + $0x109] sm:$0xff]
      %v1685 = vld [vmem:[%s1629 + $0x111] sm:$0xff]
      %v1686 = vld [vmem:[%s1629 + $0x121] sm:$0xff]
      %v1687 = vld [vmem:[%s1629 + $0x129] sm:$0xff]
      %v1688 = vld [vmem:[%s1629 + $0x139] sm:$0xff]
      %v1689 = vld [vmem:[%s1629 + $0x141] sm:$0xff]
      %v1690 = vld [vmem:[%s1629 + $0x151] sm:$0xff]
      %v1691 = vld [vmem:[%s1629 + $0x159] sm:$0xff]
      %v1692 = vld [vmem:[%s1629 + $0x169] sm:$0xff]
      %v1693 = vld [vmem:[%s1629 + $0x171] sm:$0xff]
      %v1694 = vld [vmem:[%s1629 + $0x2] sm:$0xff]
      %v1695 = vld [vmem:[%s1629 + $0xa] sm:$0xff]
      %v1696 = vld [vmem:[%s1629 + $0x1a] sm:$0xff]
      %v1697 = vld [vmem:[%s1629 + $0x22] sm:$0xff]
      %v1698 = vld [vmem:[%s1629 + $0x32] sm:$0xff]
      %v1699 = vld [vmem:[%s1629 + $0x3a] sm:$0xff]
      %v1700 = vld [vmem:[%s1629 + $0x4a] sm:$0xff]
      %v1701 = vld [vmem:[%s1629 + $0x52] sm:$0xff]
      %v1702 = vld [vmem:[%s1629 + $0x62] sm:$0xff]
      %v1703 = vld [vmem:[%s1629 + $0x6a] sm:$0xff]
      %v1704 = vld [vmem:[%s1629 + $0x7a] sm:$0xff]
      %v1705 = vld [vmem:[%s1629 + $0x82] sm:$0xff]
      %v1706 = vld [vmem:[%s1629 + $0x92] sm:$0xff]
      %v1707 = vld [vmem:[%s1629 + $0x9a] sm:$0xff]
      %v1708 = vld [vmem:[%s1629 + $0xaa] sm:$0xff]
      %v1709 = vld [vmem:[%s1629 + $0xb2] sm:$0xff]
      %v1710 = vld [vmem:[%s1629 + $0xc2] sm:$0xff]
      %v1711 = vld [vmem:[%s1629 + $0xca] sm:$0xff]
      %v1712 = vld [vmem:[%s1629 + $0xda] sm:$0xff]
      %v1713 = vld [vmem:[%s1629 + $0xe2] sm:$0xff]
      %v1714 = vld [vmem:[%s1629 + $0xf2] sm:$0xff]
      %v1715 = vld [vmem:[%s1629 + $0xfa] sm:$0xff]
      %v1716 = vld [vmem:[%s1629 + $0x10a] sm:$0xff]
      %v1717 = vld [vmem:[%s1629 + $0x112] sm:$0xff]
      %v1718 = vld [vmem:[%s1629 + $0x122] sm:$0xff]
      %v1719 = vld [vmem:[%s1629 + $0x12a] sm:$0xff]
      %v1720 = vld [vmem:[%s1629 + $0x13a] sm:$0xff]
      %v1721 = vld [vmem:[%s1629 + $0x142] sm:$0xff]
      %v1722 = vld [vmem:[%s1629 + $0x152] sm:$0xff]
      %v1723 = vld [vmem:[%s1629 + $0x15a] sm:$0xff]
      %v1724 = vld [vmem:[%s1629 + $0x16a] sm:$0xff]
      %v1725 = vld [vmem:[%s1629 + $0x172] sm:$0xff]
      %1758 = vrot.lane.b32.xlu0 %v1469, 4
      %v1759 = vpop.permute.xlu0 %1758
      %1760 = vrot.lane.b32.xlu0 %v1470, 4
      %v1761 = vpop.permute.xlu0 %1760
      %1762 = vrot.lane.b32.xlu0 %v1471, 4
      %v1763 = vpop.permute.xlu0 %1762
      %1764 = vrot.lane.b32.xlu0 %v1472, 4
      %v1765 = vpop.permute.xlu0 %1764
      %1766 = vrot.lane.b32.xlu0 %v1473, 4
      %v1767 = vpop.permute.xlu0 %1766
      %1768 = vrot.lane.b32.xlu0 %v1474, 4
      %v1769 = vpop.permute.xlu0 %1768
      %1770 = vrot.lane.b32.xlu0 %v1475, 4
      %v1771 = vpop.permute.xlu0 %1770
      %1772 = vrot.lane.b32.xlu0 %v1476, 4
      %v1773 = vpop.permute.xlu0 %1772
      %1774 = vrot.lane.b32.xlu0 %v1477, 4
      %v1775 = vpop.permute.xlu0 %1774
      %1776 = vrot.lane.b32.xlu0 %v1478, 4
      %v1777 = vpop.permute.xlu0 %1776
      %1778 = vrot.lane.b32.xlu0 %v1479, 4
      %v1779 = vpop.permute.xlu0 %1778
      %1780 = vrot.lane.b32.xlu0 %v1480, 4
      %v1781 = vpop.permute.xlu0 %1780
      %1782 = vrot.lane.b32.xlu0 %v1481, 4
      %v1783 = vpop.permute.xlu0 %1782
      %1784 = vrot.lane.b32.xlu0 %v1482, 4
      %v1785 = vpop.permute.xlu0 %1784
      %1786 = vrot.lane.b32.xlu0 %v1483, 4
      %v1787 = vpop.permute.xlu0 %1786
      %1788 = vrot.lane.b32.xlu0 %v1484, 4
      %v1789 = vpop.permute.xlu0 %1788
      %1790 = vrot.lane.b32.xlu0 %v1485, 4
      %v1791 = vpop.permute.xlu0 %1790
      %1792 = vrot.lane.b32.xlu0 %v1486, 4
      %v1793 = vpop.permute.xlu0 %1792
      %1794 = vrot.lane.b32.xlu0 %v1487, 4
      %v1795 = vpop.permute.xlu0 %1794
      %1796 = vrot.lane.b32.xlu0 %v1488, 4
      %v1797 = vpop.permute.xlu0 %1796
      %1798 = vrot.lane.b32.xlu0 %v1489, 4
      %v1799 = vpop.permute.xlu0 %1798
      %1800 = vrot.lane.b32.xlu0 %v1490, 4
      %v1801 = vpop.permute.xlu0 %1800
      %1802 = vrot.lane.b32.xlu0 %v1491, 4
      %v1803 = vpop.permute.xlu0 %1802
      %1804 = vrot.lane.b32.xlu0 %v1492, 4
      %v1805 = vpop.permute.xlu0 %1804
      %1806 = vrot.lane.b32.xlu0 %v1493, 4
      %v1807 = vpop.permute.xlu0 %1806
      %1808 = vrot.lane.b32.xlu0 %v1494, 4
      %v1809 = vpop.permute.xlu0 %1808
      %1810 = vrot.lane.b32.xlu0 %v1495, 4
      %v1811 = vpop.permute.xlu0 %1810
      %1812 = vrot.lane.b32.xlu0 %v1496, 4
      %v1813 = vpop.permute.xlu0 %1812
      %1814 = vrot.lane.b32.xlu0 %v1497, 4
      %v1815 = vpop.permute.xlu0 %1814
      %1816 = vrot.lane.b32.xlu0 %v1498, 4
      %v1817 = vpop.permute.xlu0 %1816
      %1818 = vrot.lane.b32.xlu0 %v1499, 4
      %v1819 = vpop.permute.xlu0 %1818
      %1820 = vrot.lane.b32.xlu0 %v1500, 4
      %v1821 = vpop.permute.xlu0 %1820
      %1886 = vrot.lane.b32.xlu0 %v1501, 8
      %v1887 = vpop.permute.xlu0 %1886
      %1888 = vrot.lane.b32.xlu0 %v1502, 8
      %v1889 = vpop.permute.xlu0 %1888
      %1890 = vrot.lane.b32.xlu0 %v1503, 8
      %v1891 = vpop.permute.xlu0 %1890
      %1892 = vrot.lane.b32.xlu0 %v1504, 8
      %v1893 = vpop.permute.xlu0 %1892
      %1894 = vrot.lane.b32.xlu0 %v1505, 8
      %v1895 = vpop.permute.xlu0 %1894
      %1896 = vrot.lane.b32.xlu0 %v1506, 8
      %v1897 = vpop.permute.xlu0 %1896
      %1898 = vrot.lane.b32.xlu0 %v1507, 8
      %v1899 = vpop.permute.xlu0 %1898
      %1900 = vrot.lane.b32.xlu0 %v1508, 8
      %v1901 = vpop.permute.xlu0 %1900
      %1902 = vrot.lane.b32.xlu0 %v1509, 8
      %v1903 = vpop.permute.xlu0 %1902
      %1904 = vrot.lane.b32.xlu0 %v1510, 8
      %v1905 = vpop.permute.xlu0 %1904
      %1906 = vrot.lane.b32.xlu0 %v1511, 8
      %v1907 = vpop.permute.xlu0 %1906
      %1908 = vrot.lane.b32.xlu0 %v1512, 8
      %v1909 = vpop.permute.xlu0 %1908
      %1910 = vrot.lane.b32.xlu0 %v1513, 8
      %v1911 = vpop.permute.xlu0 %1910
      %1912 = vrot.lane.b32.xlu0 %v1514, 8
      %v1913 = vpop.permute.xlu0 %1912
      %1914 = vrot.lane.b32.xlu0 %v1515, 8
      %v1915 = vpop.permute.xlu0 %1914
      %1916 = vrot.lane.b32.xlu0 %v1516, 8
      %v1917 = vpop.permute.xlu0 %1916
      %1918 = vrot.lane.b32.xlu0 %v1517, 8
      %v1919 = vpop.permute.xlu0 %1918
      %1920 = vrot.lane.b32.xlu0 %v1518, 8
      %v1921 = vpop.permute.xlu0 %1920
      %1922 = vrot.lane.b32.xlu0 %v1519, 8
      %v1923 = vpop.permute.xlu0 %1922
      %1924 = vrot.lane.b32.xlu0 %v1520, 8
      %v1925 = vpop.permute.xlu0 %1924
      %1926 = vrot.lane.b32.xlu0 %v1521, 8
      %v1927 = vpop.permute.xlu0 %1926
      %1928 = vrot.lane.b32.xlu0 %v1522, 8
      %v1929 = vpop.permute.xlu0 %1928
      %1930 = vrot.lane.b32.xlu0 %v1523, 8
      %v1931 = vpop.permute.xlu0 %1930
      %1932 = vrot.lane.b32.xlu0 %v1524, 8
      %v1933 = vpop.permute.xlu0 %1932
      %1934 = vrot.lane.b32.xlu0 %v1525, 8
      %v1935 = vpop.permute.xlu0 %1934
      %1936 = vrot.lane.b32.xlu0 %v1526, 8
      %v1937 = vpop.permute.xlu0 %1936
      %1938 = vrot.lane.b32.xlu0 %v1527, 8
      %v1939 = vpop.permute.xlu0 %1938
      %1940 = vrot.lane.b32.xlu0 %v1528, 8
      %v1941 = vpop.permute.xlu0 %1940
      %1942 = vrot.lane.b32.xlu0 %v1529, 8
      %v1943 = vpop.permute.xlu0 %1942
      %1944 = vrot.lane.b32.xlu0 %v1530, 8
      %v1945 = vpop.permute.xlu0 %1944
      %1946 = vrot.lane.b32.xlu0 %v1531, 8
      %v1947 = vpop.permute.xlu0 %1946
      %1948 = vrot.lane.b32.xlu0 %v1532, 8
      %v1949 = vpop.permute.xlu0 %1948
      %2014 = vrot.lane.b32.xlu0 %v1533, 12
      %v2015 = vpop.permute.xlu0 %2014
      %2016 = vrot.lane.b32.xlu0 %v1534, 12
      %v2017 = vpop.permute.xlu0 %2016
      %2018 = vrot.lane.b32.xlu0 %v1535, 12
      %v2019 = vpop.permute.xlu0 %2018
      %2020 = vrot.lane.b32.xlu0 %v1536, 12
      %v2021 = vpop.permute.xlu0 %2020
      %2022 = vrot.lane.b32.xlu0 %v1537, 12
      %v2023 = vpop.permute.xlu0 %2022
      %2024 = vrot.lane.b32.xlu0 %v1538, 12
      %v2025 = vpop.permute.xlu0 %2024
      %2026 = vrot.lane.b32.xlu0 %v1539, 12
      %v2027 = vpop.permute.xlu0 %2026
      %2028 = vrot.lane.b32.xlu0 %v1540, 12
      %v2029 = vpop.permute.xlu0 %2028
      %2030 = vrot.lane.b32.xlu0 %v1541, 12
      %v2031 = vpop.permute.xlu0 %2030
      %2032 = vrot.lane.b32.xlu0 %v1542, 12
      %v2033 = vpop.permute.xlu0 %2032
      %2034 = vrot.lane.b32.xlu0 %v1543, 12
      %v2035 = vpop.permute.xlu0 %2034
      %2036 = vrot.lane.b32.xlu0 %v1544, 12
      %v2037 = vpop.permute.xlu0 %2036
      %2038 = vrot.lane.b32.xlu0 %v1545, 12
      %v2039 = vpop.permute.xlu0 %2038
      %2040 = vrot.lane.b32.xlu0 %v1546, 12
      %v2041 = vpop.permute.xlu0 %2040
      %2042 = vrot.lane.b32.xlu0 %v1547, 12
      %v2043 = vpop.permute.xlu0 %2042
      %2044 = vrot.lane.b32.xlu0 %v1548, 12
      %v2045 = vpop.permute.xlu0 %2044
      %2046 = vrot.lane.b32.xlu0 %v1549, 12
      %v2047 = vpop.permute.xlu0 %2046
      %2048 = vrot.lane.b32.xlu0 %v1550, 12
      %v2049 = vpop.permute.xlu0 %2048
      %2050 = vrot.lane.b32.xlu0 %v1551, 12
      %v2051 = vpop.permute.xlu0 %2050
      %2052 = vrot.lane.b32.xlu0 %v1552, 12
      %v2053 = vpop.permute.xlu0 %2052
      %2054 = vrot.lane.b32.xlu0 %v1553, 12
      %v2055 = vpop.permute.xlu0 %2054
      %2056 = vrot.lane.b32.xlu0 %v1554, 12
      %v2057 = vpop.permute.xlu0 %2056
      %2058 = vrot.lane.b32.xlu0 %v1555, 12
      %v2059 = vpop.permute.xlu0 %2058
      %2060 = vrot.lane.b32.xlu0 %v1556, 12
      %v2061 = vpop.permute.xlu0 %2060
      %2062 = vrot.lane.b32.xlu0 %v1557, 12
      %v2063 = vpop.permute.xlu0 %2062
      %2064 = vrot.lane.b32.xlu0 %v1558, 12
      %v2065 = vpop.permute.xlu0 %2064
      %2066 = vrot.lane.b32.xlu0 %v1559, 12
      %v2067 = vpop.permute.xlu0 %2066
      %2068 = vrot.lane.b32.xlu0 %v1560, 12
      %v2069 = vpop.permute.xlu0 %2068
      %2070 = vrot.lane.b32.xlu0 %v1561, 12
      %v2071 = vpop.permute.xlu0 %2070
      %2072 = vrot.lane.b32.xlu0 %v1562, 12
      %v2073 = vpop.permute.xlu0 %2072
      %2074 = vrot.lane.b32.xlu0 %v1563, 12
      %v2075 = vpop.permute.xlu0 %2074
      %2076 = vrot.lane.b32.xlu0 %v1564, 12
      %v2077 = vpop.permute.xlu0 %2076
      %2142 = vrot.lane.b32.xlu0 %v1565, 16
      %v2143 = vpop.permute.xlu0 %2142
      %2144 = vrot.lane.b32.xlu0 %v1566, 16
      %v2145 = vpop.permute.xlu0 %2144
      %2146 = vrot.lane.b32.xlu0 %v1567, 16
      %v2147 = vpop.permute.xlu0 %2146
      %2148 = vrot.lane.b32.xlu0 %v1568, 16
      %v2149 = vpop.permute.xlu0 %2148
      %2150 = vrot.lane.b32.xlu0 %v1569, 16
      %v2151 = vpop.permute.xlu0 %2150
      %2152 = vrot.lane.b32.xlu0 %v1570, 16
      %v2153 = vpop.permute.xlu0 %2152
      %2154 = vrot.lane.b32.xlu0 %v1571, 16
      %v2155 = vpop.permute.xlu0 %2154
      %2156 = vrot.lane.b32.xlu0 %v1572, 16
      %v2157 = vpop.permute.xlu0 %2156
      %2158 = vrot.lane.b32.xlu0 %v1573, 16
      %v2159 = vpop.permute.xlu0 %2158
      %2160 = vrot.lane.b32.xlu0 %v1574, 16
      %v2161 = vpop.permute.xlu0 %2160
      %2162 = vrot.lane.b32.xlu0 %v1575, 16
      %v2163 = vpop.permute.xlu0 %2162
      %2164 = vrot.lane.b32.xlu0 %v1576, 16
      %v2165 = vpop.permute.xlu0 %2164
      %2166 = vrot.lane.b32.xlu0 %v1577, 16
      %v2167 = vpop.permute.xlu0 %2166
      %2168 = vrot.lane.b32.xlu0 %v1578, 16
      %v2169 = vpop.permute.xlu0 %2168
      %2170 = vrot.lane.b32.xlu0 %v1579, 16
      %v2171 = vpop.permute.xlu0 %2170
      %2172 = vrot.lane.b32.xlu0 %v1580, 16
      %v2173 = vpop.permute.xlu0 %2172
      %2174 = vrot.lane.b32.xlu0 %v1581, 16
      %v2175 = vpop.permute.xlu0 %2174
      %2176 = vrot.lane.b32.xlu0 %v1582, 16
      %v2177 = vpop.permute.xlu0 %2176
      %2178 = vrot.lane.b32.xlu0 %v1583, 16
      %v2179 = vpop.permute.xlu0 %2178
      %2180 = vrot.lane.b32.xlu0 %v1584, 16
      %v2181 = vpop.permute.xlu0 %2180
      %2182 = vrot.lane.b32.xlu0 %v1585, 16
      %v2183 = vpop.permute.xlu0 %2182
      %2184 = vrot.lane.b32.xlu0 %v1586, 16
      %v2185 = vpop.permute.xlu0 %2184
      %2186 = vrot.lane.b32.xlu0 %v1587, 16
      %v2187 = vpop.permute.xlu0 %2186
      %2188 = vrot.lane.b32.xlu0 %v1588, 16
      %v2189 = vpop.permute.xlu0 %2188
      %2190 = vrot.lane.b32.xlu0 %v1589, 16
      %v2191 = vpop.permute.xlu0 %2190
      %2192 = vrot.lane.b32.xlu0 %v1590, 16
      %v2193 = vpop.permute.xlu0 %2192
      %2194 = vrot.lane.b32.xlu0 %v1591, 16
      %v2195 = vpop.permute.xlu0 %2194
      %2196 = vrot.lane.b32.xlu0 %v1592, 16
      %v2197 = vpop.permute.xlu0 %2196
      %2198 = vrot.lane.b32.xlu0 %v1593, 16
      %v2199 = vpop.permute.xlu0 %2198
      %2200 = vrot.lane.b32.xlu0 %v1594, 16
      %v2201 = vpop.permute.xlu0 %2200
      %2202 = vrot.lane.b32.xlu0 %v1595, 16
      %v2203 = vpop.permute.xlu0 %2202
      %2204 = vrot.lane.b32.xlu0 %v1596, 16
      %v2205 = vpop.permute.xlu0 %2204
      %2270 = vrot.lane.b32.xlu0 %v1597, 20
      %v2271 = vpop.permute.xlu0 %2270
      %2272 = vrot.lane.b32.xlu0 %v1598, 20
      %v2273 = vpop.permute.xlu0 %2272
      %2274 = vrot.lane.b32.xlu0 %v1599, 20
      %v2275 = vpop.permute.xlu0 %2274
      %2276 = vrot.lane.b32.xlu0 %v1600, 20
      %v2277 = vpop.permute.xlu0 %2276
      %2278 = vrot.lane.b32.xlu0 %v1601, 20
      %v2279 = vpop.permute.xlu0 %2278
      %2280 = vrot.lane.b32.xlu0 %v1602, 20
      %v2281 = vpop.permute.xlu0 %2280
      %2282 = vrot.lane.b32.xlu0 %v1603, 20
      %v2283 = vpop.permute.xlu0 %2282
      %2284 = vrot.lane.b32.xlu0 %v1604, 20
      %v2285 = vpop.permute.xlu0 %2284
      %2286 = vrot.lane.b32.xlu0 %v1605, 20
      %v2287 = vpop.permute.xlu0 %2286
      %2288 = vrot.lane.b32.xlu0 %v1606, 20
      %v2289 = vpop.permute.xlu0 %2288
      %2290 = vrot.lane.b32.xlu0 %v1607, 20
      %v2291 = vpop.permute.xlu0 %2290
      %2292 = vrot.lane.b32.xlu0 %v1608, 20
      %v2293 = vpop.permute.xlu0 %2292
      %2294 = vrot.lane.b32.xlu0 %v1609, 20
      %v2295 = vpop.permute.xlu0 %2294
      %2296 = vrot.lane.b32.xlu0 %v1610, 20
      %v2297 = vpop.permute.xlu0 %2296
      %2298 = vrot.lane.b32.xlu0 %v1611, 20
      %v2299 = vpop.permute.xlu0 %2298
      %2300 = vrot.lane.b32.xlu0 %v1612, 20
      %v2301 = vpop.permute.xlu0 %2300
      %2302 = vrot.lane.b32.xlu0 %v1613, 20
      %v2303 = vpop.permute.xlu0 %2302
      %2304 = vrot.lane.b32.xlu0 %v1614, 20
      %v2305 = vpop.permute.xlu0 %2304
      %2306 = vrot.lane.b32.xlu0 %v1615, 20
      %v2307 = vpop.permute.xlu0 %2306
      %2308 = vrot.lane.b32.xlu0 %v1616, 20
      %v2309 = vpop.permute.xlu0 %2308
      %2310 = vrot.lane.b32.xlu0 %v1617, 20
      %v2311 = vpop.permute.xlu0 %2310
      %2312 = vrot.lane.b32.xlu0 %v1618, 20
      %v2313 = vpop.permute.xlu0 %2312
      %2314 = vrot.lane.b32.xlu0 %v1619, 20
      %v2315 = vpop.permute.xlu0 %2314
      %2316 = vrot.lane.b32.xlu0 %v1620, 20
      %v2317 = vpop.permute.xlu0 %2316
      %2318 = vrot.lane.b32.xlu0 %v1621, 20
      %v2319 = vpop.permute.xlu0 %2318
      %2320 = vrot.lane.b32.xlu0 %v1622, 20
      %v2321 = vpop.permute.xlu0 %2320
      %2322 = vrot.lane.b32.xlu0 %v1623, 20
      %v2323 = vpop.permute.xlu0 %2322
      %2324 = vrot.lane.b32.xlu0 %v1624, 20
      %v2325 = vpop.permute.xlu0 %2324
      %2326 = vrot.lane.b32.xlu0 %v1625, 20
      %v2327 = vpop.permute.xlu0 %2326
      %2328 = vrot.lane.b32.xlu0 %v1626, 20
      %v2329 = vpop.permute.xlu0 %2328
      %2330 = vrot.lane.b32.xlu0 %v1627, 20
      %v2331 = vpop.permute.xlu0 %2330
      %2332 = vrot.lane.b32.xlu0 %v1628, 20
      %v2333 = vpop.permute.xlu0 %2332
      %2398 = vrot.lane.b32.xlu0 %v1630, 24
      %v2399 = vpop.permute.xlu0 %2398
      %2400 = vrot.lane.b32.xlu0 %v1631, 24
      %v2401 = vpop.permute.xlu0 %2400
      %2402 = vrot.lane.b32.xlu0 %v1632, 24
      %v2403 = vpop.permute.xlu0 %2402
      %2404 = vrot.lane.b32.xlu0 %v1633, 24
      %v2405 = vpop.permute.xlu0 %2404
      %2406 = vrot.lane.b32.xlu0 %v1634, 24
      %v2407 = vpop.permute.xlu0 %2406
      %2408 = vrot.lane.b32.xlu0 %v1635, 24
      %v2409 = vpop.permute.xlu0 %2408
      %2410 = vrot.lane.b32.xlu0 %v1636, 24
      %v2411 = vpop.permute.xlu0 %2410
      %2412 = vrot.lane.b32.xlu0 %v1637, 24
      %v2413 = vpop.permute.xlu0 %2412
      %2414 = vrot.lane.b32.xlu0 %v1638, 24
      %v2415 = vpop.permute.xlu0 %2414
      %2416 = vrot.lane.b32.xlu0 %v1639, 24
      %v2417 = vpop.permute.xlu0 %2416
      %2418 = vrot.lane.b32.xlu0 %v1640, 24
      %v2419 = vpop.permute.xlu0 %2418
      %2420 = vrot.lane.b32.xlu0 %v1641, 24
      %v2421 = vpop.permute.xlu0 %2420
      %2422 = vrot.lane.b32.xlu0 %v1642, 24
      %v2423 = vpop.permute.xlu0 %2422
      %2424 = vrot.lane.b32.xlu0 %v1643, 24
      %v2425 = vpop.permute.xlu0 %2424
      %2426 = vrot.lane.b32.xlu0 %v1644, 24
      %v2427 = vpop.permute.xlu0 %2426
      %2428 = vrot.lane.b32.xlu0 %v1645, 24
      %v2429 = vpop.permute.xlu0 %2428
      %2430 = vrot.lane.b32.xlu0 %v1646, 24
      %v2431 = vpop.permute.xlu0 %2430
      %2432 = vrot.lane.b32.xlu0 %v1647, 24
      %v2433 = vpop.permute.xlu0 %2432
      %2434 = vrot.lane.b32.xlu0 %v1648, 24
      %v2435 = vpop.permute.xlu0 %2434
      %2436 = vrot.lane.b32.xlu0 %v1649, 24
      %v2437 = vpop.permute.xlu0 %2436
      %2438 = vrot.lane.b32.xlu0 %v1650, 24
      %v2439 = vpop.permute.xlu0 %2438
      %2440 = vrot.lane.b32.xlu0 %v1651, 24
      %v2441 = vpop.permute.xlu0 %2440
      %2442 = vrot.lane.b32.xlu0 %v1652, 24
      %v2443 = vpop.permute.xlu0 %2442
      %2444 = vrot.lane.b32.xlu0 %v1653, 24
      %v2445 = vpop.permute.xlu0 %2444
      %2446 = vrot.lane.b32.xlu0 %v1654, 24
      %v2447 = vpop.permute.xlu0 %2446
      %2448 = vrot.lane.b32.xlu0 %v1655, 24
      %v2449 = vpop.permute.xlu0 %2448
      %2450 = vrot.lane.b32.xlu0 %v1656, 24
      %v2451 = vpop.permute.xlu0 %2450
      %2452 = vrot.lane.b32.xlu0 %v1657, 24
      %v2453 = vpop.permute.xlu0 %2452
      %2454 = vrot.lane.b32.xlu0 %v1658, 24
      %v2455 = vpop.permute.xlu0 %2454
      %2456 = vrot.lane.b32.xlu0 %v1659, 24
      %v2457 = vpop.permute.xlu0 %2456
      %2458 = vrot.lane.b32.xlu0 %v1660, 24
      %v2459 = vpop.permute.xlu0 %2458
      %2460 = vrot.lane.b32.xlu0 %v1661, 24
      %v2461 = vpop.permute.xlu0 %2460
      %2526 = vrot.lane.b32.xlu0 %v1662, 28
      %v2527 = vpop.permute.xlu0 %2526
      %2528 = vrot.lane.b32.xlu0 %v1663, 28
      %v2529 = vpop.permute.xlu0 %2528
      %2530 = vrot.lane.b32.xlu0 %v1664, 28
      %v2531 = vpop.permute.xlu0 %2530
      %2532 = vrot.lane.b32.xlu0 %v1665, 28
      %v2533 = vpop.permute.xlu0 %2532
      %2534 = vrot.lane.b32.xlu0 %v1666, 28
      %v2535 = vpop.permute.xlu0 %2534
      %2536 = vrot.lane.b32.xlu0 %v1667, 28
      %v2537 = vpop.permute.xlu0 %2536
      %2538 = vrot.lane.b32.xlu0 %v1668, 28
      %v2539 = vpop.permute.xlu0 %2538
      %2540 = vrot.lane.b32.xlu0 %v1669, 28
      %v2541 = vpop.permute.xlu0 %2540
      %2542 = vrot.lane.b32.xlu0 %v1670, 28
      %v2543 = vpop.permute.xlu0 %2542
      %2544 = vrot.lane.b32.xlu0 %v1671, 28
      %v2545 = vpop.permute.xlu0 %2544
      %2546 = vrot.lane.b32.xlu0 %v1672, 28
      %v2547 = vpop.permute.xlu0 %2546
      %2548 = vrot.lane.b32.xlu0 %v1673, 28
      %v2549 = vpop.permute.xlu0 %2548
      %2550 = vrot.lane.b32.xlu0 %v1674, 28
      %v2551 = vpop.permute.xlu0 %2550
      %2552 = vrot.lane.b32.xlu0 %v1675, 28
      %v2553 = vpop.permute.xlu0 %2552
      %2554 = vrot.lane.b32.xlu0 %v1676, 28
      %v2555 = vpop.permute.xlu0 %2554
      %2556 = vrot.lane.b32.xlu0 %v1677, 28
      %v2557 = vpop.permute.xlu0 %2556
      %2558 = vrot.lane.b32.xlu0 %v1678, 28
      %v2559 = vpop.permute.xlu0 %2558
      %2560 = vrot.lane.b32.xlu0 %v1679, 28
      %v2561 = vpop.permute.xlu0 %2560
      %2562 = vrot.lane.b32.xlu0 %v1680, 28
      %v2563 = vpop.permute.xlu0 %2562
      %2564 = vrot.lane.b32.xlu0 %v1681, 28
      %v2565 = vpop.permute.xlu0 %2564
      %2566 = vrot.lane.b32.xlu0 %v1682, 28
      %v2567 = vpop.permute.xlu0 %2566
      %2568 = vrot.lane.b32.xlu0 %v1683, 28
      %v2569 = vpop.permute.xlu0 %2568
      %2570 = vrot.lane.b32.xlu0 %v1684, 28
      %v2571 = vpop.permute.xlu0 %2570
      %2572 = vrot.lane.b32.xlu0 %v1685, 28
      %v2573 = vpop.permute.xlu0 %2572
      %2574 = vrot.lane.b32.xlu0 %v1686, 28
      %v2575 = vpop.permute.xlu0 %2574
      %2576 = vrot.lane.b32.xlu0 %v1687, 28
      %v2577 = vpop.permute.xlu0 %2576
      %2578 = vrot.lane.b32.xlu0 %v1688, 28
      %v2579 = vpop.permute.xlu0 %2578
      %2580 = vrot.lane.b32.xlu0 %v1689, 28
      %v2581 = vpop.permute.xlu0 %2580
      %2582 = vrot.lane.b32.xlu0 %v1690, 28
      %v2583 = vpop.permute.xlu0 %2582
      %2584 = vrot.lane.b32.xlu0 %v1691, 28
      %v2585 = vpop.permute.xlu0 %2584
      %2586 = vrot.lane.b32.xlu0 %v1692, 28
      %v2587 = vpop.permute.xlu0 %2586
      %2588 = vrot.lane.b32.xlu0 %v1693, 28
      %v2589 = vpop.permute.xlu0 %2588
      %2654 = vrot.lane.b32.xlu0 %v1694, 32
      %v2655 = vpop.permute.xlu0 %2654
      %2656 = vrot.lane.b32.xlu0 %v1695, 32
      %v2657 = vpop.permute.xlu0 %2656
      %2658 = vrot.lane.b32.xlu0 %v1696, 32
      %v2659 = vpop.permute.xlu0 %2658
      %2660 = vrot.lane.b32.xlu0 %v1697, 32
      %v2661 = vpop.permute.xlu0 %2660
      %2662 = vrot.lane.b32.xlu0 %v1698, 32
      %v2663 = vpop.permute.xlu0 %2662
      %2664 = vrot.lane.b32.xlu0 %v1699, 32
      %v2665 = vpop.permute.xlu0 %2664
      %2666 = vrot.lane.b32.xlu0 %v1700, 32
      %v2667 = vpop.permute.xlu0 %2666
      %2668 = vrot.lane.b32.xlu0 %v1701, 32
      %v2669 = vpop.permute.xlu0 %2668
      %2670 = vrot.lane.b32.xlu0 %v1702, 32
      %v2671 = vpop.permute.xlu0 %2670
      %2672 = vrot.lane.b32.xlu0 %v1703, 32
      %v2673 = vpop.permute.xlu0 %2672
      %2674 = vrot.lane.b32.xlu0 %v1704, 32
      %v2675 = vpop.permute.xlu0 %2674
      %2676 = vrot.lane.b32.xlu0 %v1705, 32
      %v2677 = vpop.permute.xlu0 %2676
      %2678 = vrot.lane.b32.xlu0 %v1706, 32
      %v2679 = vpop.permute.xlu0 %2678
      %2680 = vrot.lane.b32.xlu0 %v1707, 32
      %v2681 = vpop.permute.xlu0 %2680
      %2682 = vrot.lane.b32.xlu0 %v1708, 32
      %v2683 = vpop.permute.xlu0 %2682
      %2684 = vrot.lane.b32.xlu0 %v1709, 32
      %v2685 = vpop.permute.xlu0 %2684
      %2686 = vrot.lane.b32.xlu0 %v1710, 32
      %v2687 = vpop.permute.xlu0 %2686
      %2688 = vrot.lane.b32.xlu0 %v1711, 32
      %v2689 = vpop.permute.xlu0 %2688
      %2690 = vrot.lane.b32.xlu0 %v1712, 32
      %v2691 = vpop.permute.xlu0 %2690
      %2692 = vrot.lane.b32.xlu0 %v1713, 32
      %v2693 = vpop.permute.xlu0 %2692
      %2694 = vrot.lane.b32.xlu0 %v1714, 32
      %v2695 = vpop.permute.xlu0 %2694
      %2696 = vrot.lane.b32.xlu0 %v1715, 32
      %v2697 = vpop.permute.xlu0 %2696
      %2698 = vrot.lane.b32.xlu0 %v1716, 32
      %v2699 = vpop.permute.xlu0 %2698
      %2700 = vrot.lane.b32.xlu0 %v1717, 32
      %v2701 = vpop.permute.xlu0 %2700
      %2702 = vrot.lane.b32.xlu0 %v1718, 32
      %v2703 = vpop.permute.xlu0 %2702
      %2704 = vrot.lane.b32.xlu0 %v1719, 32
      %v2705 = vpop.permute.xlu0 %2704
      %2706 = vrot.lane.b32.xlu0 %v1720, 32
      %v2707 = vpop.permute.xlu0 %2706
      %2708 = vrot.lane.b32.xlu0 %v1721, 32
      %v2709 = vpop.permute.xlu0 %2708
      %2710 = vrot.lane.b32.xlu0 %v1722, 32
      %v2711 = vpop.permute.xlu0 %2710
      %2712 = vrot.lane.b32.xlu0 %v1723, 32
      %v2713 = vpop.permute.xlu0 %2712
      %2714 = vrot.lane.b32.xlu0 %v1724, 32
      %v2715 = vpop.permute.xlu0 %2714
      %2716 = vrot.lane.b32.xlu0 %v1725, 32
      %v2717 = vpop.permute.xlu0 %2716
      %v2750 = vsel %vm316, %v1437, %v1759
      %v2751 = vsel %vm316, %v1438, %v1761
      %v2752 = vsel %vm316, %v1439, %v1763
      %v2753 = vsel %vm316, %v1440, %v1765
      %v2754 = vsel %vm316, %v1441, %v1767
      %v2755 = vsel %vm316, %v1442, %v1769
      %v2756 = vsel %vm316, %v1443, %v1771
      %v2757 = vsel %vm316, %v1444, %v1773
      %v2758 = vsel %vm316, %v1445, %v1775
      %v2759 = vsel %vm316, %v1446, %v1777
      %v2760 = vsel %vm316, %v1447, %v1779
      %v2761 = vsel %vm316, %v1448, %v1781
      %v2762 = vsel %vm316, %v1449, %v1783
      %v2763 = vsel %vm316, %v1450, %v1785
      %v2764 = vsel %vm316, %v1451, %v1787
      %v2765 = vsel %vm316, %v1452, %v1789
      %v2766 = vsel %vm316, %v1453, %v1791
      %v2767 = vsel %vm316, %v1454, %v1793
      %v2768 = vsel %vm316, %v1455, %v1795
      %v2769 = vsel %vm316, %v1456, %v1797
      %v2770 = vsel %vm316, %v1457, %v1799
      %v2771 = vsel %vm316, %v1458, %v1801
      %v2772 = vsel %vm316, %v1459, %v1803
      %v2773 = vsel %vm316, %v1460, %v1805
      %v2774 = vsel %vm316, %v1461, %v1807
      %v2775 = vsel %vm316, %v1462, %v1809
      %v2776 = vsel %vm316, %v1463, %v1811
      %v2777 = vsel %vm316, %v1464, %v1813
      %v2778 = vsel %vm316, %v1465, %v1815
      %v2779 = vsel %vm316, %v1466, %v1817
      %v2780 = vsel %vm316, %v1467, %v1819
      %v2781 = vsel %vm316, %v1468, %v1821
      %vm2782 = vcmask 64512
      %v2783 = vsel %vm2782, %v2750, %v1887
      %v2784 = vsel %vm2782, %v2751, %v1889
      %v2785 = vsel %vm2782, %v2752, %v1891
      %v2786 = vsel %vm2782, %v2753, %v1893
      %v2787 = vsel %vm2782, %v2754, %v1895
      %v2788 = vsel %vm2782, %v2755, %v1897
      %v2789 = vsel %vm2782, %v2756, %v1899
      %v2790 = vsel %vm2782, %v2757, %v1901
      %v2791 = vsel %vm2782, %v2758, %v1903
      %v2792 = vsel %vm2782, %v2759, %v1905
      %v2793 = vsel %vm2782, %v2760, %v1907
      %v2794 = vsel %vm2782, %v2761, %v1909
      %v2795 = vsel %vm2782, %v2762, %v1911
      %v2796 = vsel %vm2782, %v2763, %v1913
      %v2797 = vsel %vm2782, %v2764, %v1915
      %v2798 = vsel %vm2782, %v2765, %v1917
      %v2799 = vsel %vm2782, %v2766, %v1919
      %v2800 = vsel %vm2782, %v2767, %v1921
      %v2801 = vsel %vm2782, %v2768, %v1923
      %v2802 = vsel %vm2782, %v2769, %v1925
      %v2803 = vsel %vm2782, %v2770, %v1927
      %v2804 = vsel %vm2782, %v2771, %v1929
      %v2805 = vsel %vm2782, %v2772, %v1931
      %v2806 = vsel %vm2782, %v2773, %v1933
      %v2807 = vsel %vm2782, %v2774, %v1935
      %v2808 = vsel %vm2782, %v2775, %v1937
      %v2809 = vsel %vm2782, %v2776, %v1939
      %v2810 = vsel %vm2782, %v2777, %v1941
      %v2811 = vsel %vm2782, %v2778, %v1943
      %v2812 = vsel %vm2782, %v2779, %v1945
      %v2813 = vsel %vm2782, %v2780, %v1947
      %v2814 = vsel %vm2782, %v2781, %v1949
      %vm2815 = vcmask 97280
      %v2816 = vsel %vm2815, %v2783, %v2015
      %v2817 = vsel %vm2815, %v2784, %v2017
      %v2818 = vsel %vm2815, %v2785, %v2019
      %v2819 = vsel %vm2815, %v2786, %v2021
      %v2820 = vsel %vm2815, %v2787, %v2023
      %v2821 = vsel %vm2815, %v2788, %v2025
      %v2822 = vsel %vm2815, %v2789, %v2027
      %v2823 = vsel %vm2815, %v2790, %v2029
      %v2824 = vsel %vm2815, %v2791, %v2031
      %v2825 = vsel %vm2815, %v2792, %v2033
      %v2826 = vsel %vm2815, %v2793, %v2035
      %v2827 = vsel %vm2815, %v2794, %v2037
      %v2828 = vsel %vm2815, %v2795, %v2039
      %v2829 = vsel %vm2815, %v2796, %v2041
      %v2830 = vsel %vm2815, %v2797, %v2043
      %v2831 = vsel %vm2815, %v2798, %v2045
      %v2832 = vsel %vm2815, %v2799, %v2047
      %v2833 = vsel %vm2815, %v2800, %v2049
      %v2834 = vsel %vm2815, %v2801, %v2051
      %v2835 = vsel %vm2815, %v2802, %v2053
      %v2836 = vsel %vm2815, %v2803, %v2055
      %v2837 = vsel %vm2815, %v2804, %v2057
      %v2838 = vsel %vm2815, %v2805, %v2059
      %v2839 = vsel %vm2815, %v2806, %v2061
      %v2840 = vsel %vm2815, %v2807, %v2063
      %v2841 = vsel %vm2815, %v2808, %v2065
      %v2842 = vsel %vm2815, %v2809, %v2067
      %v2843 = vsel %vm2815, %v2810, %v2069
      %v2844 = vsel %vm2815, %v2811, %v2071
      %v2845 = vsel %vm2815, %v2812, %v2073
      %v2846 = vsel %vm2815, %v2813, %v2075
      %v2847 = vsel %vm2815, %v2814, %v2077
      %vm2848 = vcmask 130048
      %v2849 = vsel %vm2848, %v2816, %v2143
      %v2850 = vsel %vm2848, %v2817, %v2145
      %v2851 = vsel %vm2848, %v2818, %v2147
      %v2852 = vsel %vm2848, %v2819, %v2149
      %v2853 = vsel %vm2848, %v2820, %v2151
      %v2854 = vsel %vm2848, %v2821, %v2153
      %v2855 = vsel %vm2848, %v2822, %v2155
      %v2856 = vsel %vm2848, %v2823, %v2157
      %v2857 = vsel %vm2848, %v2824, %v2159
      %v2858 = vsel %vm2848, %v2825, %v2161
      %v2859 = vsel %vm2848, %v2826, %v2163
      %v2860 = vsel %vm2848, %v2827, %v2165
      %v2861 = vsel %vm2848, %v2828, %v2167
      %v2862 = vsel %vm2848, %v2829, %v2169
      %v2863 = vsel %vm2848, %v2830, %v2171
      %v2864 = vsel %vm2848, %v2831, %v2173
      %v2865 = vsel %vm2848, %v2832, %v2175
      %v2866 = vsel %vm2848, %v2833, %v2177
      %v2867 = vsel %vm2848, %v2834, %v2179
      %v2868 = vsel %vm2848, %v2835, %v2181
      %v2869 = vsel %vm2848, %v2836, %v2183
      %v2870 = vsel %vm2848, %v2837, %v2185
      %v2871 = vsel %vm2848, %v2838, %v2187
      %v2872 = vsel %vm2848, %v2839, %v2189
      %v2873 = vsel %vm2848, %v2840, %v2191
      %v2874 = vsel %vm2848, %v2841, %v2193
      %v2875 = vsel %vm2848, %v2842, %v2195
      %v2876 = vsel %vm2848, %v2843, %v2197
      %v2877 = vsel %vm2848, %v2844, %v2199
      %v2878 = vsel %vm2848, %v2845, %v2201
      %v2879 = vsel %vm2848, %v2846, %v2203
      %v2880 = vsel %vm2848, %v2847, %v2205
      %vm2881 = vcmask 162816
      %v2882 = vsel %vm2881, %v2849, %v2271
      %v2883 = vsel %vm2881, %v2850, %v2273
      %v2884 = vsel %vm2881, %v2851, %v2275
      %v2885 = vsel %vm2881, %v2852, %v2277
      %v2886 = vsel %vm2881, %v2853, %v2279
      %v2887 = vsel %vm2881, %v2854, %v2281
      %v2888 = vsel %vm2881, %v2855, %v2283
      %v2889 = vsel %vm2881, %v2856, %v2285
      %v2890 = vsel %vm2881, %v2857, %v2287
      %v2891 = vsel %vm2881, %v2858, %v2289
      %v2892 = vsel %vm2881, %v2859, %v2291
      %v2893 = vsel %vm2881, %v2860, %v2293
      %v2894 = vsel %vm2881, %v2861, %v2295
      %v2895 = vsel %vm2881, %v2862, %v2297
      %v2896 = vsel %vm2881, %v2863, %v2299
      %v2897 = vsel %vm2881, %v2864, %v2301
      %v2898 = vsel %vm2881, %v2865, %v2303
      %v2899 = vsel %vm2881, %v2866, %v2305
      %v2900 = vsel %vm2881, %v2867, %v2307
      %v2901 = vsel %vm2881, %v2868, %v2309
      %v2902 = vsel %vm2881, %v2869, %v2311
      %v2903 = vsel %vm2881, %v2870, %v2313
      %v2904 = vsel %vm2881, %v2871, %v2315
      %v2905 = vsel %vm2881, %v2872, %v2317
      %v2906 = vsel %vm2881, %v2873, %v2319
      %v2907 = vsel %vm2881, %v2874, %v2321
      %v2908 = vsel %vm2881, %v2875, %v2323
      %v2909 = vsel %vm2881, %v2876, %v2325
      %v2910 = vsel %vm2881, %v2877, %v2327
      %v2911 = vsel %vm2881, %v2878, %v2329
      %v2912 = vsel %vm2881, %v2879, %v2331
      %v2913 = vsel %vm2881, %v2880, %v2333
      %vm2914 = vcmask 195584
      %v2915 = vsel %vm2914, %v2882, %v2399
      %v2916 = vsel %vm2914, %v2883, %v2401
      %v2917 = vsel %vm2914, %v2884, %v2403
      %v2918 = vsel %vm2914, %v2885, %v2405
      %v2919 = vsel %vm2914, %v2886, %v2407
      %v2920 = vsel %vm2914, %v2887, %v2409
      %v2921 = vsel %vm2914, %v2888, %v2411
      %v2922 = vsel %vm2914, %v2889, %v2413
      %v2923 = vsel %vm2914, %v2890, %v2415
      %v2924 = vsel %vm2914, %v2891, %v2417
      %v2925 = vsel %vm2914, %v2892, %v2419
      %v2926 = vsel %vm2914, %v2893, %v2421
      %v2927 = vsel %vm2914, %v2894, %v2423
      %v2928 = vsel %vm2914, %v2895, %v2425
      %v2929 = vsel %vm2914, %v2896, %v2427
      %v2930 = vsel %vm2914, %v2897, %v2429
      %v2931 = vsel %vm2914, %v2898, %v2431
      %v2932 = vsel %vm2914, %v2899, %v2433
      %v2933 = vsel %vm2914, %v2900, %v2435
      %v2934 = vsel %vm2914, %v2901, %v2437
      %v2935 = vsel %vm2914, %v2902, %v2439
      %v2936 = vsel %vm2914, %v2903, %v2441
      %v2937 = vsel %vm2914, %v2904, %v2443
      %v2938 = vsel %vm2914, %v2905, %v2445
      %v2939 = vsel %vm2914, %v2906, %v2447
      %v2940 = vsel %vm2914, %v2907, %v2449
      %v2941 = vsel %vm2914, %v2908, %v2451
      %v2942 = vsel %vm2914, %v2909, %v2453
      %v2943 = vsel %vm2914, %v2910, %v2455
      %v2944 = vsel %vm2914, %v2911, %v2457
      %v2945 = vsel %vm2914, %v2912, %v2459
      %v2946 = vsel %vm2914, %v2913, %v2461
      %vm2947 = vcmask 228352
      %v2948 = vsel %vm2947, %v2915, %v2527
      %v2949 = vsel %vm2947, %v2916, %v2529
      %v2950 = vsel %vm2947, %v2917, %v2531
      %v2951 = vsel %vm2947, %v2918, %v2533
      %v2952 = vsel %vm2947, %v2919, %v2535
      %v2953 = vsel %vm2947, %v2920, %v2537
      %v2954 = vsel %vm2947, %v2921, %v2539
      %v2955 = vsel %vm2947, %v2922, %v2541
      %v2956 = vsel %vm2947, %v2923, %v2543
      %v2957 = vsel %vm2947, %v2924, %v2545
      %v2958 = vsel %vm2947, %v2925, %v2547
      %v2959 = vsel %vm2947, %v2926, %v2549
      %v2960 = vsel %vm2947, %v2927, %v2551
      %v2961 = vsel %vm2947, %v2928, %v2553
      %v2962 = vsel %vm2947, %v2929, %v2555
      %v2963 = vsel %vm2947, %v2930, %v2557
      %v2964 = vsel %vm2947, %v2931, %v2559
      %v2965 = vsel %vm2947, %v2932, %v2561
      %v2966 = vsel %vm2947, %v2933, %v2563
      %v2967 = vsel %vm2947, %v2934, %v2565
      %v2968 = vsel %vm2947, %v2935, %v2567
      %v2969 = vsel %vm2947, %v2936, %v2569
      %v2970 = vsel %vm2947, %v2937, %v2571
      %v2971 = vsel %vm2947, %v2938, %v2573
      %v2972 = vsel %vm2947, %v2939, %v2575
      %v2973 = vsel %vm2947, %v2940, %v2577
      %v2974 = vsel %vm2947, %v2941, %v2579
      %v2975 = vsel %vm2947, %v2942, %v2581
      %v2976 = vsel %vm2947, %v2943, %v2583
      %v2977 = vsel %vm2947, %v2944, %v2585
      %v2978 = vsel %vm2947, %v2945, %v2587
      %v2979 = vsel %vm2947, %v2946, %v2589
      %vm2980 = vcmask 261120
      %v2981 = vsel %vm2980, %v2948, %v2655
      %v2982 = vsel %vm2980, %v2949, %v2657
      %v2983 = vsel %vm2980, %v2950, %v2659
      %v2984 = vsel %vm2980, %v2951, %v2661
      %v2985 = vsel %vm2980, %v2952, %v2663
      %v2986 = vsel %vm2980, %v2953, %v2665
      %v2987 = vsel %vm2980, %v2954, %v2667
      %v2988 = vsel %vm2980, %v2955, %v2669
      %v2989 = vsel %vm2980, %v2956, %v2671
      %v2990 = vsel %vm2980, %v2957, %v2673
      %v2991 = vsel %vm2980, %v2958, %v2675
      %v2992 = vsel %vm2980, %v2959, %v2677
      %v2993 = vsel %vm2980, %v2960, %v2679
      %v2994 = vsel %vm2980, %v2961, %v2681
      %v2995 = vsel %vm2980, %v2962, %v2683
      %v2996 = vsel %vm2980, %v2963, %v2685
      %v2997 = vsel %vm2980, %v2964, %v2687
      %v2998 = vsel %vm2980, %v2965, %v2689
      %v2999 = vsel %vm2980, %v2966, %v2691
      %v3000 = vsel %vm2980, %v2967, %v2693
      %v3001 = vsel %vm2980, %v2968, %v2695
      %v3002 = vsel %vm2980, %v2969, %v2697
      %v3003 = vsel %vm2980, %v2970, %v2699
      %v3004 = vsel %vm2980, %v2971, %v2701
      %v3005 = vsel %vm2980, %v2972, %v2703
      %v3006 = vsel %vm2980, %v2973, %v2705
      %v3007 = vsel %vm2980, %v2974, %v2707
      %v3008 = vsel %vm2980, %v2975, %v2709
      %v3009 = vsel %vm2980, %v2976, %v2711
      %v3010 = vsel %vm2980, %v2977, %v2713
      %v3011 = vsel %vm2980, %v2978, %v2715
      %v3012 = vsel %vm2980, %v2979, %v2717
      %v3013 = vpack.c.bf16 %v2982, %v2981
      %v3014 = vpack.c.bf16 %v2984, %v2983
      %v3015 = vpack.c.bf16 %v2986, %v2985
      %v3016 = vpack.c.bf16 %v2988, %v2987
      %v3017 = vpack.c.bf16 %v2990, %v2989
      %v3018 = vpack.c.bf16 %v2992, %v2991
      %v3019 = vpack.c.bf16 %v2994, %v2993
      %v3020 = vpack.c.bf16 %v2996, %v2995
      %v3021 = vpack.c.bf16 %v2998, %v2997
      %v3022 = vpack.c.bf16 %v3000, %v2999
      %v3023 = vpack.c.bf16 %v3002, %v3001
      %v3024 = vpack.c.bf16 %v3004, %v3003
      %v3025 = vpack.c.bf16 %v3006, %v3005
      %v3026 = vpack.c.bf16 %v3008, %v3007
      %v3027 = vpack.c.bf16 %v3010, %v3009
      %v3028 = vpack.c.bf16 %v3012, %v3011
      %v3029 = vld [vmem:[%s5] sm:$0xf]
      %v3030 = vld [vmem:[%s5 + $0x4] sm:$0xf]
      %v3031 = vld [vmem:[%s5 + $0x8] sm:$0xf]
      %v3032 = vld [vmem:[%s5 + $0xc] sm:$0xf]
      %v3033 = vld [vmem:[%s5 + $0x10] sm:$0x3]
      %v3035 = vperm.slane %v1348, 0
      %v3042 = vunpack.c.l.b16 %v3029
      %v3043 = vunpack.c.l.b16 %v3030
      %v3044 = vunpack.c.l.b16 %v3031
      %v3045 = vunpack.c.l.b16 %v3032
      %v3046 = vunpack.c.l.b16 %v3033
      %v3047 = vpack.c.b16 %v3043, %v3042
      %v3048 = vpack.c.b16 %v3045, %v3044
      %v3049 = vpack.c.b16 %v3046, %v3046
      %vm3052 = vcmask 293888
      %v3054 = vsel %vm3052, %v3013, 0
      %v3057 = vsel %vm3052, %v3014, 0
      %v3060 = vsel %vm3052, %v3015, 0
      %v3063 = vsel %vm3052, %v3016, 0
      %v3066 = vsel %vm3052, %v3017, 0
      %v3069 = vsel %vm3052, %v3018, 0
      %v3072 = vsel %vm3052, %v3019, 0
      %v3075 = vsel %vm3052, %v3020, 0
      %v3078 = vsel %vm3052, %v3021, 0
      %v3081 = vsel %vm3052, %v3022, 0
      %v3084 = vsel %vm3052, %v3023, 0
      %v3087 = vsel %vm3052, %v3024, 0
      %v3090 = vsel %vm3052, %v3025, 0
      %v3093 = vsel %vm3052, %v3026, 0
      %v3096 = vsel %vm3052, %v3027, 0
      %v3099 = vsel %vm3052, %v3028, 0
      %vm3101 = vcmask 1041408
      %v3103 = vsel %vm3101, %v3049, 0
      %3105 = vmatpush.bf16.msra.mxu0 0
      %3106 = vmatpush.bf16.msra.mxu0 0
      %3107 = vmatpush.bf16.msra.mxu0 0
      %3108 = vmatpush.bf16.msra.mxu0 0
      %3109 = vmatpush.bf16.msra.mxu0 0
      %3110 = vmatpush.bf16.msra.mxu0 %v3103
      %3111 = vmatpush.bf16.msra.mxu0 %v3048
      %3112 = vmatpush.bf16.msra.mxu0 %v3047
      %3113 = vmatmul.bf16.gmra.mxu0 %v3054
      %v3114 = vpop.f32.mrf.mxu0
      %v3115 = vadd.f32 %v3035, %v3114
      %v3116 = vpop.f32.mrf.mxu0
      %v3117 = vadd.f32 %v3035, %v3116
      %3118 = vmatmul.bf16.gmra.mxu0 %v3057
      %v3119 = vpop.f32.mrf.mxu0
      %v3120 = vadd.f32 %v3035, %v3119
      %v3121 = vpop.f32.mrf.mxu0
      %v3122 = vadd.f32 %v3035, %v3121
      %3123 = vmatmul.bf16.gmra.mxu0 %v3060
      %v3124 = vpop.f32.mrf.mxu0
      %v3125 = vadd.f32 %v3035, %v3124
      %v3126 = vpop.f32.mrf.mxu0
      %v3127 = vadd.f32 %v3035, %v3126
      %3128 = vmatmul.bf16.gmra.mxu0 %v3063
      %v3129 = vpop.f32.mrf.mxu0
      %v3130 = vadd.f32 %v3035, %v3129
      %v3131 = vpop.f32.mrf.mxu0
      %v3132 = vadd.f32 %v3035, %v3131
      %3133 = vmatmul.bf16.gmra.mxu0 %v3066
      %v3134 = vpop.f32.mrf.mxu0
      %v3135 = vadd.f32 %v3035, %v3134
      %v3136 = vpop.f32.mrf.mxu0
      %v3137 = vadd.f32 %v3035, %v3136
      %3138 = vmatmul.bf16.gmra.mxu0 %v3069
      %v3139 = vpop.f32.mrf.mxu0
      %v3140 = vadd.f32 %v3035, %v3139
      %v3141 = vpop.f32.mrf.mxu0
      %v3142 = vadd.f32 %v3035, %v3141
      %3143 = vmatmul.bf16.gmra.mxu0 %v3072
      %v3144 = vpop.f32.mrf.mxu0
      %v3145 = vadd.f32 %v3035, %v3144
      %v3146 = vpop.f32.mrf.mxu0
      %v3147 = vadd.f32 %v3035, %v3146
      %3148 = vmatmul.bf16.gmra.mxu0 %v3075
      %v3149 = vpop.f32.mrf.mxu0
      %v3150 = vadd.f32 %v3035, %v3149
      %v3151 = vpop.f32.mrf.mxu0
      %v3152 = vadd.f32 %v3035, %v3151
      %3153 = vmatmul.bf16.gmra.mxu0 %v3078
      %v3154 = vpop.f32.mrf.mxu0
      %v3155 = vadd.f32 %v3035, %v3154
      %v3156 = vpop.f32.mrf.mxu0
      %v3157 = vadd.f32 %v3035, %v3156
      %3158 = vmatmul.bf16.gmra.mxu0 %v3081
      %v3159 = vpop.f32.mrf.mxu0
      %v3160 = vadd.f32 %v3035, %v3159
      %v3161 = vpop.f32.mrf.mxu0
      %v3162 = vadd.f32 %v3035, %v3161
      %3163 = vmatmul.bf16.gmra.mxu0 %v3084
      %v3164 = vpop.f32.mrf.mxu0
      %v3165 = vadd.f32 %v3035, %v3164
      %v3166 = vpop.f32.mrf.mxu0
      %v3167 = vadd.f32 %v3035, %v3166
      %3168 = vmatmul.bf16.gmra.mxu0 %v3087
      %v3169 = vpop.f32.mrf.mxu0
      %v3170 = vadd.f32 %v3035, %v3169
      %v3171 = vpop.f32.mrf.mxu0
      %v3172 = vadd.f32 %v3035, %v3171
      %3173 = vmatmul.bf16.gmra.mxu0 %v3090
      %v3174 = vpop.f32.mrf.mxu0
      %v3175 = vadd.f32 %v3035, %v3174
      %v3176 = vpop.f32.mrf.mxu0
      %v3177 = vadd.f32 %v3035, %v3176
      %3178 = vmatmul.bf16.gmra.mxu0 %v3093
      %v3179 = vpop.f32.mrf.mxu0
      %v3180 = vadd.f32 %v3035, %v3179
      %v3181 = vpop.f32.mrf.mxu0
      %v3182 = vadd.f32 %v3035, %v3181
      %3183 = vmatmul.bf16.gmra.mxu0 %v3096
      %v3184 = vpop.f32.mrf.mxu0
      %v3185 = vadd.f32 %v3035, %v3184
      %v3186 = vpop.f32.mrf.mxu0
      %v3187 = vadd.f32 %v3035, %v3186
      %3188 = vmatmul.bf16.gmra.mxu0 %v3099
      %v3189 = vpop.f32.mrf.mxu0
      %v3190 = vadd.f32 %v3035, %v3189
      %v3191 = vpop.f32.mrf.mxu0
      %v3192 = vadd.f32 %v3035, %v3191
      %3193 = vdwg.mxu0
      %v3194 = vpack.c.bf16 %v3115, %v3115
      %v3195 = vpack.c.bf16 %v3117, %v3117
      %v3196 = vpack.c.bf16 %v3120, %v3120
      %v3197 = vpack.c.bf16 %v3122, %v3122
      %v3198 = vpack.c.bf16 %v3125, %v3125
      %v3199 = vpack.c.bf16 %v3127, %v3127
      %v3200 = vpack.c.bf16 %v3130, %v3130
      %v3201 = vpack.c.bf16 %v3132, %v3132
      %v3202 = vpack.c.bf16 %v3135, %v3135
      %v3203 = vpack.c.bf16 %v3137, %v3137
      %v3204 = vpack.c.bf16 %v3140, %v3140
      %v3205 = vpack.c.bf16 %v3142, %v3142
      %v3206 = vpack.c.bf16 %v3145, %v3145
      %v3207 = vpack.c.bf16 %v3147, %v3147
      %v3208 = vpack.c.bf16 %v3150, %v3150
      %v3209 = vpack.c.bf16 %v3152, %v3152
      %v3210 = vpack.c.bf16 %v3155, %v3155
      %v3211 = vpack.c.bf16 %v3157, %v3157
      %v3212 = vpack.c.bf16 %v3160, %v3160
      %v3213 = vpack.c.bf16 %v3162, %v3162
      %v3214 = vpack.c.bf16 %v3165, %v3165
      %v3215 = vpack.c.bf16 %v3167, %v3167
      %v3216 = vpack.c.bf16 %v3170, %v3170
      %v3217 = vpack.c.bf16 %v3172, %v3172
      %v3218 = vpack.c.bf16 %v3175, %v3175
      %v3219 = vpack.c.bf16 %v3177, %v3177
      %v3220 = vpack.c.bf16 %v3180, %v3180
      %v3221 = vpack.c.bf16 %v3182, %v3182
      %v3222 = vpack.c.bf16 %v3185, %v3185
      %v3223 = vpack.c.bf16 %v3187, %v3187
      %v3224 = vpack.c.bf16 %v3190, %v3190
      %v3225 = vpack.c.bf16 %v3192, %v3192
      %vm3226 = vcmask 60416
      %3227 = vst.msk [vmem:[%s278] sm:$0xf] %vm3226, %v3194
      %3228 = vst.msk [vmem:[%s278 + $0x4] sm:$0xf] %vm3226, %v3195
      %3229 = vst.msk [vmem:[%s278 + $0x8] sm:$0xf] %vm3226, %v3196
      %3230 = vst.msk [vmem:[%s278 + $0xc] sm:$0xf] %vm3226, %v3197
      %3231 = vst.msk [vmem:[%s278 + $0x10] sm:$0xf] %vm3226, %v3198
      %3232 = vst.msk [vmem:[%s278 + $0x14] sm:$0xf] %vm3226, %v3199
      %3233 = vst.msk [vmem:[%s278 + $0x18] sm:$0xf] %vm3226, %v3200
      %3234 = vst.msk [vmem:[%s278 + $0x1c] sm:$0xf] %vm3226, %v3201
      %3235 = vst.msk [vmem:[%s278 + $0x20] sm:$0xf] %vm3226, %v3202
      %3236 = vst.msk [vmem:[%s278 + $0x24] sm:$0xf] %vm3226, %v3203
      %3237 = vst.msk [vmem:[%s278 + $0x28] sm:$0xf] %vm3226, %v3204
      %3238 = vst.msk [vmem:[%s278 + $0x2c] sm:$0xf] %vm3226, %v3205
      %3239 = vst.msk [vmem:[%s278 + $0x30] sm:$0xf] %vm3226, %v3206
      %3240 = vst.msk [vmem:[%s278 + $0x34] sm:$0xf] %vm3226, %v3207
      %3241 = vst.msk [vmem:[%s278 + $0x38] sm:$0xf] %vm3226, %v3208
      %3242 = vst.msk [vmem:[%s278 + $0x3c] sm:$0xf] %vm3226, %v3209
      %3243 = vst.msk [vmem:[%s278 + $0x40] sm:$0xf] %vm3226, %v3210
      %3244 = vst.msk [vmem:[%s278 + $0x44] sm:$0xf] %vm3226, %v3211
      %3245 = vst.msk [vmem:[%s278 + $0x48] sm:$0xf] %vm3226, %v3212
      %3246 = vst.msk [vmem:[%s278 + $0x4c] sm:$0xf] %vm3226, %v3213
      %3247 = vst.msk [vmem:[%s278 + $0x50] sm:$0xf] %vm3226, %v3214
      %3248 = vst.msk [vmem:[%s278 + $0x54] sm:$0xf] %vm3226, %v3215
      %3249 = vst.msk [vmem:[%s278 + $0x58] sm:$0xf] %vm3226, %v3216
      %3250 = vst.msk [vmem:[%s278 + $0x5c] sm:$0xf] %vm3226, %v3217
      %3251 = vst.msk [vmem:[%s278 + $0x60] sm:$0xf] %vm3226, %v3218
      %3252 = vst.msk [vmem:[%s278 + $0x64] sm:$0xf] %vm3226, %v3219
      %3253 = vst.msk [vmem:[%s278 + $0x68] sm:$0xf] %vm3226, %v3220
      %3254 = vst.msk [vmem:[%s278 + $0x6c] sm:$0xf] %vm3226, %v3221
      %3255 = vst.msk [vmem:[%s278 + $0x70] sm:$0xf] %vm3226, %v3222
      %3256 = vst.msk [vmem:[%s278 + $0x74] sm:$0xf] %vm3226, %v3223
      %3257 = vst.msk [vmem:[%s278 + $0x78] sm:$0xf] %vm3226, %v3224
      %3258 = vst.msk [vmem:[%s278 + $0x7c] sm:$0xf] %vm3226, %v3225
      %p3259 = scmp.lt.s32.totalorder %s18, 1
      %s3260 = scalar_select %p3259, %s18, 1
      %s3261 = smul.addr %s3260, 32
      %s3262 = smul.addr %s3261, 4
      %s3263 = scalar_lea.vmem %s7, %s3262
      // Predicated region
      $region49: #{tpu_custom_call.1} parent=47 // pred_check
        %p3264 = pneg %p188
      $region50: #{tpu_custom_call.1} parent=47 // pred_check_branch
        %3266 = sbr.rel (%p3264) target = $region52
      $region51: #{tpu_custom_call.1} parent=47 // pred_region
        _
      $region52: #{tpu_custom_call.1} parent=47 // pred_fallthru
        _
    $region48: #{tpu_custom_call.1} parent=5 // pred_fallthru
      _
    %p3267 = scmp.le.s32.totalorder 2, %s13
    // Predicated region
    $region53: #{tpu_custom_call.1} parent=5 // pred_check
      %p3268 = pneg %p3267
    $region54: #{tpu_custom_call.1} parent=5 // pred_check_branch
      %3270 = sbr.rel (%p3268) target = $region56
    $region55: #{tpu_custom_call.1} parent=5 // pred_region
      %s3271 = ssub.s32 %s13, 2
      // Predicated region
      $region57: #{tpu_custom_call.1} parent=55 // pred_check
        %p3272 = pneg %p194
      $region58: #{tpu_custom_call.1} parent=55 // pred_check_branch
        %3274 = sbr.rel (%p3272) target = $region60
      $region59: #{tpu_custom_call.1} parent=55 // pred_region
        %p3275 = scmp.lt.s32.totalorder %s19, 1
        %s3276 = scalar_select %p3275, %s19, 1
        %s3277 = smul.addr %s3276, 32
        %s3278 = smul.addr %s3277, 4
        %s3279 = scalar_lea.vmem %s7, %s3278
      $region60: #{tpu_custom_call.1} parent=55 // pred_fallthru
        _
    $region56: #{tpu_custom_call.1} parent=5 // pred_fallthru
      _
  $region6: #{tpu_custom_call.1} parent=0 // loop_footer
    %s17 = sadd.s32 1, %s13
  $region7: #{tpu_custom_call.1} parent=0 // loop_footer_branch
    %12 = sbr.rel target = $region3
  $region8: #{tpu_custom_call.1} parent=0 // loop_exit
    _

</llo_original>
